<compile_context>
chip_gen: v6e
topology: v6e:2x2x1
jax: 0.10.0
libtpu: 0.0.40
codegen_flags: <defaults>
</compile_context>

<pallas_src>
import functools
import math

import jax
import jax.numpy as jnp
from jax.experimental import pallas as pl
from jax.experimental.pallas import tpu as pltpu


# ----------------------------------------------------------------------------
# Fused kernel
# ----------------------------------------------------------------------------
def _build_bilstm_kernel(B, T, H, num_layers):
    """Builds the fused BiLSTM forward kernel for static (B, T, H, num_layers).

    Kernel refs (in order):
      x_ref                         : (T*B, Din)  time-major flattened input
      per layer l (4 refs each):
        w_ref   : (Din_l, 8H)  input projection for both directions
                  (layer 0 has init_linear folded in)
        b_ref   : (1, 8H)      combined bias for both directions
        whhf_ref: (H, 4H)      recurrent weights, forward direction
        whhr_ref: (H, 4H)      recurrent weights, reverse direction
      wout_ref                      : (2H, P_pad)  output linear (lane padded)
      bout_ref                      : (1, P_pad)
      out_ref                       : (T*B, P_pad) time-major padded output
      gx_scr                        : (T*B, 8H)   hoisted gate pre-activations
      hid_scr                       : (T*B, 2H)   per-layer bidirectional output
    """
    H4 = 4 * H

    def kernel(*refs):
        x_ref = refs[0]
        layer_refs = refs[1:1 + 4 * num_layers]
        wout_ref = refs[1 + 4 * num_layers]
        bout_ref = refs[2 + 4 * num_layers]
        out_ref = refs[3 + 4 * num_layers]
        gx_scr = refs[4 + 4 * num_layers]
        hid_scr = refs[5 + 4 * num_layers]

        # Lane mask selecting the g-gate block (hoisted; reused by both layers
        # and both directions).  Gate column order: [i | f | g | o], each H wide.
        lane = jax.lax.broadcasted_iota(jnp.int32, (B, H4), 1)
        g_mask = (lane >= 2 * H) & (lane < 3 * H)

        for l in range(num_layers):
            w_ref, b_ref, whhf_ref, whhr_ref = layer_refs[4 * l:4 * l + 4]

            # ---- hoisted input projection for BOTH directions (+ bias) ------
            # One MXU-friendly (T*B, Din) x (Din, 8H) matmul instead of one
            # small matmul per timestep per direction on the serial path.
            src_ref = x_ref if l == 0 else hid_scr
            gx_scr[...] = (
                jnp.dot(src_ref[...], w_ref[...],
                        preferred_element_type=jnp.float32)
                + b_ref[...]
            )

            # Hoist recurrent weights out of the time loop.
            whh_f = whhf_ref[...]
            whh_r = whhr_ref[...]

            zeros = jnp.zeros((B, H), jnp.float32)
            h_f, c_f, h_r, c_r = zeros, zeros, zeros, zeros

            # Fully unrolled, interleaved fwd/bwd recurrence (T is small+static).
            for t in range(T):
                tr = T - 1 - t
                gates_f = gx_scr[pl.ds(t * B, B), :H4] + jnp.dot(
                    h_f, whh_f, preferred_element_type=jnp.float32)
                gates_r = gx_scr[pl.ds(tr * B, B), H4:] + jnp.dot(
                    h_r, whh_r, preferred_element_type=jnp.float32)

                # Whole-vreg activation: tanh on the g lanes, sigmoid elsewhere.
                act_f = jnp.where(g_mask, jnp.tanh(gates_f),
                                  jax.nn.sigmoid(gates_f))
                act_r = jnp.where(g_mask, jnp.tanh(gates_r),
                                  jax.nn.sigmoid(gates_r))

                c_f = act_f[:, H:2 * H] * c_f + act_f[:, :H] * act_f[:, 2 * H:3 * H]
                c_r = act_r[:, H:2 * H] * c_r + act_r[:, :H] * act_r[:, 2 * H:3 * H]
                h_f = act_f[:, 3 * H:] * jnp.tanh(c_f)
                h_r = act_r[:, 3 * H:] * jnp.tanh(c_r)

                # In-kernel "reversal": fwd state goes to time t, rev state to
                # time T-1-t, into the two halves of the 2H-wide layer output.
                hid_scr[pl.ds(t * B, B), :H] = h_f
                hid_scr[pl.ds(tr * B, B), H:] = h_r

        # ---- output linear epilogue (lane-dense, padded to 128) -------------
        out_ref[...] = (
            jnp.dot(hid_scr[...], wout_ref[...],
                    preferred_element_type=jnp.float32)
            + bout_ref[...]
        )

    return kernel


# ----------------------------------------------------------------------------
# Forward pass
# ----------------------------------------------------------------------------
@functools.partial(jax.jit, static_argnums=(2, 3, 4))
def bilstm_forward(x, fused, hidden_dim, num_layers, output_dim):
    B, T, D = x.shape
    H = hidden_dim
    out_pad = fused["wout"].shape[1]

    # batch-first -> time-major rows (t*B + b); one tiny one-off relayout.
    x_tm = jnp.transpose(x, (1, 0, 2)).reshape(T * B, D)

    kernel = _build_bilstm_kernel(B, T, H, num_layers)
    n_in = 1 + 4 * num_layers + 2
    call = pl.pallas_call(
        kernel,
        out_shape=jax.ShapeDtypeStruct((T * B, out_pad), jnp.float32),
        in_specs=[pl.BlockSpec(memory_space=pltpu.MemorySpace.VMEM)] * n_in,
        out_specs=pl.BlockSpec(memory_space=pltpu.MemorySpace.VMEM),
        scratch_shapes=[
            pltpu.VMEM((T * B, 8 * H), jnp.float32),   # hoisted gate pre-acts
            pltpu.VMEM((T * B, 2 * H), jnp.float32),   # bidirectional layer out
        ],
    )

    args = [x_tm]
    for l in range(num_layers):
        args += [fused["w"][l], fused["b"][l],
                 fused["whh_f"][l], fused["whh_r"][l]]
    args += [fused["wout"], fused["bout"]]

    y_pad = call(*args)                                    # (T*B, out_pad)
    y = y_pad.reshape(T, B, out_pad)[:, :, :output_dim]    # drop lane padding
    return jnp.transpose(y, (1, 0, 2))                     # (B, T, output_dim)


# ----------------------------------------------------------------------------
# Parameters (deterministic synthetic init, PyTorch-style uniform ranges)
# ----------------------------------------------------------------------------
def init_params(key, input_dim, hidden_dim, output_dim, num_layers):
    keys = iter(jax.random.split(key, 128))

    def unif(shape, scale):
        return jax.random.uniform(
            next(keys), shape, jnp.float32, minval=-scale, maxval=scale
        )

    params = {}
    s_in = 1.0 / math.sqrt(input_dim)
    params["init_w"] = unif((input_dim, input_dim), s_in)   # init_linear.weight^T
    params["init_b"] = unif((1, input_dim), s_in)           # init_linear.bias

    s_h = 1.0 / math.sqrt(hidden_dim)
    lstm_layers = []
    for layer in range(num_layers):
        d_in = input_dim if layer == 0 else 2 * hidden_dim
        lp = {}
        for direction in ("f", "r"):                        # forward / reverse
            lp["wih_" + direction] = unif((d_in, 4 * hidden_dim), s_h)
            lp["whh_" + direction] = unif((hidden_dim, 4 * hidden_dim), s_h)
            b_ih = unif((1, 4 * hidden_dim), s_h)
            b_hh = unif((1, 4 * hidden_dim), s_h)
            lp["b_" + direction] = b_ih + b_hh
        lstm_layers.append(lp)
    params["lstm"] = lstm_layers

    s_out = 1.0 / math.sqrt(2 * hidden_dim)
    params["out_w"] = unif((2 * hidden_dim, output_dim), s_out)  # linear.weight^T
    params["out_b"] = unif((1, output_dim), s_out)               # linear.bias
    return params


def fuse_params(params, hidden_dim, num_layers, output_dim, lane_pad=128):
    """One-time prep: fold init_linear into layer-0 projection, concat the two
    directions' input projections to 8H wide, and lane-pad the output linear."""
    H = hidden_dim
    fused = {"w": [], "b": [], "whh_f": [], "whh_r": []}
    for l in range(num_layers):
        lp = params["lstm"][l]
        w_cat = jnp.concatenate([lp["wih_f"], lp["wih_r"]], axis=1)  # (Din, 8H)
        b_cat = jnp.concatenate([lp["b_f"], lp["b_r"]], axis=1)      # (1, 8H)
        if l == 0:
            # (x @ Wi + bi) @ Wih + b  ==  x @ (Wi @ Wih) + (bi @ Wih + b)
            w = params["init_w"] @ w_cat
            b = params["init_b"] @ w_cat + b_cat
        else:
            w, b = w_cat, b_cat
        fused["w"].append(w)
        fused["b"].append(b)
        fused["whh_f"].append(lp["whh_f"])
        fused["whh_r"].append(lp["whh_r"])

    out_pad = ((output_dim + lane_pad - 1) // lane_pad) * lane_pad
    wout = jnp.zeros((2 * H, out_pad), jnp.float32).at[:, :output_dim].set(
        params["out_w"])
    bout = jnp.zeros((1, out_pad), jnp.float32).at[:, :output_dim].set(
        params["out_b"])
    fused["wout"] = wout
    fused["bout"] = bout
    return fused


# ----------------------------------------------------------------------------
# Pure-JAX reference (unfused, mirrors the original module math)
# ----------------------------------------------------------------------------
def bilstm_reference(x, params, hidden_dim, num_layers):
    B, T, D = x.shape
    H = hidden_dim
    h0 = x.reshape(B * T, D) @ params["init_w"] + params["init_b"]
    layer_in = jnp.transpose(h0.reshape(B, T, D), (1, 0, 2))   # (T, B, D)

    def run_dir(x_seq, wih, whh, b):
        def step(carry, x_t):
            h, c = carry
            gates = x_t @ wih + h @ whh + b
            i = jax.nn.sigmoid(gates[:, :H])
            f = jax.nn.sigmoid(gates[:, H:2 * H])
            g = jnp.tanh(gates[:, 2 * H:3 * H])
            o = jax.nn.sigmoid(gates[:, 3 * H:])
            c = f * c + i * g
            h = o * jnp.tanh(c)
            return (h, c), h
        init = (jnp.zeros((B, H), jnp.float32), jnp.zeros((B, H), jnp.float32))
        _, hs = jax.lax.scan(step, init, x_seq)
        return hs

    for l in range(num_layers):
        lp = params["lstm"][l]
        fwd = run_dir(layer_in, lp["wih_f"], lp["whh_f"], lp["b_f"])
        bwd = run_dir(layer_in[::-1], lp["wih_r"], lp["whh_r"], lp["b_r"])[::-1]
        layer_in = jnp.concatenate([fwd, bwd], axis=-1)

    out = jnp.transpose(layer_in, (1, 0, 2)).reshape(B * T, 2 * H)
    y = out @ params["out_w"] + params["out_b"]
    return y.reshape(B, T, -1)


# ----------------------------------------------------------------------------
# Demo
# ----------------------------------------------------------------------------
if __name__ == "__main__":
    input_dim, hidden_dim, output_dim, num_layers = 16, 32, 3, 2
    batch, seq = 2, 8

    key = jax.random.PRNGKey(0)
    pkey, xkey = jax.random.split(key)
    params = init_params(pkey, input_dim, hidden_dim, output_dim, num_layers)
    fused = fuse_params(params, hidden_dim, num_layers, output_dim)
    x = jax.random.normal(xkey, (batch, seq, input_dim), dtype=jnp.float32)

    y = bilstm_forward(x, fused, hidden_dim, num_layers, output_dim)
    jax.block_until_ready(y)

    assert y.shape == (batch, seq, output_dim), y.shape
    assert jnp.all(jnp.isfinite(y))

    y_ref = bilstm_reference(x, params, hidden_dim, num_layers)
    max_err = float(jnp.max(jnp.abs(y - y_ref)))
    assert jnp.allclose(y, y_ref, atol=1e-3, rtol=1e-3), max_err

    print("KERNEL_OK")
</pallas_src>

<mosaic_0001>
module attributes {stable_mosaic.version = 11 : i64} {
  func.func @kernel(%arg0: memref<16x16xf32, #tpu.memory_space<vmem>>, %arg1: memref<16x256xf32, #tpu.memory_space<vmem>>, %arg2: memref<1x256xf32, #tpu.memory_space<vmem>>, %arg3: memref<32x128xf32, #tpu.memory_space<vmem>>, %arg4: memref<32x128xf32, #tpu.memory_space<vmem>>, %arg5: memref<64x256xf32, #tpu.memory_space<vmem>>, %arg6: memref<1x256xf32, #tpu.memory_space<vmem>>, %arg7: memref<32x128xf32, #tpu.memory_space<vmem>>, %arg8: memref<32x128xf32, #tpu.memory_space<vmem>>, %arg9: memref<64x128xf32, #tpu.memory_space<vmem>>, %arg10: memref<1x128xf32, #tpu.memory_space<vmem>>, %arg11: memref<16x128xf32, #tpu.memory_space<vmem>>, %arg12: memref<16x256xf32, #tpu.memory_space<vmem>>, %arg13: memref<16x64xf32, #tpu.memory_space<vmem>>) attributes {dimension_semantics = [], scalar_prefetch = 0 : i64, scratch_operands = 2 : i64, tpu.core_type = #tpu.core_type<tc>} {
    %0 = tpu.iota {dimensions = array<i32: 1>} : vector<2x128xi32>
    %c64_i32 = arith.constant 64 : i32
    %1 = vector.broadcast %c64_i32 : i32 to vector<2x128xi32>
    %2 = arith.cmpi sge, %0, %1 : vector<2x128xi32>
    %c96_i32 = arith.constant 96 : i32
    %3 = vector.broadcast %c96_i32 : i32 to vector<2x128xi32>
    %4 = arith.cmpi slt, %0, %3 : vector<2x128xi32>
    %5 = arith.andi %2, %4 : vector<2x128xi1>
    %c0 = arith.constant 0 : index
    %c0_0 = arith.constant 0 : index
    %6 = vector.load %arg0[%c0, %c0_0] : memref<16x16xf32, #tpu.memory_space<vmem>>, vector<16x16xf32>
    %c0_1 = arith.constant 0 : index
    %c0_2 = arith.constant 0 : index
    %7 = vector.load %arg1[%c0_1, %c0_2] : memref<16x256xf32, #tpu.memory_space<vmem>>, vector<16x256xf32>
    %cst = arith.constant dense<0.000000e+00> : vector<16x256xf32>
    %8 = tpu.matmul %6, %7, %cst {dimension_numbers = #tpu.dot_dimension_numbers<[1], [0], [0], [1], [0, 0, 1, 1], [], []>} : vector<16x16xf32>, vector<16x256xf32>, vector<16x256xf32> -> vector<16x256xf32>
    %c0_3 = arith.constant 0 : index
    %c0_4 = arith.constant 0 : index
    %9 = vector.load %arg2[%c0_3, %c0_4] : memref<1x256xf32, #tpu.memory_space<vmem>>, vector<1x256xf32>
    %10 = vector.broadcast %9 : vector<1x256xf32> to vector<16x256xf32>
    %11 = arith.addf %8, %10 : vector<16x256xf32>
    %c0_5 = arith.constant 0 : index
    %c0_6 = arith.constant 0 : index
    %12 = vector.load %arg12[%c0_5, %c0_6] : memref<16x256xf32, #tpu.memory_space<vmem>>, vector<16x256xf32>
    tpu.vector_store %arg12[%c0_5, %c0_6], %11 {strides = array<i32>} : memref<16x256xf32, #tpu.memory_space<vmem>>, vector<16x256xf32>,
    %c0_7 = arith.constant 0 : index
    %c0_8 = arith.constant 0 : index
    %13 = vector.load %arg3[%c0_7, %c0_8] : memref<32x128xf32, #tpu.memory_space<vmem>>, vector<32x128xf32>
    %c0_9 = arith.constant 0 : index
    %c0_10 = arith.constant 0 : index
    %14 = vector.load %arg4[%c0_9, %c0_10] : memref<32x128xf32, #tpu.memory_space<vmem>>, vector<32x128xf32>
    %cst_11 = arith.constant 0.000000e+00 : f32
    %15 = vector.broadcast %cst_11 : f32 to vector<2x32xf32>
    %c0_12 = arith.constant 0 : index
    %c0_13 = arith.constant 0 : index
    %16 = vector.load %arg12[%c0_12, %c0_13] : memref<16x256xf32, #tpu.memory_space<vmem>>, vector<2x128xf32>
    %cst_14 = arith.constant dense<0.000000e+00> : vector<2x128xf32>
    %17 = tpu.matmul %15, %13, %cst_14 {dimension_numbers = #tpu.dot_dimension_numbers<[1], [0], [0], [1], [0, 0, 1, 1], [], []>} : vector<2x32xf32>, vector<32x128xf32>, vector<2x128xf32> -> vector<2x128xf32>
    %18 = arith.addf %16, %17 : vector<2x128xf32>
    %c14 = arith.constant 14 : index
    %c128 = arith.constant 128 : index
    %19 = vector.load %arg12[%c14, %c128] : memref<16x256xf32, #tpu.memory_space<vmem>>, vector<2x128xf32>
    %cst_15 = arith.constant dense<0.000000e+00> : vector<2x128xf32>
    %20 = tpu.matmul %15, %14, %cst_15 {dimension_numbers = #tpu.dot_dimension_numbers<[1], [0], [0], [1], [0, 0, 1, 1], [], []>} : vector<2x32xf32>, vector<32x128xf32>, vector<2x128xf32> -> vector<2x128xf32>
    %21 = arith.addf %19, %20 : vector<2x128xf32>
    %22 = math.tanh %18 : vector<2x128xf32>
    %23 = arith.negf %18 : vector<2x128xf32>
    %24 = math.exp %23 : vector<2x128xf32>
    %cst_16 = arith.constant 1.000000e+00 : f32
    %25 = vector.broadcast %cst_16 : f32 to vector<2x128xf32>
    %26 = arith.addf %25, %24 : vector<2x128xf32>
    %27 = arith.divf %25, %26 : vector<2x128xf32>
    %28 = arith.select %5, %22, %27 : vector<2x128xi1>, vector<2x128xf32>
    %29 = math.tanh %21 : vector<2x128xf32>
    %30 = arith.negf %21 : vector<2x128xf32>
    %31 = math.exp %30 : vector<2x128xf32>
    %cst_17 = arith.constant 1.000000e+00 : f32
    %32 = vector.broadcast %cst_17 : f32 to vector<2x128xf32>
    %33 = arith.addf %32, %31 : vector<2x128xf32>
    %34 = arith.divf %32, %33 : vector<2x128xf32>
    %35 = arith.select %5, %29, %34 : vector<2x128xi1>, vector<2x128xf32>
    %36 = vector.extract_strided_slice %28 {offsets = [0, 32], sizes = [2, 32], strides = [1, 1]} : vector<2x128xf32> to vector<2x32xf32>
    %37 = arith.mulf %36, %15 : vector<2x32xf32>
    %38 = vector.extract_strided_slice %28 {offsets = [0, 0], sizes = [2, 32], strides = [1, 1]} : vector<2x128xf32> to vector<2x32xf32>
    %39 = vector.extract_strided_slice %28 {offsets = [0, 64], sizes = [2, 32], strides = [1, 1]} : vector<2x128xf32> to vector<2x32xf32>
    %40 = arith.mulf %38, %39 : vector<2x32xf32>
    %41 = arith.addf %37, %40 : vector<2x32xf32>
    %42 = vector.extract_strided_slice %35 {offsets = [0, 32], sizes = [2, 32], strides = [1, 1]} : vector<2x128xf32> to vector<2x32xf32>
    %43 = arith.mulf %42, %15 : vector<2x32xf32>
    %44 = vector.extract_strided_slice %35 {offsets = [0, 0], sizes = [2, 32], strides = [1, 1]} : vector<2x128xf32> to vector<2x32xf32>
    %45 = vector.extract_strided_slice %35 {offsets = [0, 64], sizes = [2, 32], strides = [1, 1]} : vector<2x128xf32> to vector<2x32xf32>
    %46 = arith.mulf %44, %45 : vector<2x32xf32>
    %47 = arith.addf %43, %46 : vector<2x32xf32>
    %48 = vector.extract_strided_slice %28 {offsets = [0, 96], sizes = [2, 32], strides = [1, 1]} : vector<2x128xf32> to vector<2x32xf32>
    %49 = math.tanh %41 : vector<2x32xf32>
    %50 = arith.mulf %48, %49 : vector<2x32xf32>
    %51 = vector.extract_strided_slice %35 {offsets = [0, 96], sizes = [2, 32], strides = [1, 1]} : vector<2x128xf32> to vector<2x32xf32>
    %52 = math.tanh %47 : vector<2x32xf32>
    %53 = arith.mulf %51, %52 : vector<2x32xf32>
    %c0_18 = arith.constant 0 : index
    %c0_19 = arith.constant 0 : index
    %54 = vector.load %arg13[%c0_18, %c0_19] : memref<16x64xf32, #tpu.memory_space<vmem>>, vector<2x32xf32>
    tpu.vector_store %arg13[%c0_18, %c0_19], %50 {strides = array<i32>} : memref<16x64xf32, #tpu.memory_space<vmem>>, vector<2x32xf32>,
    %c14_20 = arith.constant 14 : index
    %c32 = arith.constant 32 : index
    %55 = vector.load %arg13[%c14_20, %c32] : memref<16x64xf32, #tpu.memory_space<vmem>>, vector<2x32xf32>
    tpu.vector_store %arg13[%c14_20, %c32], %53 {strides = array<i32>} : memref<16x64xf32, #tpu.memory_space<vmem>>, vector<2x32xf32>,
    %c2 = arith.constant 2 : index
    %c0_21 = arith.constant 0 : index
    %56 = vector.load %arg12[%c2, %c0_21] : memref<16x256xf32, #tpu.memory_space<vmem>>, vector<2x128xf32>
    %cst_22 = arith.constant dense<0.000000e+00> : vector<2x128xf32>
    %57 = tpu.matmul %50, %13, %cst_22 {dimension_numbers = #tpu.dot_dimension_numbers<[1], [0], [0], [1], [0, 0, 1, 1], [], []>} : vector<2x32xf32>, vector<32x128xf32>, vector<2x128xf32> -> vector<2x128xf32>
    %58 = arith.addf %56, %57 : vector<2x128xf32>
    %c12 = arith.constant 12 : index
    %c128_23 = arith.constant 128 : index
    %59 = vector.load %arg12[%c12, %c128_23] : memref<16x256xf32, #tpu.memory_space<vmem>>, vector<2x128xf32>
    %cst_24 = arith.constant dense<0.000000e+00> : vector<2x128xf32>
    %60 = tpu.matmul %53, %14, %cst_24 {dimension_numbers = #tpu.dot_dimension_numbers<[1], [0], [0], [1], [0, 0, 1, 1], [], []>} : vector<2x32xf32>, vector<32x128xf32>, vector<2x128xf32> -> vector<2x128xf32>
    %61 = arith.addf %59, %60 : vector<2x128xf32>
    %62 = math.tanh %58 : vector<2x128xf32>
    %63 = arith.negf %58 : vector<2x128xf32>
    %64 = math.exp %63 : vector<2x128xf32>
    %cst_25 = arith.constant 1.000000e+00 : f32
    %65 = vector.broadcast %cst_25 : f32 to vector<2x128xf32>
    %66 = arith.addf %65, %64 : vector<2x128xf32>
    %67 = arith.divf %65, %66 : vector<2x128xf32>
    %68 = arith.select %5, %62, %67 : vector<2x128xi1>, vector<2x128xf32>
    %69 = math.tanh %61 : vector<2x128xf32>
    %70 = arith.negf %61 : vector<2x128xf32>
    %71 = math.exp %70 : vector<2x128xf32>
    %cst_26 = arith.constant 1.000000e+00 : f32
    %72 = vector.broadcast %cst_26 : f32 to vector<2x128xf32>
    %73 = arith.addf %72, %71 : vector<2x128xf32>
    %74 = arith.divf %72, %73 : vector<2x128xf32>
    %75 = arith.select %5, %69, %74 : vector<2x128xi1>, vector<2x128xf32>
    %76 = vector.extract_strided_slice %68 {offsets = [0, 32], sizes = [2, 32], strides = [1, 1]} : vector<2x128xf32> to vector<2x32xf32>
    %77 = arith.mulf %76, %41 : vector<2x32xf32>
    %78 = vector.extract_strided_slice %68 {offsets = [0, 0], sizes = [2, 32], strides = [1, 1]} : vector<2x128xf32> to vector<2x32xf32>
    %79 = vector.extract_strided_slice %68 {offsets = [0, 64], sizes = [2, 32], strides = [1, 1]} : vector<2x128xf32> to vector<2x32xf32>
    %80 = arith.mulf %78, %79 : vector<2x32xf32>
    %81 = arith.addf %77, %80 : vector<2x32xf32>
    %82 = vector.extract_strided_slice %75 {offsets = [0, 32], sizes = [2, 32], strides = [1, 1]} : vector<2x128xf32> to vector<2x32xf32>
    %83 = arith.mulf %82, %47 : vector<2x32xf32>
    %84 = vector.extract_strided_slice %75 {offsets = [0, 0], sizes = [2, 32], strides = [1, 1]} : vector<2x128xf32> to vector<2x32xf32>
    %85 = vector.extract_strided_slice %75 {offsets = [0, 64], sizes = [2, 32], strides = [1, 1]} : vector<2x128xf32> to vector<2x32xf32>
    %86 = arith.mulf %84, %85 : vector<2x32xf32>
    %87 = arith.addf %83, %86 : vector<2x32xf32>
    %88 = vector.extract_strided_slice %68 {offsets = [0, 96], sizes = [2, 32], strides = [1, 1]} : vector<2x128xf32> to vector<2x32xf32>
    %89 = math.tanh %81 : vector<2x32xf32>
    %90 = arith.mulf %88, %89 : vector<2x32xf32>
    %91 = vector.extract_strided_slice %75 {offsets = [0, 96], sizes = [2, 32], strides = [1, 1]} : vector<2x128xf32> to vector<2x32xf32>
    %92 = math.tanh %87 : vector<2x32xf32>
    %93 = arith.mulf %91, %92 : vector<2x32xf32>
    %c2_27 = arith.constant 2 : index
    %c0_28 = arith.constant 0 : index
    %94 = vector.load %arg13[%c2_27, %c0_28] : memref<16x64xf32, #tpu.memory_space<vmem>>, vector<2x32xf32>
    tpu.vector_store %arg13[%c2_27, %c0_28], %90 {strides = array<i32>} : memref<16x64xf32, #tpu.memory_space<vmem>>, vector<2x32xf32>,
    %c12_29 = arith.constant 12 : index
    %c32_30 = arith.constant 32 : index
    %95 = vector.load %arg13[%c12_29, %c32_30] : memref<16x64xf32, #tpu.memory_space<vmem>>, vector<2x32xf32>
    tpu.vector_store %arg13[%c12_29, %c32_30], %93 {strides = array<i32>} : memref<16x64xf32, #tpu.memory_space<vmem>>, vector<2x32xf32>,
    %c4 = arith.constant 4 : index
    %c0_31 = arith.constant 0 : index
    %96 = vector.load %arg12[%c4, %c0_31] : memref<16x256xf32, #tpu.memory_space<vmem>>, vector<2x128xf32>
    %cst_32 = arith.constant dense<0.000000e+00> : vector<2x128xf32>
    %97 = tpu.matmul %90, %13, %cst_32 {dimension_numbers = #tpu.dot_dimension_numbers<[1], [0], [0], [1], [0, 0, 1, 1], [], []>} : vector<2x32xf32>, vector<32x128xf32>, vector<2x128xf32> -> vector<2x128xf32>
    %98 = arith.addf %96, %97 : vector<2x128xf32>
    %c10 = arith.constant 10 : index
    %c128_33 = arith.constant 128 : index
    %99 = vector.load %arg12[%c10, %c128_33] : memref<16x256xf32, #tpu.memory_space<vmem>>, vector<2x128xf32>
    %cst_34 = arith.constant dense<0.000000e+00> : vector<2x128xf32>
    %100 = tpu.matmul %93, %14, %cst_34 {dimension_numbers = #tpu.dot_dimension_numbers<[1], [0], [0], [1], [0, 0, 1, 1], [], []>} : vector<2x32xf32>, vector<32x128xf32>, vector<2x128xf32> -> vector<2x128xf32>
    %101 = arith.addf %99, %100 : vector<2x128xf32>
    %102 = math.tanh %98 : vector<2x128xf32>
    %103 = arith.negf %98 : vector<2x128xf32>
    %104 = math.exp %103 : vector<2x128xf32>
    %cst_35 = arith.constant 1.000000e+00 : f32
    %105 = vector.broadcast %cst_35 : f32 to vector<2x128xf32>
    %106 = arith.addf %105, %104 : vector<2x128xf32>
    %107 = arith.divf %105, %106 : vector<2x128xf32>
    %108 = arith.select %5, %102, %107 : vector<2x128xi1>, vector<2x128xf32>
    %109 = math.tanh %101 : vector<2x128xf32>
    %110 = arith.negf %101 : vector<2x128xf32>
    %111 = math.exp %110 : vector<2x128xf32>
    %cst_36 = arith.constant 1.000000e+00 : f32
    %112 = vector.broadcast %cst_36 : f32 to vector<2x128xf32>
    %113 = arith.addf %112, %111 : vector<2x128xf32>
    %114 = arith.divf %112, %113 : vector<2x128xf32>
    %115 = arith.select %5, %109, %114 : vector<2x128xi1>, vector<2x128xf32>
    %116 = vector.extract_strided_slice %108 {offsets = [0, 32], sizes = [2, 32], strides = [1, 1]} : vector<2x128xf32> to vector<2x32xf32>
    %117 = arith.mulf %116, %81 : vector<2x32xf32>
    %118 = vector.extract_strided_slice %108 {offsets = [0, 0], sizes = [2, 32], strides = [1, 1]} : vector<2x128xf32> to vector<2x32xf32>
    %119 = vector.extract_strided_slice %108 {offsets = [0, 64], sizes = [2, 32], strides = [1, 1]} : vector<2x128xf32> to vector<2x32xf32>
    %120 = arith.mulf %118, %119 : vector<2x32xf32>
    %121 = arith.addf %117, %120 : vector<2x32xf32>
    %122 = vector.extract_strided_slice %115 {offsets = [0, 32], sizes = [2, 32], strides = [1, 1]} : vector<2x128xf32> to vector<2x32xf32>
    %123 = arith.mulf %122, %87 : vector<2x32xf32>
    %124 = vector.extract_strided_slice %115 {offsets = [0, 0], sizes = [2, 32], strides = [1, 1]} : vector<2x128xf32> to vector<2x32xf32>
    %125 = vector.extract_strided_slice %115 {offsets = [0, 64], sizes = [2, 32], strides = [1, 1]} : vector<2x128xf32> to vector<2x32xf32>
    %126 = arith.mulf %124, %125 : vector<2x32xf32>
    %127 = arith.addf %123, %126 : vector<2x32xf32>
    %128 = vector.extract_strided_slice %108 {offsets = [0, 96], sizes = [2, 32], strides = [1, 1]} : vector<2x128xf32> to vector<2x32xf32>
    %129 = math.tanh %121 : vector<2x32xf32>
    %130 = arith.mulf %128, %129 : vector<2x32xf32>
    %131 = vector.extract_strided_slice %115 {offsets = [0, 96], sizes = [2, 32], strides = [1, 1]} : vector<2x128xf32> to vector<2x32xf32>
    %132 = math.tanh %127 : vector<2x32xf32>
    %133 = arith.mulf %131, %132 : vector<2x32xf32>
    %c4_37 = arith.constant 4 : index
    %c0_38 = arith.constant 0 : index
    %134 = vector.load %arg13[%c4_37, %c0_38] : memref<16x64xf32, #tpu.memory_space<vmem>>, vector<2x32xf32>
    tpu.vector_store %arg13[%c4_37, %c0_38], %130 {strides = array<i32>} : memref<16x64xf32, #tpu.memory_space<vmem>>, vector<2x32xf32>,
    %c10_39 = arith.constant 10 : index
    %c32_40 = arith.constant 32 : index
    %135 = vector.load %arg13[%c10_39, %c32_40] : memref<16x64xf32, #tpu.memory_space<vmem>>, vector<2x32xf32>
    tpu.vector_store %arg13[%c10_39, %c32_40], %133 {strides = array<i32>} : memref<16x64xf32, #tpu.memory_space<vmem>>, vector<2x32xf32>,
    %c6 = arith.constant 6 : index
    %c0_41 = arith.constant 0 : index
    %136 = vector.load %arg12[%c6, %c0_41] : memref<16x256xf32, #tpu.memory_space<vmem>>, vector<2x128xf32>
    %cst_42 = arith.constant dense<0.000000e+00> : vector<2x128xf32>
    %137 = tpu.matmul %130, %13, %cst_42 {dimension_numbers = #tpu.dot_dimension_numbers<[1], [0], [0], [1], [0, 0, 1, 1], [], []>} : vector<2x32xf32>, vector<32x128xf32>, vector<2x128xf32> -> vector<2x128xf32>
    %138 = arith.addf %136, %137 : vector<2x128xf32>
    %c8 = arith.constant 8 : index
    %c128_43 = arith.constant 128 : index
    %139 = vector.load %arg12[%c8, %c128_43] : memref<16x256xf32, #tpu.memory_space<vmem>>, vector<2x128xf32>
    %cst_44 = arith.constant dense<0.000000e+00> : vector<2x128xf32>
    %140 = tpu.matmul %133, %14, %cst_44 {dimension_numbers = #tpu.dot_dimension_numbers<[1], [0], [0], [1], [0, 0, 1, 1], [], []>} : vector<2x32xf32>, vector<32x128xf32>, vector<2x128xf32> -> vector<2x128xf32>
    %141 = arith.addf %139, %140 : vector<2x128xf32>
    %142 = math.tanh %138 : vector<2x128xf32>
    %143 = arith.negf %138 : vector<2x128xf32>
    %144 = math.exp %143 : vector<2x128xf32>
    %cst_45 = arith.constant 1.000000e+00 : f32
    %145 = vector.broadcast %cst_45 : f32 to vector<2x128xf32>
    %146 = arith.addf %145, %144 : vector<2x128xf32>
    %147 = arith.divf %145, %146 : vector<2x128xf32>
    %148 = arith.select %5, %142, %147 : vector<2x128xi1>, vector<2x128xf32>
    %149 = math.tanh %141 : vector<2x128xf32>
    %150 = arith.negf %141 : vector<2x128xf32>
    %151 = math.exp %150 : vector<2x128xf32>
    %cst_46 = arith.constant 1.000000e+00 : f32
    %152 = vector.broadcast %cst_46 : f32 to vector<2x128xf32>
    %153 = arith.addf %152, %151 : vector<2x128xf32>
    %154 = arith.divf %152, %153 : vector<2x128xf32>
    %155 = arith.select %5, %149, %154 : vector<2x128xi1>, vector<2x128xf32>
    %156 = vector.extract_strided_slice %148 {offsets = [0, 32], sizes = [2, 32], strides = [1, 1]} : vector<2x128xf32> to vector<2x32xf32>
    %157 = arith.mulf %156, %121 : vector<2x32xf32>
    %158 = vector.extract_strided_slice %148 {offsets = [0, 0], sizes = [2, 32], strides = [1, 1]} : vector<2x128xf32> to vector<2x32xf32>
    %159 = vector.extract_strided_slice %148 {offsets = [0, 64], sizes = [2, 32], strides = [1, 1]} : vector<2x128xf32> to vector<2x32xf32>
    %160 = arith.mulf %158, %159 : vector<2x32xf32>
    %161 = arith.addf %157, %160 : vector<2x32xf32>
    %162 = vector.extract_strided_slice %155 {offsets = [0, 32], sizes = [2, 32], strides = [1, 1]} : vector<2x128xf32> to vector<2x32xf32>
    %163 = arith.mulf %162, %127 : vector<2x32xf32>
    %164 = vector.extract_strided_slice %155 {offsets = [0, 0], sizes = [2, 32], strides = [1, 1]} : vector<2x128xf32> to vector<2x32xf32>
    %165 = vector.extract_strided_slice %155 {offsets = [0, 64], sizes = [2, 32], strides = [1, 1]} : vector<2x128xf32> to vector<2x32xf32>
    %166 = arith.mulf %164, %165 : vector<2x32xf32>
    %167 = arith.addf %163, %166 : vector<2x32xf32>
    %168 = vector.extract_strided_slice %148 {offsets = [0, 96], sizes = [2, 32], strides = [1, 1]} : vector<2x128xf32> to vector<2x32xf32>
    %169 = math.tanh %161 : vector<2x32xf32>
    %170 = arith.mulf %168, %169 : vector<2x32xf32>
    %171 = vector.extract_strided_slice %155 {offsets = [0, 96], sizes = [2, 32], strides = [1, 1]} : vector<2x128xf32> to vector<2x32xf32>
    %172 = math.tanh %167 : vector<2x32xf32>
    %173 = arith.mulf %171, %172 : vector<2x32xf32>
    %c6_47 = arith.constant 6 : index
    %c0_48 = arith.constant 0 : index
    %174 = vector.load %arg13[%c6_47, %c0_48] : memref<16x64xf32, #tpu.memory_space<vmem>>, vector<2x32xf32>
    tpu.vector_store %arg13[%c6_47, %c0_48], %170 {strides = array<i32>} : memref<16x64xf32, #tpu.memory_space<vmem>>, vector<2x32xf32>,
    %c8_49 = arith.constant 8 : index
    %c32_50 = arith.constant 32 : index
    %175 = vector.load %arg13[%c8_49, %c32_50] : memref<16x64xf32, #tpu.memory_space<vmem>>, vector<2x32xf32>
    tpu.vector_store %arg13[%c8_49, %c32_50], %173 {strides = array<i32>} : memref<16x64xf32, #tpu.memory_space<vmem>>, vector<2x32xf32>,
    %c8_51 = arith.constant 8 : index
    %c0_52 = arith.constant 0 : index
    %176 = vector.load %arg12[%c8_51, %c0_52] : memref<16x256xf32, #tpu.memory_space<vmem>>, vector<2x128xf32>
    %cst_53 = arith.constant dense<0.000000e+00> : vector<2x128xf32>
    %177 = tpu.matmul %170, %13, %cst_53 {dimension_numbers = #tpu.dot_dimension_numbers<[1], [0], [0], [1], [0, 0, 1, 1], [], []>} : vector<2x32xf32>, vector<32x128xf32>, vector<2x128xf32> -> vector<2x128xf32>
    %178 = arith.addf %176, %177 : vector<2x128xf32>
    %c6_54 = arith.constant 6 : index
    %c128_55 = arith.constant 128 : index
    %179 = vector.load %arg12[%c6_54, %c128_55] : memref<16x256xf32, #tpu.memory_space<vmem>>, vector<2x128xf32>
    %cst_56 = arith.constant dense<0.000000e+00> : vector<2x128xf32>
    %180 = tpu.matmul %173, %14, %cst_56 {dimension_numbers = #tpu.dot_dimension_numbers<[1], [0], [0], [1], [0, 0, 1, 1], [], []>} : vector<2x32xf32>, vector<32x128xf32>, vector<2x128xf32> -> vector<2x128xf32>
    %181 = arith.addf %179, %180 : vector<2x128xf32>
    %182 = math.tanh %178 : vector<2x128xf32>
    %183 = arith.negf %178 : vector<2x128xf32>
    %184 = math.exp %183 : vector<2x128xf32>
    %cst_57 = arith.constant 1.000000e+00 : f32
    %185 = vector.broadcast %cst_57 : f32 to vector<2x128xf32>
    %186 = arith.addf %185, %184 : vector<2x128xf32>
    %187 = arith.divf %185, %186 : vector<2x128xf32>
    %188 = arith.select %5, %182, %187 : vector<2x128xi1>, vector<2x128xf32>
    %189 = math.tanh %181 : vector<2x128xf32>
    %190 = arith.negf %181 : vector<2x128xf32>
    %191 = math.exp %190 : vector<2x128xf32>
    %cst_58 = arith.constant 1.000000e+00 : f32
    %192 = vector.broadcast %cst_58 : f32 to vector<2x128xf32>
    %193 = arith.addf %192, %191 : vector<2x128xf32>
    %194 = arith.divf %192, %193 : vector<2x128xf32>
    %195 = arith.select %5, %189, %194 : vector<2x128xi1>, vector<2x128xf32>
    %196 = vector.extract_strided_slice %188 {offsets = [0, 32], sizes = [2, 32], strides = [1, 1]} : vector<2x128xf32> to vector<2x32xf32>
    %197 = arith.mulf %196, %161 : vector<2x32xf32>
    %198 = vector.extract_strided_slice %188 {offsets = [0, 0], sizes = [2, 32], strides = [1, 1]} : vector<2x128xf32> to vector<2x32xf32>
    %199 = vector.extract_strided_slice %188 {offsets = [0, 64], sizes = [2, 32], strides = [1, 1]} : vector<2x128xf32> to vector<2x32xf32>
    %200 = arith.mulf %198, %199 : vector<2x32xf32>
    %201 = arith.addf %197, %200 : vector<2x32xf32>
    %202 = vector.extract_strided_slice %195 {offsets = [0, 32], sizes = [2, 32], strides = [1, 1]} : vector<2x128xf32> to vector<2x32xf32>
    %203 = arith.mulf %202, %167 : vector<2x32xf32>
    %204 = vector.extract_strided_slice %195 {offsets = [0, 0], sizes = [2, 32], strides = [1, 1]} : vector<2x128xf32> to vector<2x32xf32>
    %205 = vector.extract_strided_slice %195 {offsets = [0, 64], sizes = [2, 32], strides = [1, 1]} : vector<2x128xf32> to vector<2x32xf32>
    %206 = arith.mulf %204, %205 : vector<2x32xf32>
    %207 = arith.addf %203, %206 : vector<2x32xf32>
    %208 = vector.extract_strided_slice %188 {offsets = [0, 96], sizes = [2, 32], strides = [1, 1]} : vector<2x128xf32> to vector<2x32xf32>
    %209 = math.tanh %201 : vector<2x32xf32>
    %210 = arith.mulf %208, %209 : vector<2x32xf32>
    %211 = vector.extract_strided_slice %195 {offsets = [0, 96], sizes = [2, 32], strides = [1, 1]} : vector<2x128xf32> to vector<2x32xf32>
    %212 = math.tanh %207 : vector<2x32xf32>
    %213 = arith.mulf %211, %212 : vector<2x32xf32>
    %c8_59 = arith.constant 8 : index
    %c0_60 = arith.constant 0 : index
    %214 = vector.load %arg13[%c8_59, %c0_60] : memref<16x64xf32, #tpu.memory_space<vmem>>, vector<2x32xf32>
    tpu.vector_store %arg13[%c8_59, %c0_60], %210 {strides = array<i32>} : memref<16x64xf32, #tpu.memory_space<vmem>>, vector<2x32xf32>,
    %c6_61 = arith.constant 6 : index
    %c32_62 = arith.constant 32 : index
    %215 = vector.load %arg13[%c6_61, %c32_62] : memref<16x64xf32, #tpu.memory_space<vmem>>, vector<2x32xf32>
    tpu.vector_store %arg13[%c6_61, %c32_62], %213 {strides = array<i32>} : memref<16x64xf32, #tpu.memory_space<vmem>>, vector<2x32xf32>,
    %c10_63 = arith.constant 10 : index
    %c0_64 = arith.constant 0 : index
    %216 = vector.load %arg12[%c10_63, %c0_64] : memref<16x256xf32, #tpu.memory_space<vmem>>, vector<2x128xf32>
    %cst_65 = arith.constant dense<0.000000e+00> : vector<2x128xf32>
    %217 = tpu.matmul %210, %13, %cst_65 {dimension_numbers = #tpu.dot_dimension_numbers<[1], [0], [0], [1], [0, 0, 1, 1], [], []>} : vector<2x32xf32>, vector<32x128xf32>, vector<2x128xf32> -> vector<2x128xf32>
    %218 = arith.addf %216, %217 : vector<2x128xf32>
    %c4_66 = arith.constant 4 : index
    %c128_67 = arith.constant 128 : index
    %219 = vector.load %arg12[%c4_66, %c128_67] : memref<16x256xf32, #tpu.memory_space<vmem>>, vector<2x128xf32>
    %cst_68 = arith.constant dense<0.000000e+00> : vector<2x128xf32>
    %220 = tpu.matmul %213, %14, %cst_68 {dimension_numbers = #tpu.dot_dimension_numbers<[1], [0], [0], [1], [0, 0, 1, 1], [], []>} : vector<2x32xf32>, vector<32x128xf32>, vector<2x128xf32> -> vector<2x128xf32>
    %221 = arith.addf %219, %220 : vector<2x128xf32>
    %222 = math.tanh %218 : vector<2x128xf32>
    %223 = arith.negf %218 : vector<2x128xf32>
    %224 = math.exp %223 : vector<2x128xf32>
    %cst_69 = arith.constant 1.000000e+00 : f32
    %225 = vector.broadcast %cst_69 : f32 to vector<2x128xf32>
    %226 = arith.addf %225, %224 : vector<2x128xf32>
    %227 = arith.divf %225, %226 : vector<2x128xf32>
    %228 = arith.select %5, %222, %227 : vector<2x128xi1>, vector<2x128xf32>
    %229 = math.tanh %221 : vector<2x128xf32>
    %230 = arith.negf %221 : vector<2x128xf32>
    %231 = math.exp %230 : vector<2x128xf32>
    %cst_70 = arith.constant 1.000000e+00 : f32
    %232 = vector.broadcast %cst_70 : f32 to vector<2x128xf32>
    %233 = arith.addf %232, %231 : vector<2x128xf32>
    %234 = arith.divf %232, %233 : vector<2x128xf32>
    %235 = arith.select %5, %229, %234 : vector<2x128xi1>, vector<2x128xf32>
    %236 = vector.extract_strided_slice %228 {offsets = [0, 32], sizes = [2, 32], strides = [1, 1]} : vector<2x128xf32> to vector<2x32xf32>
    %237 = arith.mulf %236, %201 : vector<2x32xf32>
    %238 = vector.extract_strided_slice %228 {offsets = [0, 0], sizes = [2, 32], strides = [1, 1]} : vector<2x128xf32> to vector<2x32xf32>
    %239 = vector.extract_strided_slice %228 {offsets = [0, 64], sizes = [2, 32], strides = [1, 1]} : vector<2x128xf32> to vector<2x32xf32>
    %240 = arith.mulf %238, %239 : vector<2x32xf32>
    %241 = arith.addf %237, %240 : vector<2x32xf32>
    %242 = vector.extract_strided_slice %235 {offsets = [0, 32], sizes = [2, 32], strides = [1, 1]} : vector<2x128xf32> to vector<2x32xf32>
    %243 = arith.mulf %242, %207 : vector<2x32xf32>
    %244 = vector.extract_strided_slice %235 {offsets = [0, 0], sizes = [2, 32], strides = [1, 1]} : vector<2x128xf32> to vector<2x32xf32>
    %245 = vector.extract_strided_slice %235 {offsets = [0, 64], sizes = [2, 32], strides = [1, 1]} : vector<2x128xf32> to vector<2x32xf32>
    %246 = arith.mulf %244, %245 : vector<2x32xf32>
    %247 = arith.addf %243, %246 : vector<2x32xf32>
    %248 = vector.extract_strided_slice %228 {offsets = [0, 96], sizes = [2, 32], strides = [1, 1]} : vector<2x128xf32> to vector<2x32xf32>
    %249 = math.tanh %241 : vector<2x32xf32>
    %250 = arith.mulf %248, %249 : vector<2x32xf32>
    %251 = vector.extract_strided_slice %235 {offsets = [0, 96], sizes = [2, 32], strides = [1, 1]} : vector<2x128xf32> to vector<2x32xf32>
    %252 = math.tanh %247 : vector<2x32xf32>
    %253 = arith.mulf %251, %252 : vector<2x32xf32>
    %c10_71 = arith.constant 10 : index
    %c0_72 = arith.constant 0 : index
    %254 = vector.load %arg13[%c10_71, %c0_72] : memref<16x64xf32, #tpu.memory_space<vmem>>, vector<2x32xf32>
    tpu.vector_store %arg13[%c10_71, %c0_72], %250 {strides = array<i32>} : memref<16x64xf32, #tpu.memory_space<vmem>>, vector<2x32xf32>,
    %c4_73 = arith.constant 4 : index
    %c32_74 = arith.constant 32 : index
    %255 = vector.load %arg13[%c4_73, %c32_74] : memref<16x64xf32, #tpu.memory_space<vmem>>, vector<2x32xf32>
    tpu.vector_store %arg13[%c4_73, %c32_74], %253 {strides = array<i32>} : memref<16x64xf32, #tpu.memory_space<vmem>>, vector<2x32xf32>,
    %c12_75 = arith.constant 12 : index
    %c0_76 = arith.constant 0 : index
    %256 = vector.load %arg12[%c12_75, %c0_76] : memref<16x256xf32, #tpu.memory_space<vmem>>, vector<2x128xf32>
    %cst_77 = arith.constant dense<0.000000e+00> : vector<2x128xf32>
    %257 = tpu.matmul %250, %13, %cst_77 {dimension_numbers = #tpu.dot_dimension_numbers<[1], [0], [0], [1], [0, 0, 1, 1], [], []>} : vector<2x32xf32>, vector<32x128xf32>, vector<2x128xf32> -> vector<2x128xf32>
    %258 = arith.addf %256, %257 : vector<2x128xf32>
    %c2_78 = arith.constant 2 : index
    %c128_79 = arith.constant 128 : index
    %259 = vector.load %arg12[%c2_78, %c128_79] : memref<16x256xf32, #tpu.memory_space<vmem>>, vector<2x128xf32>
    %cst_80 = arith.constant dense<0.000000e+00> : vector<2x128xf32>
    %260 = tpu.matmul %253, %14, %cst_80 {dimension_numbers = #tpu.dot_dimension_numbers<[1], [0], [0], [1], [0, 0, 1, 1], [], []>} : vector<2x32xf32>, vector<32x128xf32>, vector<2x128xf32> -> vector<2x128xf32>
    %261 = arith.addf %259, %260 : vector<2x128xf32>
    %262 = math.tanh %258 : vector<2x128xf32>
    %263 = arith.negf %258 : vector<2x128xf32>
    %264 = math.exp %263 : vector<2x128xf32>
    %cst_81 = arith.constant 1.000000e+00 : f32
    %265 = vector.broadcast %cst_81 : f32 to vector<2x128xf32>
    %266 = arith.addf %265, %264 : vector<2x128xf32>
    %267 = arith.divf %265, %266 : vector<2x128xf32>
    %268 = arith.select %5, %262, %267 : vector<2x128xi1>, vector<2x128xf32>
    %269 = math.tanh %261 : vector<2x128xf32>
    %270 = arith.negf %261 : vector<2x128xf32>
    %271 = math.exp %270 : vector<2x128xf32>
    %cst_82 = arith.constant 1.000000e+00 : f32
    %272 = vector.broadcast %cst_82 : f32 to vector<2x128xf32>
    %273 = arith.addf %272, %271 : vector<2x128xf32>
    %274 = arith.divf %272, %273 : vector<2x128xf32>
    %275 = arith.select %5, %269, %274 : vector<2x128xi1>, vector<2x128xf32>
    %276 = vector.extract_strided_slice %268 {offsets = [0, 32], sizes = [2, 32], strides = [1, 1]} : vector<2x128xf32> to vector<2x32xf32>
    %277 = arith.mulf %276, %241 : vector<2x32xf32>
    %278 = vector.extract_strided_slice %268 {offsets = [0, 0], sizes = [2, 32], strides = [1, 1]} : vector<2x128xf32> to vector<2x32xf32>
    %279 = vector.extract_strided_slice %268 {offsets = [0, 64], sizes = [2, 32], strides = [1, 1]} : vector<2x128xf32> to vector<2x32xf32>
    %280 = arith.mulf %278, %279 : vector<2x32xf32>
    %281 = arith.addf %277, %280 : vector<2x32xf32>
    %282 = vector.extract_strided_slice %275 {offsets = [0, 32], sizes = [2, 32], strides = [1, 1]} : vector<2x128xf32> to vector<2x32xf32>
    %283 = arith.mulf %282, %247 : vector<2x32xf32>
    %284 = vector.extract_strided_slice %275 {offsets = [0, 0], sizes = [2, 32], strides = [1, 1]} : vector<2x128xf32> to vector<2x32xf32>
    %285 = vector.extract_strided_slice %275 {offsets = [0, 64], sizes = [2, 32], strides = [1, 1]} : vector<2x128xf32> to vector<2x32xf32>
    %286 = arith.mulf %284, %285 : vector<2x32xf32>
    %287 = arith.addf %283, %286 : vector<2x32xf32>
    %288 = vector.extract_strided_slice %268 {offsets = [0, 96], sizes = [2, 32], strides = [1, 1]} : vector<2x128xf32> to vector<2x32xf32>
    %289 = math.tanh %281 : vector<2x32xf32>
    %290 = arith.mulf %288, %289 : vector<2x32xf32>
    %291 = vector.extract_strided_slice %275 {offsets = [0, 96], sizes = [2, 32], strides = [1, 1]} : vector<2x128xf32> to vector<2x32xf32>
    %292 = math.tanh %287 : vector<2x32xf32>
    %293 = arith.mulf %291, %292 : vector<2x32xf32>
    %c12_83 = arith.constant 12 : index
    %c0_84 = arith.constant 0 : index
    %294 = vector.load %arg13[%c12_83, %c0_84] : memref<16x64xf32, #tpu.memory_space<vmem>>, vector<2x32xf32>
    tpu.vector_store %arg13[%c12_83, %c0_84], %290 {strides = array<i32>} : memref<16x64xf32, #tpu.memory_space<vmem>>, vector<2x32xf32>,
    %c2_85 = arith.constant 2 : index
    %c32_86 = arith.constant 32 : index
    %295 = vector.load %arg13[%c2_85, %c32_86] : memref<16x64xf32, #tpu.memory_space<vmem>>, vector<2x32xf32>
    tpu.vector_store %arg13[%c2_85, %c32_86], %293 {strides = array<i32>} : memref<16x64xf32, #tpu.memory_space<vmem>>, vector<2x32xf32>,
    %c14_87 = arith.constant 14 : index
    %c0_88 = arith.constant 0 : index
    %296 = vector.load %arg12[%c14_87, %c0_88] : memref<16x256xf32, #tpu.memory_space<vmem>>, vector<2x128xf32>
    %cst_89 = arith.constant dense<0.000000e+00> : vector<2x128xf32>
    %297 = tpu.matmul %290, %13, %cst_89 {dimension_numbers = #tpu.dot_dimension_numbers<[1], [0], [0], [1], [0, 0, 1, 1], [], []>} : vector<2x32xf32>, vector<32x128xf32>, vector<2x128xf32> -> vector<2x128xf32>
    %298 = arith.addf %296, %297 : vector<2x128xf32>
    %c0_90 = arith.constant 0 : index
    %c128_91 = arith.constant 128 : index
    %299 = vector.load %arg12[%c0_90, %c128_91] : memref<16x256xf32, #tpu.memory_space<vmem>>, vector<2x128xf32>
    %cst_92 = arith.constant dense<0.000000e+00> : vector<2x128xf32>
    %300 = tpu.matmul %293, %14, %cst_92 {dimension_numbers = #tpu.dot_dimension_numbers<[1], [0], [0], [1], [0, 0, 1, 1], [], []>} : vector<2x32xf32>, vector<32x128xf32>, vector<2x128xf32> -> vector<2x128xf32>
    %301 = arith.addf %299, %300 : vector<2x128xf32>
    %302 = math.tanh %298 : vector<2x128xf32>
    %303 = arith.negf %298 : vector<2x128xf32>
    %304 = math.exp %303 : vector<2x128xf32>
    %cst_93 = arith.constant 1.000000e+00 : f32
    %305 = vector.broadcast %cst_93 : f32 to vector<2x128xf32>
    %306 = arith.addf %305, %304 : vector<2x128xf32>
    %307 = arith.divf %305, %306 : vector<2x128xf32>
    %308 = arith.select %5, %302, %307 : vector<2x128xi1>, vector<2x128xf32>
    %309 = math.tanh %301 : vector<2x128xf32>
    %310 = arith.negf %301 : vector<2x128xf32>
    %311 = math.exp %310 : vector<2x128xf32>
    %cst_94 = arith.constant 1.000000e+00 : f32
    %312 = vector.broadcast %cst_94 : f32 to vector<2x128xf32>
    %313 = arith.addf %312, %311 : vector<2x128xf32>
    %314 = arith.divf %312, %313 : vector<2x128xf32>
    %315 = arith.select %5, %309, %314 : vector<2x128xi1>, vector<2x128xf32>
    %316 = vector.extract_strided_slice %308 {offsets = [0, 32], sizes = [2, 32], strides = [1, 1]} : vector<2x128xf32> to vector<2x32xf32>
    %317 = arith.mulf %316, %281 : vector<2x32xf32>
    %318 = vector.extract_strided_slice %308 {offsets = [0, 0], sizes = [2, 32], strides = [1, 1]} : vector<2x128xf32> to vector<2x32xf32>
    %319 = vector.extract_strided_slice %308 {offsets = [0, 64], sizes = [2, 32], strides = [1, 1]} : vector<2x128xf32> to vector<2x32xf32>
    %320 = arith.mulf %318, %319 : vector<2x32xf32>
    %321 = arith.addf %317, %320 : vector<2x32xf32>
    %322 = vector.extract_strided_slice %315 {offsets = [0, 32], sizes = [2, 32], strides = [1, 1]} : vector<2x128xf32> to vector<2x32xf32>
    %323 = arith.mulf %322, %287 : vector<2x32xf32>
    %324 = vector.extract_strided_slice %315 {offsets = [0, 0], sizes = [2, 32], strides = [1, 1]} : vector<2x128xf32> to vector<2x32xf32>
    %325 = vector.extract_strided_slice %315 {offsets = [0, 64], sizes = [2, 32], strides = [1, 1]} : vector<2x128xf32> to vector<2x32xf32>
    %326 = arith.mulf %324, %325 : vector<2x32xf32>
    %327 = arith.addf %323, %326 : vector<2x32xf32>
    %328 = vector.extract_strided_slice %308 {offsets = [0, 96], sizes = [2, 32], strides = [1, 1]} : vector<2x128xf32> to vector<2x32xf32>
    %329 = math.tanh %321 : vector<2x32xf32>
    %330 = arith.mulf %328, %329 : vector<2x32xf32>
    %331 = vector.extract_strided_slice %315 {offsets = [0, 96], sizes = [2, 32], strides = [1, 1]} : vector<2x128xf32> to vector<2x32xf32>
    %332 = math.tanh %327 : vector<2x32xf32>
    %333 = arith.mulf %331, %332 : vector<2x32xf32>
    %c14_95 = arith.constant 14 : index
    %c0_96 = arith.constant 0 : index
    %334 = vector.load %arg13[%c14_95, %c0_96] : memref<16x64xf32, #tpu.memory_space<vmem>>, vector<2x32xf32>
    tpu.vector_store %arg13[%c14_95, %c0_96], %330 {strides = array<i32>} : memref<16x64xf32, #tpu.memory_space<vmem>>, vector<2x32xf32>,
    %c0_97 = arith.constant 0 : index
    %c32_98 = arith.constant 32 : index
    %335 = vector.load %arg13[%c0_97, %c32_98] : memref<16x64xf32, #tpu.memory_space<vmem>>, vector<2x32xf32>
    tpu.vector_store %arg13[%c0_97, %c32_98], %333 {strides = array<i32>} : memref<16x64xf32, #tpu.memory_space<vmem>>, vector<2x32xf32>,
    %c0_99 = arith.constant 0 : index
    %c0_100 = arith.constant 0 : index
    %336 = vector.load %arg13[%c0_99, %c0_100] : memref<16x64xf32, #tpu.memory_space<vmem>>, vector<16x64xf32>
    %c0_101 = arith.constant 0 : index
    %c0_102 = arith.constant 0 : index
    %337 = vector.load %arg5[%c0_101, %c0_102] : memref<64x256xf32, #tpu.memory_space<vmem>>, vector<64x256xf32>
    %cst_103 = arith.constant dense<0.000000e+00> : vector<16x256xf32>
    %338 = tpu.matmul %336, %337, %cst_103 {dimension_numbers = #tpu.dot_dimension_numbers<[1], [0], [0], [1], [0, 0, 1, 1], [], []>} : vector<16x64xf32>, vector<64x256xf32>, vector<16x256xf32> -> vector<16x256xf32>
    %c0_104 = arith.constant 0 : index
    %c0_105 = arith.constant 0 : index
    %339 = vector.load %arg6[%c0_104, %c0_105] : memref<1x256xf32, #tpu.memory_space<vmem>>, vector<1x256xf32>
    %340 = vector.broadcast %339 : vector<1x256xf32> to vector<16x256xf32>
    %341 = arith.addf %338, %340 : vector<16x256xf32>
    %c0_106 = arith.constant 0 : index
    %c0_107 = arith.constant 0 : index
    %342 = vector.load %arg12[%c0_106, %c0_107] : memref<16x256xf32, #tpu.memory_space<vmem>>, vector<16x256xf32>
    tpu.vector_store %arg12[%c0_106, %c0_107], %341 {strides = array<i32>} : memref<16x256xf32, #tpu.memory_space<vmem>>, vector<16x256xf32>,
    %c0_108 = arith.constant 0 : index
    %c0_109 = arith.constant 0 : index
    %343 = vector.load %arg7[%c0_108, %c0_109] : memref<32x128xf32, #tpu.memory_space<vmem>>, vector<32x128xf32>
    %c0_110 = arith.constant 0 : index
    %c0_111 = arith.constant 0 : index
    %344 = vector.load %arg8[%c0_110, %c0_111] : memref<32x128xf32, #tpu.memory_space<vmem>>, vector<32x128xf32>
    %cst_112 = arith.constant 0.000000e+00 : f32
    %345 = vector.broadcast %cst_112 : f32 to vector<2x32xf32>
    %c0_113 = arith.constant 0 : index
    %c0_114 = arith.constant 0 : index
    %346 = vector.load %arg12[%c0_113, %c0_114] : memref<16x256xf32, #tpu.memory_space<vmem>>, vector<2x128xf32>
    %cst_115 = arith.constant dense<0.000000e+00> : vector<2x128xf32>
    %347 = tpu.matmul %345, %343, %cst_115 {dimension_numbers = #tpu.dot_dimension_numbers<[1], [0], [0], [1], [0, 0, 1, 1], [], []>} : vector<2x32xf32>, vector<32x128xf32>, vector<2x128xf32> -> vector<2x128xf32>
    %348 = arith.addf %346, %347 : vector<2x128xf32>
    %c14_116 = arith.constant 14 : index
    %c128_117 = arith.constant 128 : index
    %349 = vector.load %arg12[%c14_116, %c128_117] : memref<16x256xf32, #tpu.memory_space<vmem>>, vector<2x128xf32>
    %cst_118 = arith.constant dense<0.000000e+00> : vector<2x128xf32>
    %350 = tpu.matmul %345, %344, %cst_118 {dimension_numbers = #tpu.dot_dimension_numbers<[1], [0], [0], [1], [0, 0, 1, 1], [], []>} : vector<2x32xf32>, vector<32x128xf32>, vector<2x128xf32> -> vector<2x128xf32>
    %351 = arith.addf %349, %350 : vector<2x128xf32>
    %352 = math.tanh %348 : vector<2x128xf32>
    %353 = arith.negf %348 : vector<2x128xf32>
    %354 = math.exp %353 : vector<2x128xf32>
    %cst_119 = arith.constant 1.000000e+00 : f32
    %355 = vector.broadcast %cst_119 : f32 to vector<2x128xf32>
    %356 = arith.addf %355, %354 : vector<2x128xf32>
    %357 = arith.divf %355, %356 : vector<2x128xf32>
    %358 = arith.select %5, %352, %357 : vector<2x128xi1>, vector<2x128xf32>
    %359 = math.tanh %351 : vector<2x128xf32>
    %360 = arith.negf %351 : vector<2x128xf32>
    %361 = math.exp %360 : vector<2x128xf32>
    %cst_120 = arith.constant 1.000000e+00 : f32
    %362 = vector.broadcast %cst_120 : f32 to vector<2x128xf32>
    %363 = arith.addf %362, %361 : vector<2x128xf32>
    %364 = arith.divf %362, %363 : vector<2x128xf32>
    %365 = arith.select %5, %359, %364 : vector<2x128xi1>, vector<2x128xf32>
    %366 = vector.extract_strided_slice %358 {offsets = [0, 32], sizes = [2, 32], strides = [1, 1]} : vector<2x128xf32> to vector<2x32xf32>
    %367 = arith.mulf %366, %345 : vector<2x32xf32>
    %368 = vector.extract_strided_slice %358 {offsets = [0, 0], sizes = [2, 32], strides = [1, 1]} : vector<2x128xf32> to vector<2x32xf32>
    %369 = vector.extract_strided_slice %358 {offsets = [0, 64], sizes = [2, 32], strides = [1, 1]} : vector<2x128xf32> to vector<2x32xf32>
    %370 = arith.mulf %368, %369 : vector<2x32xf32>
    %371 = arith.addf %367, %370 : vector<2x32xf32>
    %372 = vector.extract_strided_slice %365 {offsets = [0, 32], sizes = [2, 32], strides = [1, 1]} : vector<2x128xf32> to vector<2x32xf32>
    %373 = arith.mulf %372, %345 : vector<2x32xf32>
    %374 = vector.extract_strided_slice %365 {offsets = [0, 0], sizes = [2, 32], strides = [1, 1]} : vector<2x128xf32> to vector<2x32xf32>
    %375 = vector.extract_strided_slice %365 {offsets = [0, 64], sizes = [2, 32], strides = [1, 1]} : vector<2x128xf32> to vector<2x32xf32>
    %376 = arith.mulf %374, %375 : vector<2x32xf32>
    %377 = arith.addf %373, %376 : vector<2x32xf32>
    %378 = vector.extract_strided_slice %358 {offsets = [0, 96], sizes = [2, 32], strides = [1, 1]} : vector<2x128xf32> to vector<2x32xf32>
    %379 = math.tanh %371 : vector<2x32xf32>
    %380 = arith.mulf %378, %379 : vector<2x32xf32>
    %381 = vector.extract_strided_slice %365 {offsets = [0, 96], sizes = [2, 32], strides = [1, 1]} : vector<2x128xf32> to vector<2x32xf32>
    %382 = math.tanh %377 : vector<2x32xf32>
    %383 = arith.mulf %381, %382 : vector<2x32xf32>
    %c0_121 = arith.constant 0 : index
    %c0_122 = arith.constant 0 : index
    %384 = vector.load %arg13[%c0_121, %c0_122] : memref<16x64xf32, #tpu.memory_space<vmem>>, vector<2x32xf32>
    tpu.vector_store %arg13[%c0_121, %c0_122], %380 {strides = array<i32>} : memref<16x64xf32, #tpu.memory_space<vmem>>, vector<2x32xf32>,
    %c14_123 = arith.constant 14 : index
    %c32_124 = arith.constant 32 : index
    %385 = vector.load %arg13[%c14_123, %c32_124] : memref<16x64xf32, #tpu.memory_space<vmem>>, vector<2x32xf32>
    tpu.vector_store %arg13[%c14_123, %c32_124], %383 {strides = array<i32>} : memref<16x64xf32, #tpu.memory_space<vmem>>, vector<2x32xf32>,
    %c2_125 = arith.constant 2 : index
    %c0_126 = arith.constant 0 : index
    %386 = vector.load %arg12[%c2_125, %c0_126] : memref<16x256xf32, #tpu.memory_space<vmem>>, vector<2x128xf32>
    %cst_127 = arith.constant dense<0.000000e+00> : vector<2x128xf32>
    %387 = tpu.matmul %380, %343, %cst_127 {dimension_numbers = #tpu.dot_dimension_numbers<[1], [0], [0], [1], [0, 0, 1, 1], [], []>} : vector<2x32xf32>, vector<32x128xf32>, vector<2x128xf32> -> vector<2x128xf32>
    %388 = arith.addf %386, %387 : vector<2x128xf32>
    %c12_128 = arith.constant 12 : index
    %c128_129 = arith.constant 128 : index
    %389 = vector.load %arg12[%c12_128, %c128_129] : memref<16x256xf32, #tpu.memory_space<vmem>>, vector<2x128xf32>
    %cst_130 = arith.constant dense<0.000000e+00> : vector<2x128xf32>
    %390 = tpu.matmul %383, %344, %cst_130 {dimension_numbers = #tpu.dot_dimension_numbers<[1], [0], [0], [1], [0, 0, 1, 1], [], []>} : vector<2x32xf32>, vector<32x128xf32>, vector<2x128xf32> -> vector<2x128xf32>
    %391 = arith.addf %389, %390 : vector<2x128xf32>
    %392 = math.tanh %388 : vector<2x128xf32>
    %393 = arith.negf %388 : vector<2x128xf32>
    %394 = math.exp %393 : vector<2x128xf32>
    %cst_131 = arith.constant 1.000000e+00 : f32
    %395 = vector.broadcast %cst_131 : f32 to vector<2x128xf32>
    %396 = arith.addf %395, %394 : vector<2x128xf32>
    %397 = arith.divf %395, %396 : vector<2x128xf32>
    %398 = arith.select %5, %392, %397 : vector<2x128xi1>, vector<2x128xf32>
    %399 = math.tanh %391 : vector<2x128xf32>
    %400 = arith.negf %391 : vector<2x128xf32>
    %401 = math.exp %400 : vector<2x128xf32>
    %cst_132 = arith.constant 1.000000e+00 : f32
    %402 = vector.broadcast %cst_132 : f32 to vector<2x128xf32>
    %403 = arith.addf %402, %401 : vector<2x128xf32>
    %404 = arith.divf %402, %403 : vector<2x128xf32>
    %405 = arith.select %5, %399, %404 : vector<2x128xi1>, vector<2x128xf32>
    %406 = vector.extract_strided_slice %398 {offsets = [0, 32], sizes = [2, 32], strides = [1, 1]} : vector<2x128xf32> to vector<2x32xf32>
    %407 = arith.mulf %406, %371 : vector<2x32xf32>
    %408 = vector.extract_strided_slice %398 {offsets = [0, 0], sizes = [2, 32], strides = [1, 1]} : vector<2x128xf32> to vector<2x32xf32>
    %409 = vector.extract_strided_slice %398 {offsets = [0, 64], sizes = [2, 32], strides = [1, 1]} : vector<2x128xf32> to vector<2x32xf32>
    %410 = arith.mulf %408, %409 : vector<2x32xf32>
    %411 = arith.addf %407, %410 : vector<2x32xf32>
    %412 = vector.extract_strided_slice %405 {offsets = [0, 32], sizes = [2, 32], strides = [1, 1]} : vector<2x128xf32> to vector<2x32xf32>
    %413 = arith.mulf %412, %377 : vector<2x32xf32>
    %414 = vector.extract_strided_slice %405 {offsets = [0, 0], sizes = [2, 32], strides = [1, 1]} : vector<2x128xf32> to vector<2x32xf32>
    %415 = vector.extract_strided_slice %405 {offsets = [0, 64], sizes = [2, 32], strides = [1, 1]} : vector<2x128xf32> to vector<2x32xf32>
    %416 = arith.mulf %414, %415 : vector<2x32xf32>
    %417 = arith.addf %413, %416 : vector<2x32xf32>
    %418 = vector.extract_strided_slice %398 {offsets = [0, 96], sizes = [2, 32], strides = [1, 1]} : vector<2x128xf32> to vector<2x32xf32>
    %419 = math.tanh %411 : vector<2x32xf32>
    %420 = arith.mulf %418, %419 : vector<2x32xf32>
    %421 = vector.extract_strided_slice %405 {offsets = [0, 96], sizes = [2, 32], strides = [1, 1]} : vector<2x128xf32> to vector<2x32xf32>
    %422 = math.tanh %417 : vector<2x32xf32>
    %423 = arith.mulf %421, %422 : vector<2x32xf32>
    %c2_133 = arith.constant 2 : index
    %c0_134 = arith.constant 0 : index
    %424 = vector.load %arg13[%c2_133, %c0_134] : memref<16x64xf32, #tpu.memory_space<vmem>>, vector<2x32xf32>
    tpu.vector_store %arg13[%c2_133, %c0_134], %420 {strides = array<i32>} : memref<16x64xf32, #tpu.memory_space<vmem>>, vector<2x32xf32>,
    %c12_135 = arith.constant 12 : index
    %c32_136 = arith.constant 32 : index
    %425 = vector.load %arg13[%c12_135, %c32_136] : memref<16x64xf32, #tpu.memory_space<vmem>>, vector<2x32xf32>
    tpu.vector_store %arg13[%c12_135, %c32_136], %423 {strides = array<i32>} : memref<16x64xf32, #tpu.memory_space<vmem>>, vector<2x32xf32>,
    %c4_137 = arith.constant 4 : index
    %c0_138 = arith.constant 0 : index
    %426 = vector.load %arg12[%c4_137, %c0_138] : memref<16x256xf32, #tpu.memory_space<vmem>>, vector<2x128xf32>
    %cst_139 = arith.constant dense<0.000000e+00> : vector<2x128xf32>
    %427 = tpu.matmul %420, %343, %cst_139 {dimension_numbers = #tpu.dot_dimension_numbers<[1], [0], [0], [1], [0, 0, 1, 1], [], []>} : vector<2x32xf32>, vector<32x128xf32>, vector<2x128xf32> -> vector<2x128xf32>
    %428 = arith.addf %426, %427 : vector<2x128xf32>
    %c10_140 = arith.constant 10 : index
    %c128_141 = arith.constant 128 : index
    %429 = vector.load %arg12[%c10_140, %c128_141] : memref<16x256xf32, #tpu.memory_space<vmem>>, vector<2x128xf32>
    %cst_142 = arith.constant dense<0.000000e+00> : vector<2x128xf32>
    %430 = tpu.matmul %423, %344, %cst_142 {dimension_numbers = #tpu.dot_dimension_numbers<[1], [0], [0], [1], [0, 0, 1, 1], [], []>} : vector<2x32xf32>, vector<32x128xf32>, vector<2x128xf32> -> vector<2x128xf32>
    %431 = arith.addf %429, %430 : vector<2x128xf32>
    %432 = math.tanh %428 : vector<2x128xf32>
    %433 = arith.negf %428 : vector<2x128xf32>
    %434 = math.exp %433 : vector<2x128xf32>
    %cst_143 = arith.constant 1.000000e+00 : f32
    %435 = vector.broadcast %cst_143 : f32 to vector<2x128xf32>
    %436 = arith.addf %435, %434 : vector<2x128xf32>
    %437 = arith.divf %435, %436 : vector<2x128xf32>
    %438 = arith.select %5, %432, %437 : vector<2x128xi1>, vector<2x128xf32>
    %439 = math.tanh %431 : vector<2x128xf32>
    %440 = arith.negf %431 : vector<2x128xf32>
    %441 = math.exp %440 : vector<2x128xf32>
    %cst_144 = arith.constant 1.000000e+00 : f32
    %442 = vector.broadcast %cst_144 : f32 to vector<2x128xf32>
    %443 = arith.addf %442, %441 : vector<2x128xf32>
    %444 = arith.divf %442, %443 : vector<2x128xf32>
    %445 = arith.select %5, %439, %444 : vector<2x128xi1>, vector<2x128xf32>
    %446 = vector.extract_strided_slice %438 {offsets = [0, 32], sizes = [2, 32], strides = [1, 1]} : vector<2x128xf32> to vector<2x32xf32>
    %447 = arith.mulf %446, %411 : vector<2x32xf32>
    %448 = vector.extract_strided_slice %438 {offsets = [0, 0], sizes = [2, 32], strides = [1, 1]} : vector<2x128xf32> to vector<2x32xf32>
    %449 = vector.extract_strided_slice %438 {offsets = [0, 64], sizes = [2, 32], strides = [1, 1]} : vector<2x128xf32> to vector<2x32xf32>
    %450 = arith.mulf %448, %449 : vector<2x32xf32>
    %451 = arith.addf %447, %450 : vector<2x32xf32>
    %452 = vector.extract_strided_slice %445 {offsets = [0, 32], sizes = [2, 32], strides = [1, 1]} : vector<2x128xf32> to vector<2x32xf32>
    %453 = arith.mulf %452, %417 : vector<2x32xf32>
    %454 = vector.extract_strided_slice %445 {offsets = [0, 0], sizes = [2, 32], strides = [1, 1]} : vector<2x128xf32> to vector<2x32xf32>
    %455 = vector.extract_strided_slice %445 {offsets = [0, 64], sizes = [2, 32], strides = [1, 1]} : vector<2x128xf32> to vector<2x32xf32>
    %456 = arith.mulf %454, %455 : vector<2x32xf32>
    %457 = arith.addf %453, %456 : vector<2x32xf32>
    %458 = vector.extract_strided_slice %438 {offsets = [0, 96], sizes = [2, 32], strides = [1, 1]} : vector<2x128xf32> to vector<2x32xf32>
    %459 = math.tanh %451 : vector<2x32xf32>
    %460 = arith.mulf %458, %459 : vector<2x32xf32>
    %461 = vector.extract_strided_slice %445 {offsets = [0, 96], sizes = [2, 32], strides = [1, 1]} : vector<2x128xf32> to vector<2x32xf32>
    %462 = math.tanh %457 : vector<2x32xf32>
    %463 = arith.mulf %461, %462 : vector<2x32xf32>
    %c4_145 = arith.constant 4 : index
    %c0_146 = arith.constant 0 : index
    %464 = vector.load %arg13[%c4_145, %c0_146] : memref<16x64xf32, #tpu.memory_space<vmem>>, vector<2x32xf32>
    tpu.vector_store %arg13[%c4_145, %c0_146], %460 {strides = array<i32>} : memref<16x64xf32, #tpu.memory_space<vmem>>, vector<2x32xf32>,
    %c10_147 = arith.constant 10 : index
    %c32_148 = arith.constant 32 : index
    %465 = vector.load %arg13[%c10_147, %c32_148] : memref<16x64xf32, #tpu.memory_space<vmem>>, vector<2x32xf32>
    tpu.vector_store %arg13[%c10_147, %c32_148], %463 {strides = array<i32>} : memref<16x64xf32, #tpu.memory_space<vmem>>, vector<2x32xf32>,
    %c6_149 = arith.constant 6 : index
    %c0_150 = arith.constant 0 : index
    %466 = vector.load %arg12[%c6_149, %c0_150] : memref<16x256xf32, #tpu.memory_space<vmem>>, vector<2x128xf32>
    %cst_151 = arith.constant dense<0.000000e+00> : vector<2x128xf32>
    %467 = tpu.matmul %460, %343, %cst_151 {dimension_numbers = #tpu.dot_dimension_numbers<[1], [0], [0], [1], [0, 0, 1, 1], [], []>} : vector<2x32xf32>, vector<32x128xf32>, vector<2x128xf32> -> vector<2x128xf32>
    %468 = arith.addf %466, %467 : vector<2x128xf32>
    %c8_152 = arith.constant 8 : index
    %c128_153 = arith.constant 128 : index
    %469 = vector.load %arg12[%c8_152, %c128_153] : memref<16x256xf32, #tpu.memory_space<vmem>>, vector<2x128xf32>
    %cst_154 = arith.constant dense<0.000000e+00> : vector<2x128xf32>
    %470 = tpu.matmul %463, %344, %cst_154 {dimension_numbers = #tpu.dot_dimension_numbers<[1], [0], [0], [1], [0, 0, 1, 1], [], []>} : vector<2x32xf32>, vector<32x128xf32>, vector<2x128xf32> -> vector<2x128xf32>
    %471 = arith.addf %469, %470 : vector<2x128xf32>
    %472 = math.tanh %468 : vector<2x128xf32>
    %473 = arith.negf %468 : vector<2x128xf32>
    %474 = math.exp %473 : vector<2x128xf32>
    %cst_155 = arith.constant 1.000000e+00 : f32
    %475 = vector.broadcast %cst_155 : f32 to vector<2x128xf32>
    %476 = arith.addf %475, %474 : vector<2x128xf32>
    %477 = arith.divf %475, %476 : vector<2x128xf32>
    %478 = arith.select %5, %472, %477 : vector<2x128xi1>, vector<2x128xf32>
    %479 = math.tanh %471 : vector<2x128xf32>
    %480 = arith.negf %471 : vector<2x128xf32>
    %481 = math.exp %480 : vector<2x128xf32>
    %cst_156 = arith.constant 1.000000e+00 : f32
    %482 = vector.broadcast %cst_156 : f32 to vector<2x128xf32>
    %483 = arith.addf %482, %481 : vector<2x128xf32>
    %484 = arith.divf %482, %483 : vector<2x128xf32>
    %485 = arith.select %5, %479, %484 : vector<2x128xi1>, vector<2x128xf32>
    %486 = vector.extract_strided_slice %478 {offsets = [0, 32], sizes = [2, 32], strides = [1, 1]} : vector<2x128xf32> to vector<2x32xf32>
    %487 = arith.mulf %486, %451 : vector<2x32xf32>
    %488 = vector.extract_strided_slice %478 {offsets = [0, 0], sizes = [2, 32], strides = [1, 1]} : vector<2x128xf32> to vector<2x32xf32>
    %489 = vector.extract_strided_slice %478 {offsets = [0, 64], sizes = [2, 32], strides = [1, 1]} : vector<2x128xf32> to vector<2x32xf32>
    %490 = arith.mulf %488, %489 : vector<2x32xf32>
    %491 = arith.addf %487, %490 : vector<2x32xf32>
    %492 = vector.extract_strided_slice %485 {offsets = [0, 32], sizes = [2, 32], strides = [1, 1]} : vector<2x128xf32> to vector<2x32xf32>
    %493 = arith.mulf %492, %457 : vector<2x32xf32>
    %494 = vector.extract_strided_slice %485 {offsets = [0, 0], sizes = [2, 32], strides = [1, 1]} : vector<2x128xf32> to vector<2x32xf32>
    %495 = vector.extract_strided_slice %485 {offsets = [0, 64], sizes = [2, 32], strides = [1, 1]} : vector<2x128xf32> to vector<2x32xf32>
    %496 = arith.mulf %494, %495 : vector<2x32xf32>
    %497 = arith.addf %493, %496 : vector<2x32xf32>
    %498 = vector.extract_strided_slice %478 {offsets = [0, 96], sizes = [2, 32], strides = [1, 1]} : vector<2x128xf32> to vector<2x32xf32>
    %499 = math.tanh %491 : vector<2x32xf32>
    %500 = arith.mulf %498, %499 : vector<2x32xf32>
    %501 = vector.extract_strided_slice %485 {offsets = [0, 96], sizes = [2, 32], strides = [1, 1]} : vector<2x128xf32> to vector<2x32xf32>
    %502 = math.tanh %497 : vector<2x32xf32>
    %503 = arith.mulf %501, %502 : vector<2x32xf32>
    %c6_157 = arith.constant 6 : index
    %c0_158 = arith.constant 0 : index
    %504 = vector.load %arg13[%c6_157, %c0_158] : memref<16x64xf32, #tpu.memory_space<vmem>>, vector<2x32xf32>
    tpu.vector_store %arg13[%c6_157, %c0_158], %500 {strides = array<i32>} : memref<16x64xf32, #tpu.memory_space<vmem>>, vector<2x32xf32>,
    %c8_159 = arith.constant 8 : index
    %c32_160 = arith.constant 32 : index
    %505 = vector.load %arg13[%c8_159, %c32_160] : memref<16x64xf32, #tpu.memory_space<vmem>>, vector<2x32xf32>
    tpu.vector_store %arg13[%c8_159, %c32_160], %503 {strides = array<i32>} : memref<16x64xf32, #tpu.memory_space<vmem>>, vector<2x32xf32>,
    %c8_161 = arith.constant 8 : index
    %c0_162 = arith.constant 0 : index
    %506 = vector.load %arg12[%c8_161, %c0_162] : memref<16x256xf32, #tpu.memory_space<vmem>>, vector<2x128xf32>
    %cst_163 = arith.constant dense<0.000000e+00> : vector<2x128xf32>
    %507 = tpu.matmul %500, %343, %cst_163 {dimension_numbers = #tpu.dot_dimension_numbers<[1], [0], [0], [1], [0, 0, 1, 1], [], []>} : vector<2x32xf32>, vector<32x128xf32>, vector<2x128xf32> -> vector<2x128xf32>
    %508 = arith.addf %506, %507 : vector<2x128xf32>
    %c6_164 = arith.constant 6 : index
    %c128_165 = arith.constant 128 : index
    %509 = vector.load %arg12[%c6_164, %c128_165] : memref<16x256xf32, #tpu.memory_space<vmem>>, vector<2x128xf32>
    %cst_166 = arith.constant dense<0.000000e+00> : vector<2x128xf32>
    %510 = tpu.matmul %503, %344, %cst_166 {dimension_numbers = #tpu.dot_dimension_numbers<[1], [0], [0], [1], [0, 0, 1, 1], [], []>} : vector<2x32xf32>, vector<32x128xf32>, vector<2x128xf32> -> vector<2x128xf32>
    %511 = arith.addf %509, %510 : vector<2x128xf32>
    %512 = math.tanh %508 : vector<2x128xf32>
    %513 = arith.negf %508 : vector<2x128xf32>
    %514 = math.exp %513 : vector<2x128xf32>
    %cst_167 = arith.constant 1.000000e+00 : f32
    %515 = vector.broadcast %cst_167 : f32 to vector<2x128xf32>
    %516 = arith.addf %515, %514 : vector<2x128xf32>
    %517 = arith.divf %515, %516 : vector<2x128xf32>
    %518 = arith.select %5, %512, %517 : vector<2x128xi1>, vector<2x128xf32>
    %519 = math.tanh %511 : vector<2x128xf32>
    %520 = arith.negf %511 : vector<2x128xf32>
    %521 = math.exp %520 : vector<2x128xf32>
    %cst_168 = arith.constant 1.000000e+00 : f32
    %522 = vector.broadcast %cst_168 : f32 to vector<2x128xf32>
    %523 = arith.addf %522, %521 : vector<2x128xf32>
    %524 = arith.divf %522, %523 : vector<2x128xf32>
    %525 = arith.select %5, %519, %524 : vector<2x128xi1>, vector<2x128xf32>
    %526 = vector.extract_strided_slice %518 {offsets = [0, 32], sizes = [2, 32], strides = [1, 1]} : vector<2x128xf32> to vector<2x32xf32>
    %527 = arith.mulf %526, %491 : vector<2x32xf32>
    %528 = vector.extract_strided_slice %518 {offsets = [0, 0], sizes = [2, 32], strides = [1, 1]} : vector<2x128xf32> to vector<2x32xf32>
    %529 = vector.extract_strided_slice %518 {offsets = [0, 64], sizes = [2, 32], strides = [1, 1]} : vector<2x128xf32> to vector<2x32xf32>
    %530 = arith.mulf %528, %529 : vector<2x32xf32>
    %531 = arith.addf %527, %530 : vector<2x32xf32>
    %532 = vector.extract_strided_slice %525 {offsets = [0, 32], sizes = [2, 32], strides = [1, 1]} : vector<2x128xf32> to vector<2x32xf32>
    %533 = arith.mulf %532, %497 : vector<2x32xf32>
    %534 = vector.extract_strided_slice %525 {offsets = [0, 0], sizes = [2, 32], strides = [1, 1]} : vector<2x128xf32> to vector<2x32xf32>
    %535 = vector.extract_strided_slice %525 {offsets = [0, 64], sizes = [2, 32], strides = [1, 1]} : vector<2x128xf32> to vector<2x32xf32>
    %536 = arith.mulf %534, %535 : vector<2x32xf32>
    %537 = arith.addf %533, %536 : vector<2x32xf32>
    %538 = vector.extract_strided_slice %518 {offsets = [0, 96], sizes = [2, 32], strides = [1, 1]} : vector<2x128xf32> to vector<2x32xf32>
    %539 = math.tanh %531 : vector<2x32xf32>
    %540 = arith.mulf %538, %539 : vector<2x32xf32>
    %541 = vector.extract_strided_slice %525 {offsets = [0, 96], sizes = [2, 32], strides = [1, 1]} : vector<2x128xf32> to vector<2x32xf32>
    %542 = math.tanh %537 : vector<2x32xf32>
    %543 = arith.mulf %541, %542 : vector<2x32xf32>
    %c8_169 = arith.constant 8 : index
    %c0_170 = arith.constant 0 : index
    %544 = vector.load %arg13[%c8_169, %c0_170] : memref<16x64xf32, #tpu.memory_space<vmem>>, vector<2x32xf32>
    tpu.vector_store %arg13[%c8_169, %c0_170], %540 {strides = array<i32>} : memref<16x64xf32, #tpu.memory_space<vmem>>, vector<2x32xf32>,
    %c6_171 = arith.constant 6 : index
    %c32_172 = arith.constant 32 : index
    %545 = vector.load %arg13[%c6_171, %c32_172] : memref<16x64xf32, #tpu.memory_space<vmem>>, vector<2x32xf32>
    tpu.vector_store %arg13[%c6_171, %c32_172], %543 {strides = array<i32>} : memref<16x64xf32, #tpu.memory_space<vmem>>, vector<2x32xf32>,
    %c10_173 = arith.constant 10 : index
    %c0_174 = arith.constant 0 : index
    %546 = vector.load %arg12[%c10_173, %c0_174] : memref<16x256xf32, #tpu.memory_space<vmem>>, vector<2x128xf32>
    %cst_175 = arith.constant dense<0.000000e+00> : vector<2x128xf32>
    %547 = tpu.matmul %540, %343, %cst_175 {dimension_numbers = #tpu.dot_dimension_numbers<[1], [0], [0], [1], [0, 0, 1, 1], [], []>} : vector<2x32xf32>, vector<32x128xf32>, vector<2x128xf32> -> vector<2x128xf32>
    %548 = arith.addf %546, %547 : vector<2x128xf32>
    %c4_176 = arith.constant 4 : index
    %c128_177 = arith.constant 128 : index
    %549 = vector.load %arg12[%c4_176, %c128_177] : memref<16x256xf32, #tpu.memory_space<vmem>>, vector<2x128xf32>
    %cst_178 = arith.constant dense<0.000000e+00> : vector<2x128xf32>
    %550 = tpu.matmul %543, %344, %cst_178 {dimension_numbers = #tpu.dot_dimension_numbers<[1], [0], [0], [1], [0, 0, 1, 1], [], []>} : vector<2x32xf32>, vector<32x128xf32>, vector<2x128xf32> -> vector<2x128xf32>
    %551 = arith.addf %549, %550 : vector<2x128xf32>
    %552 = math.tanh %548 : vector<2x128xf32>
    %553 = arith.negf %548 : vector<2x128xf32>
    %554 = math.exp %553 : vector<2x128xf32>
    %cst_179 = arith.constant 1.000000e+00 : f32
    %555 = vector.broadcast %cst_179 : f32 to vector<2x128xf32>
    %556 = arith.addf %555, %554 : vector<2x128xf32>
    %557 = arith.divf %555, %556 : vector<2x128xf32>
    %558 = arith.select %5, %552, %557 : vector<2x128xi1>, vector<2x128xf32>
    %559 = math.tanh %551 : vector<2x128xf32>
    %560 = arith.negf %551 : vector<2x128xf32>
    %561 = math.exp %560 : vector<2x128xf32>
    %cst_180 = arith.constant 1.000000e+00 : f32
    %562 = vector.broadcast %cst_180 : f32 to vector<2x128xf32>
    %563 = arith.addf %562, %561 : vector<2x128xf32>
    %564 = arith.divf %562, %563 : vector<2x128xf32>
    %565 = arith.select %5, %559, %564 : vector<2x128xi1>, vector<2x128xf32>
    %566 = vector.extract_strided_slice %558 {offsets = [0, 32], sizes = [2, 32], strides = [1, 1]} : vector<2x128xf32> to vector<2x32xf32>
    %567 = arith.mulf %566, %531 : vector<2x32xf32>
    %568 = vector.extract_strided_slice %558 {offsets = [0, 0], sizes = [2, 32], strides = [1, 1]} : vector<2x128xf32> to vector<2x32xf32>
    %569 = vector.extract_strided_slice %558 {offsets = [0, 64], sizes = [2, 32], strides = [1, 1]} : vector<2x128xf32> to vector<2x32xf32>
    %570 = arith.mulf %568, %569 : vector<2x32xf32>
    %571 = arith.addf %567, %570 : vector<2x32xf32>
    %572 = vector.extract_strided_slice %565 {offsets = [0, 32], sizes = [2, 32], strides = [1, 1]} : vector<2x128xf32> to vector<2x32xf32>
    %573 = arith.mulf %572, %537 : vector<2x32xf32>
    %574 = vector.extract_strided_slice %565 {offsets = [0, 0], sizes = [2, 32], strides = [1, 1]} : vector<2x128xf32> to vector<2x32xf32>
    %575 = vector.extract_strided_slice %565 {offsets = [0, 64], sizes = [2, 32], strides = [1, 1]} : vector<2x128xf32> to vector<2x32xf32>
    %576 = arith.mulf %574, %575 : vector<2x32xf32>
    %577 = arith.addf %573, %576 : vector<2x32xf32>
    %578 = vector.extract_strided_slice %558 {offsets = [0, 96], sizes = [2, 32], strides = [1, 1]} : vector<2x128xf32> to vector<2x32xf32>
    %579 = math.tanh %571 : vector<2x32xf32>
    %580 = arith.mulf %578, %579 : vector<2x32xf32>
    %581 = vector.extract_strided_slice %565 {offsets = [0, 96], sizes = [2, 32], strides = [1, 1]} : vector<2x128xf32> to vector<2x32xf32>
    %582 = math.tanh %577 : vector<2x32xf32>
    %583 = arith.mulf %581, %582 : vector<2x32xf32>
    %c10_181 = arith.constant 10 : index
    %c0_182 = arith.constant 0 : index
    %584 = vector.load %arg13[%c10_181, %c0_182] : memref<16x64xf32, #tpu.memory_space<vmem>>, vector<2x32xf32>
    tpu.vector_store %arg13[%c10_181, %c0_182], %580 {strides = array<i32>} : memref<16x64xf32, #tpu.memory_space<vmem>>, vector<2x32xf32>,
    %c4_183 = arith.constant 4 : index
    %c32_184 = arith.constant 32 : index
    %585 = vector.load %arg13[%c4_183, %c32_184] : memref<16x64xf32, #tpu.memory_space<vmem>>, vector<2x32xf32>
    tpu.vector_store %arg13[%c4_183, %c32_184], %583 {strides = array<i32>} : memref<16x64xf32, #tpu.memory_space<vmem>>, vector<2x32xf32>,
    %c12_185 = arith.constant 12 : index
    %c0_186 = arith.constant 0 : index
    %586 = vector.load %arg12[%c12_185, %c0_186] : memref<16x256xf32, #tpu.memory_space<vmem>>, vector<2x128xf32>
    %cst_187 = arith.constant dense<0.000000e+00> : vector<2x128xf32>
    %587 = tpu.matmul %580, %343, %cst_187 {dimension_numbers = #tpu.dot_dimension_numbers<[1], [0], [0], [1], [0, 0, 1, 1], [], []>} : vector<2x32xf32>, vector<32x128xf32>, vector<2x128xf32> -> vector<2x128xf32>
    %588 = arith.addf %586, %587 : vector<2x128xf32>
    %c2_188 = arith.constant 2 : index
    %c128_189 = arith.constant 128 : index
    %589 = vector.load %arg12[%c2_188, %c128_189] : memref<16x256xf32, #tpu.memory_space<vmem>>, vector<2x128xf32>
    %cst_190 = arith.constant dense<0.000000e+00> : vector<2x128xf32>
    %590 = tpu.matmul %583, %344, %cst_190 {dimension_numbers = #tpu.dot_dimension_numbers<[1], [0], [0], [1], [0, 0, 1, 1], [], []>} : vector<2x32xf32>, vector<32x128xf32>, vector<2x128xf32> -> vector<2x128xf32>
    %591 = arith.addf %589, %590 : vector<2x128xf32>
    %592 = math.tanh %588 : vector<2x128xf32>
    %593 = arith.negf %588 : vector<2x128xf32>
    %594 = math.exp %593 : vector<2x128xf32>
    %cst_191 = arith.constant 1.000000e+00 : f32
    %595 = vector.broadcast %cst_191 : f32 to vector<2x128xf32>
    %596 = arith.addf %595, %594 : vector<2x128xf32>
    %597 = arith.divf %595, %596 : vector<2x128xf32>
    %598 = arith.select %5, %592, %597 : vector<2x128xi1>, vector<2x128xf32>
    %599 = math.tanh %591 : vector<2x128xf32>
    %600 = arith.negf %591 : vector<2x128xf32>
    %601 = math.exp %600 : vector<2x128xf32>
    %cst_192 = arith.constant 1.000000e+00 : f32
    %602 = vector.broadcast %cst_192 : f32 to vector<2x128xf32>
    %603 = arith.addf %602, %601 : vector<2x128xf32>
    %604 = arith.divf %602, %603 : vector<2x128xf32>
    %605 = arith.select %5, %599, %604 : vector<2x128xi1>, vector<2x128xf32>
    %606 = vector.extract_strided_slice %598 {offsets = [0, 32], sizes = [2, 32], strides = [1, 1]} : vector<2x128xf32> to vector<2x32xf32>
    %607 = arith.mulf %606, %571 : vector<2x32xf32>
    %608 = vector.extract_strided_slice %598 {offsets = [0, 0], sizes = [2, 32], strides = [1, 1]} : vector<2x128xf32> to vector<2x32xf32>
    %609 = vector.extract_strided_slice %598 {offsets = [0, 64], sizes = [2, 32], strides = [1, 1]} : vector<2x128xf32> to vector<2x32xf32>
    %610 = arith.mulf %608, %609 : vector<2x32xf32>
    %611 = arith.addf %607, %610 : vector<2x32xf32>
    %612 = vector.extract_strided_slice %605 {offsets = [0, 32], sizes = [2, 32], strides = [1, 1]} : vector<2x128xf32> to vector<2x32xf32>
    %613 = arith.mulf %612, %577 : vector<2x32xf32>
    %614 = vector.extract_strided_slice %605 {offsets = [0, 0], sizes = [2, 32], strides = [1, 1]} : vector<2x128xf32> to vector<2x32xf32>
    %615 = vector.extract_strided_slice %605 {offsets = [0, 64], sizes = [2, 32], strides = [1, 1]} : vector<2x128xf32> to vector<2x32xf32>
    %616 = arith.mulf %614, %615 : vector<2x32xf32>
    %617 = arith.addf %613, %616 : vector<2x32xf32>
    %618 = vector.extract_strided_slice %598 {offsets = [0, 96], sizes = [2, 32], strides = [1, 1]} : vector<2x128xf32> to vector<2x32xf32>
    %619 = math.tanh %611 : vector<2x32xf32>
    %620 = arith.mulf %618, %619 : vector<2x32xf32>
    %621 = vector.extract_strided_slice %605 {offsets = [0, 96], sizes = [2, 32], strides = [1, 1]} : vector<2x128xf32> to vector<2x32xf32>
    %622 = math.tanh %617 : vector<2x32xf32>
    %623 = arith.mulf %621, %622 : vector<2x32xf32>
    %c12_193 = arith.constant 12 : index
    %c0_194 = arith.constant 0 : index
    %624 = vector.load %arg13[%c12_193, %c0_194] : memref<16x64xf32, #tpu.memory_space<vmem>>, vector<2x32xf32>
    tpu.vector_store %arg13[%c12_193, %c0_194], %620 {strides = array<i32>} : memref<16x64xf32, #tpu.memory_space<vmem>>, vector<2x32xf32>,
    %c2_195 = arith.constant 2 : index
    %c32_196 = arith.constant 32 : index
    %625 = vector.load %arg13[%c2_195, %c32_196] : memref<16x64xf32, #tpu.memory_space<vmem>>, vector<2x32xf32>
    tpu.vector_store %arg13[%c2_195, %c32_196], %623 {strides = array<i32>} : memref<16x64xf32, #tpu.memory_space<vmem>>, vector<2x32xf32>,
    %c14_197 = arith.constant 14 : index
    %c0_198 = arith.constant 0 : index
    %626 = vector.load %arg12[%c14_197, %c0_198] : memref<16x256xf32, #tpu.memory_space<vmem>>, vector<2x128xf32>
    %cst_199 = arith.constant dense<0.000000e+00> : vector<2x128xf32>
    %627 = tpu.matmul %620, %343, %cst_199 {dimension_numbers = #tpu.dot_dimension_numbers<[1], [0], [0], [1], [0, 0, 1, 1], [], []>} : vector<2x32xf32>, vector<32x128xf32>, vector<2x128xf32> -> vector<2x128xf32>
    %628 = arith.addf %626, %627 : vector<2x128xf32>
    %c0_200 = arith.constant 0 : index
    %c128_201 = arith.constant 128 : index
    %629 = vector.load %arg12[%c0_200, %c128_201] : memref<16x256xf32, #tpu.memory_space<vmem>>, vector<2x128xf32>
    %cst_202 = arith.constant dense<0.000000e+00> : vector<2x128xf32>
    %630 = tpu.matmul %623, %344, %cst_202 {dimension_numbers = #tpu.dot_dimension_numbers<[1], [0], [0], [1], [0, 0, 1, 1], [], []>} : vector<2x32xf32>, vector<32x128xf32>, vector<2x128xf32> -> vector<2x128xf32>
    %631 = arith.addf %629, %630 : vector<2x128xf32>
    %632 = math.tanh %628 : vector<2x128xf32>
    %633 = arith.negf %628 : vector<2x128xf32>
    %634 = math.exp %633 : vector<2x128xf32>
    %cst_203 = arith.constant 1.000000e+00 : f32
    %635 = vector.broadcast %cst_203 : f32 to vector<2x128xf32>
    %636 = arith.addf %635, %634 : vector<2x128xf32>
    %637 = arith.divf %635, %636 : vector<2x128xf32>
    %638 = arith.select %5, %632, %637 : vector<2x128xi1>, vector<2x128xf32>
    %639 = math.tanh %631 : vector<2x128xf32>
    %640 = arith.negf %631 : vector<2x128xf32>
    %641 = math.exp %640 : vector<2x128xf32>
    %cst_204 = arith.constant 1.000000e+00 : f32
    %642 = vector.broadcast %cst_204 : f32 to vector<2x128xf32>
    %643 = arith.addf %642, %641 : vector<2x128xf32>
    %644 = arith.divf %642, %643 : vector<2x128xf32>
    %645 = arith.select %5, %639, %644 : vector<2x128xi1>, vector<2x128xf32>
    %646 = vector.extract_strided_slice %638 {offsets = [0, 32], sizes = [2, 32], strides = [1, 1]} : vector<2x128xf32> to vector<2x32xf32>
    %647 = arith.mulf %646, %611 : vector<2x32xf32>
    %648 = vector.extract_strided_slice %638 {offsets = [0, 0], sizes = [2, 32], strides = [1, 1]} : vector<2x128xf32> to vector<2x32xf32>
    %649 = vector.extract_strided_slice %638 {offsets = [0, 64], sizes = [2, 32], strides = [1, 1]} : vector<2x128xf32> to vector<2x32xf32>
    %650 = arith.mulf %648, %649 : vector<2x32xf32>
    %651 = arith.addf %647, %650 : vector<2x32xf32>
    %652 = vector.extract_strided_slice %645 {offsets = [0, 32], sizes = [2, 32], strides = [1, 1]} : vector<2x128xf32> to vector<2x32xf32>
    %653 = arith.mulf %652, %617 : vector<2x32xf32>
    %654 = vector.extract_strided_slice %645 {offsets = [0, 0], sizes = [2, 32], strides = [1, 1]} : vector<2x128xf32> to vector<2x32xf32>
    %655 = vector.extract_strided_slice %645 {offsets = [0, 64], sizes = [2, 32], strides = [1, 1]} : vector<2x128xf32> to vector<2x32xf32>
    %656 = arith.mulf %654, %655 : vector<2x32xf32>
    %657 = arith.addf %653, %656 : vector<2x32xf32>
    %658 = vector.extract_strided_slice %638 {offsets = [0, 96], sizes = [2, 32], strides = [1, 1]} : vector<2x128xf32> to vector<2x32xf32>
    %659 = math.tanh %651 : vector<2x32xf32>
    %660 = arith.mulf %658, %659 : vector<2x32xf32>
    %661 = vector.extract_strided_slice %645 {offsets = [0, 96], sizes = [2, 32], strides = [1, 1]} : vector<2x128xf32> to vector<2x32xf32>
    %662 = math.tanh %657 : vector<2x32xf32>
    %663 = arith.mulf %661, %662 : vector<2x32xf32>
    %c14_205 = arith.constant 14 : index
    %c0_206 = arith.constant 0 : index
    %664 = vector.load %arg13[%c14_205, %c0_206] : memref<16x64xf32, #tpu.memory_space<vmem>>, vector<2x32xf32>
    tpu.vector_store %arg13[%c14_205, %c0_206], %660 {strides = array<i32>} : memref<16x64xf32, #tpu.memory_space<vmem>>, vector<2x32xf32>,
    %c0_207 = arith.constant 0 : index
    %c32_208 = arith.constant 32 : index
    %665 = vector.load %arg13[%c0_207, %c32_208] : memref<16x64xf32, #tpu.memory_space<vmem>>, vector<2x32xf32>
    tpu.vector_store %arg13[%c0_207, %c32_208], %663 {strides = array<i32>} : memref<16x64xf32, #tpu.memory_space<vmem>>, vector<2x32xf32>,
    %c0_209 = arith.constant 0 : index
    %c0_210 = arith.constant 0 : index
    %666 = vector.load %arg13[%c0_209, %c0_210] : memref<16x64xf32, #tpu.memory_space<vmem>>, vector<16x64xf32>
    %c0_211 = arith.constant 0 : index
    %c0_212 = arith.constant 0 : index
    %667 = vector.load %arg9[%c0_211, %c0_212] : memref<64x128xf32, #tpu.memory_space<vmem>>, vector<64x128xf32>
    %cst_213 = arith.constant dense<0.000000e+00> : vector<16x128xf32>
    %668 = tpu.matmul %666, %667, %cst_213 {dimension_numbers = #tpu.dot_dimension_numbers<[1], [0], [0], [1], [0, 0, 1, 1], [], []>} : vector<16x64xf32>, vector<64x128xf32>, vector<16x128xf32> -> vector<16x128xf32>
    %c0_214 = arith.constant 0 : index
    %c0_215 = arith.constant 0 : index
    %669 = vector.load %arg10[%c0_214, %c0_215] : memref<1x128xf32, #tpu.memory_space<vmem>>, vector<1x128xf32>
    %670 = vector.broadcast %669 : vector<1x128xf32> to vector<16x128xf32>
    %671 = arith.addf %668, %670 : vector<16x128xf32>
    %c0_216 = arith.constant 0 : index
    %c0_217 = arith.constant 0 : index
    %672 = vector.load %arg11[%c0_216, %c0_217] : memref<16x128xf32, #tpu.memory_space<vmem>>, vector<16x128xf32>
    tpu.vector_store %arg11[%c0_216, %c0_217], %671 {strides = array<i32>} : memref<16x128xf32, #tpu.memory_space<vmem>>, vector<16x128xf32>,
    return
  }
}

</mosaic_0001>

<llo_original>
// kernel: bilstm_forward.1
$region0: #{bilstm_forward.1}
  #allocation0 [shape = 'u32[]', space=smem, size = 0x4, offset = 0x4, fixed_abs, tag = 'smem constant byte address 0x4 - core index']
  #allocation1 [shape = 'u32[144,128]{1,0:T(1,128)}', space=vmem, size = 0x12000, scoped, tag = 'internal scratch']
  #allocation2 [shape = 'f32[16,256]{1,0:T(8,128)}', space=vmem, size = 0x4000, scoped, tag = 'scratch operand']
  #allocation3 [shape = 'f32[16,64]{1,0:T(8,128)}', space=vmem, size = 0x2000, scoped, tag = 'scratch operand']
  %s0 = inlined_call_operand.vmem [shape: f32[16,16], index: 0, kind: input, shape index: {}]
  %s1 = inlined_call_operand.vmem [shape: f32[16,256], index: 1, kind: input, shape index: {}]
  %s2 = inlined_call_operand.vmem [shape: f32[1,256], index: 2, kind: input, shape index: {}]
  %s3 = inlined_call_operand.hbm [shape: f32[32,128], index: 3, kind: input, shape index: {}]
  %s4 = inlined_call_operand.hbm [shape: f32[32,128], index: 4, kind: input, shape index: {}]
  %s5 = inlined_call_operand.hbm [shape: f32[64,256], index: 5, kind: input, shape index: {}]
  %s6 = inlined_call_operand.vmem [shape: f32[1,256], index: 6, kind: input, shape index: {}]
  %s7 = inlined_call_operand.hbm [shape: f32[32,128], index: 7, kind: input, shape index: {}]
  %s8 = inlined_call_operand.hbm [shape: f32[32,128], index: 8, kind: input, shape index: {}]
  %s9 = inlined_call_operand.hbm [shape: f32[64,128], index: 9, kind: input, shape index: {}]
  %s10 = inlined_call_operand.vmem [shape: f32[1,128], index: 10, kind: input, shape index: {}]
  %s11 = inlined_call_operand.vmem [shape: f32[16,128], index: 11, kind: output, shape index: {}]
  %s12 = sld [smem:[#allocation0]]
  $region78: #{bilstm_forward.1} parent=0
    _
  %s14 = ssub.s32 1, %s12
  %s15 = scalar_select 0, %s14, %s12
  $region1: #{bilstm_forward.1} parent=0
    #allocation4 [shape = 'u8[16384]{0}', space=vmem, size = 0x4000, scoped, tag = 'input window, operand 3, single buffered']
    #allocation5 [shape = 's32[1]{0}', space=sflag, size = 0x4, scoped, tag = 'scoped memory for bilstm_forward.1']
    #allocation6 [shape = 'u8[16384]{0}', space=vmem, size = 0x4000, scoped, tag = 'input window, operand 4, single buffered']
    #allocation7 [shape = 's32[1]{0}', space=sflag, size = 0x4, scoped, tag = 'scoped memory for bilstm_forward.1']
    #allocation8 [shape = 'u8[65536]{0}', space=vmem, size = 0x10000, scoped, tag = 'input window, operand 5, single buffered']
    #allocation9 [shape = 'u8[16384]{0}', space=vmem, size = 0x4000, scoped, tag = 'input window, operand 7, single buffered']
    #allocation10 [shape = 's32[1]{0}', space=sflag, size = 0x4, scoped, tag = 'scoped memory for bilstm_forward.1']
    #allocation11 [shape = 'u8[16384]{0}', space=vmem, size = 0x4000, scoped, tag = 'input window, operand 8, single buffered']
    #allocation12 [shape = 'u8[32768]{0}', space=vmem, size = 0x8000, scoped, tag = 'input window, operand 9, single buffered']
    #allocation13 [shape = 's32[1]{0}', space=sflag, size = 0x4, scoped, tag = 'scoped memory for bilstm_forward.1']
    %16 = vsyncpa [#allocation5], 0
    %17 = vsyncpa [#allocation7], 0
    %18 = vsyncpa [#allocation10], 0
    %19 = vsyncpa [#allocation13], 0
    // Predicated region
    $region2: #{bilstm_forward.1} parent=1 // pred_check
      _
    $region3: #{bilstm_forward.1} parent=1 // pred_check_branch
      %21 = sbr.rel (0) target = $region5
    $region4: #{bilstm_forward.1} parent=1 // pred_region
      _
    $region5: #{bilstm_forward.1} parent=1 // pred_fallthru
      _
    // Predicated region
    $region6: #{bilstm_forward.1} parent=1 // pred_check
      _
    $region7: #{bilstm_forward.1} parent=1 // pred_check_branch
      %23 = sbr.rel (0) target = $region9
    $region8: #{bilstm_forward.1} parent=1 // pred_region
      _
    $region9: #{bilstm_forward.1} parent=1 // pred_fallthru
      _
    // Predicated region
    $region10: #{bilstm_forward.1} parent=1 // pred_check
      _
    $region11: #{bilstm_forward.1} parent=1 // pred_check_branch
      %25 = sbr.rel (0) target = $region13
    $region12: #{bilstm_forward.1} parent=1 // pred_region
      _
    $region13: #{bilstm_forward.1} parent=1 // pred_fallthru
      _
    // Predicated region
    $region14: #{bilstm_forward.1} parent=1 // pred_check
      _
    $region15: #{bilstm_forward.1} parent=1 // pred_check_branch
      %27 = sbr.rel (0) target = $region17
    $region16: #{bilstm_forward.1} parent=1 // pred_region
      %s29 = ssub.s32 512, 512
      %30 = vsyncadd [#allocation5], %s29
      %s31 = sshll.u32 [#allocation4], 4
      %s32 = int_to_ptr.vmem [resolvable:$true] %s31
      %37 = dma.hbm_to_vmem [thread:$0]  %s3, 512, %s32, [#allocation5], 128, 128, 8
    $region17: #{bilstm_forward.1} parent=1 // pred_fallthru
      _
    // Predicated region
    $region18: #{bilstm_forward.1} parent=1 // pred_check
      _
    $region19: #{bilstm_forward.1} parent=1 // pred_check_branch
      %39 = sbr.rel (0) target = $region21
    $region20: #{bilstm_forward.1} parent=1 // pred_region
      %s41 = ssub.s32 512, 512
      %42 = vsyncadd [#allocation7], %s41
      %s43 = sshll.u32 [#allocation6], 4
      %s44 = int_to_ptr.vmem [resolvable:$true] %s43
      %49 = dma.hbm_to_vmem [thread:$0]  %s4, 512, %s44, [#allocation7], 128, 128, 8
    $region21: #{bilstm_forward.1} parent=1 // pred_fallthru
      _
    // Predicated region
    $region22: #{bilstm_forward.1} parent=1 // pred_check
      _
    $region23: #{bilstm_forward.1} parent=1 // pred_check_branch
      %51 = sbr.rel (0) target = $region25
    $region24: #{bilstm_forward.1} parent=1 // pred_region
      %s53 = ssub.s32 2048, 2048
      %54 = vsyncadd [#allocation7], %s53
      %s55 = sshll.u32 [#allocation8], 4
      %s56 = int_to_ptr.vmem [resolvable:$true] %s55
      %61 = dma.hbm_to_vmem [thread:$0]  %s5, 2048, %s56, [#allocation7], 256, 256, 16
    $region25: #{bilstm_forward.1} parent=1 // pred_fallthru
      _
    // Predicated region
    $region26: #{bilstm_forward.1} parent=1 // pred_check
      _
    $region27: #{bilstm_forward.1} parent=1 // pred_check_branch
      %63 = sbr.rel (0) target = $region29
    $region28: #{bilstm_forward.1} parent=1 // pred_region
      _
    $region29: #{bilstm_forward.1} parent=1 // pred_fallthru
      _
    // Predicated region
    $region30: #{bilstm_forward.1} parent=1 // pred_check
      _
    $region31: #{bilstm_forward.1} parent=1 // pred_check_branch
      %65 = sbr.rel (0) target = $region33
    $region32: #{bilstm_forward.1} parent=1 // pred_region
      %s67 = ssub.s32 512, 512
      %68 = vsyncadd [#allocation10], %s67
      %s69 = sshll.u32 [#allocation9], 4
      %s70 = int_to_ptr.vmem [resolvable:$true] %s69
      %75 = dma.hbm_to_vmem [thread:$0]  %s7, 512, %s70, [#allocation10], 128, 128, 8
    $region33: #{bilstm_forward.1} parent=1 // pred_fallthru
      _
    // Predicated region
    $region34: #{bilstm_forward.1} parent=1 // pred_check
      _
    $region35: #{bilstm_forward.1} parent=1 // pred_check_branch
      %77 = sbr.rel (0) target = $region37
    $region36: #{bilstm_forward.1} parent=1 // pred_region
      %s79 = ssub.s32 512, 512
      %80 = vsyncadd [#allocation10], %s79
      %s81 = sshll.u32 [#allocation11], 4
      %s82 = int_to_ptr.vmem [resolvable:$true] %s81
      %87 = dma.hbm_to_vmem [thread:$0]  %s8, 512, %s82, [#allocation10], 128, 128, 8
    $region37: #{bilstm_forward.1} parent=1 // pred_fallthru
      _
    // Predicated region
    $region38: #{bilstm_forward.1} parent=1 // pred_check
      _
    $region39: #{bilstm_forward.1} parent=1 // pred_check_branch
      %89 = sbr.rel (0) target = $region41
    $region40: #{bilstm_forward.1} parent=1 // pred_region
      %s91 = ssub.s32 1024, 1024
      %92 = vsyncadd [#allocation13], %s91
      %s93 = sshll.u32 [#allocation12], 4
      %s94 = int_to_ptr.vmem [resolvable:$true] %s93
      %99 = dma.hbm_to_vmem [thread:$0]  %s9, 1024, %s94, [#allocation13], 128, 128, 8
    $region41: #{bilstm_forward.1} parent=1 // pred_fallthru
      _
    // Predicated region
    $region42: #{bilstm_forward.1} parent=1 // pred_check
      _
    $region43: #{bilstm_forward.1} parent=1 // pred_check_branch
      %101 = sbr.rel (0) target = $region45
    $region44: #{bilstm_forward.1} parent=1 // pred_region
      _
    $region45: #{bilstm_forward.1} parent=1 // pred_fallthru
      _
    // Predicated region
    $region46: #{bilstm_forward.1} parent=1 // pred_check
      _
    $region47: #{bilstm_forward.1} parent=1 // pred_check_branch
      %103 = sbr.rel (0) target = $region49
    $region48: #{bilstm_forward.1} parent=1 // pred_region
      %104 = dma.done [#allocation5], 512
    $region49: #{bilstm_forward.1} parent=1 // pred_fallthru
      _
    // Predicated region
    $region50: #{bilstm_forward.1} parent=1 // pred_check
      _
    $region51: #{bilstm_forward.1} parent=1 // pred_check_branch
      %106 = sbr.rel (0) target = $region53
    $region52: #{bilstm_forward.1} parent=1 // pred_region
      %107 = dma.done [#allocation7], 512
    $region53: #{bilstm_forward.1} parent=1 // pred_fallthru
      _
    // Predicated region
    $region54: #{bilstm_forward.1} parent=1 // pred_check
      _
    $region55: #{bilstm_forward.1} parent=1 // pred_check_branch
      %109 = sbr.rel (0) target = $region57
    $region56: #{bilstm_forward.1} parent=1 // pred_region
      %110 = dma.done [#allocation7], 2048
    $region57: #{bilstm_forward.1} parent=1 // pred_fallthru
      _
    // Predicated region
    $region58: #{bilstm_forward.1} parent=1 // pred_check
      _
    $region59: #{bilstm_forward.1} parent=1 // pred_check_branch
      %112 = sbr.rel (0) target = $region61
    $region60: #{bilstm_forward.1} parent=1 // pred_region
      %113 = dma.done [#allocation10], 512
    $region61: #{bilstm_forward.1} parent=1 // pred_fallthru
      _
    // Predicated region
    $region62: #{bilstm_forward.1} parent=1 // pred_check
      _
    $region63: #{bilstm_forward.1} parent=1 // pred_check_branch
      %115 = sbr.rel (0) target = $region65
    $region64: #{bilstm_forward.1} parent=1 // pred_region
      %116 = dma.done [#allocation10], 512
    $region65: #{bilstm_forward.1} parent=1 // pred_fallthru
      _
    // Predicated region
    $region66: #{bilstm_forward.1} parent=1 // pred_check
      _
    $region67: #{bilstm_forward.1} parent=1 // pred_check_branch
      %118 = sbr.rel (0) target = $region69
    $region68: #{bilstm_forward.1} parent=1 // pred_region
      %119 = dma.done [#allocation13], 1024
    $region69: #{bilstm_forward.1} parent=1 // pred_fallthru
      _
    %v120 = vlaneseq
    %v121 = vand.u32 %v120, 127
    %vm122 = vcmp.ge.s32.totalorder %v121, 64
    %vm123 = vcmp.lt.s32.totalorder %v121, 96
    %vm124 = vmand %vm122, %vm123
    %v125 = vld [vmem:[%s0] sm:$0xff]
    %v126 = vld [vmem:[%s0 + $0x8] sm:$0xff]
    %v127 = vld [vmem:[%s1] sm:$0xff]
    %v128 = vld [vmem:[%s1 + $0x8] sm:$0xff]
    %v129 = vld [vmem:[%s1 + $0x10] sm:$0xff]
    %v130 = vld [vmem:[%s1 + $0x18] sm:$0xff]
    %v131 = vld [vmem:[%s2] sm:$0x3]
    %v133 = vlaneseq
    %v134 = vshrl.u32 %v133, 7
    %v135 = vsub.s32 0, %v134
    %v136 = vrot.slane %v131, %v135
    %v137 = vlaneseq
    %v138 = vshrl.u32 %v137, 7
    %v139 = vsub.s32 1, %v138
    %v140 = vrot.slane %v131, %v139
    %vm143 = vcmask 130048
    %v145 = vsel %vm143, %v125, 0
    %v148 = vsel %vm143, %v126, 0
    %150 = vmatprep.subr.mxu0 0.0
    %151 = vmatpush1.msra.mxu0 0.0
    %152 = vmatprep.subr.mxu0 0.0
    %153 = vmatpush1.msra.mxu0 0.0
    %154 = vmatprep.subr.mxu0 0.0
    %155 = vmatpush1.msra.mxu0 0.0
    %156 = vmatprep.subr.mxu0 0.0
    %157 = vmatpush1.msra.mxu0 0.0
    %158 = vmatprep.subr.mxu0 0.0
    %159 = vmatpush1.msra.mxu0 0.0
    %160 = vmatprep.subr.mxu0 0.0
    %161 = vmatpush1.msra.mxu0 0.0
    %162 = vmatprep.subr.mxu0 0.0
    %163 = vmatpush1.msra.mxu0 0.0
    %164 = vmatprep.subr.mxu0 0.0
    %165 = vmatpush1.msra.mxu0 0.0
    %166 = vmatprep.subr.mxu0 0.0
    %167 = vmatpush1.msra.mxu0 0.0
    %168 = vmatprep.subr.mxu0 0.0
    %169 = vmatpush1.msra.mxu0 0.0
    %170 = vmatprep.subr.mxu0 0.0
    %171 = vmatpush1.msra.mxu0 0.0
    %172 = vmatprep.subr.mxu0 0.0
    %173 = vmatpush1.msra.mxu0 0.0
    %174 = vmatprep.subr.mxu0 0.0
    %175 = vmatpush1.msra.mxu0 0.0
    %176 = vmatprep.subr.mxu0 0.0
    %177 = vmatpush1.msra.mxu0 0.0
    %178 = vmatprep.subr.mxu0 %v130
    %179 = vmatpush1.msra.mxu0 %v129
    %180 = vmatprep.subr.mxu0 %v128
    %181 = vmatpush1.msra.mxu0 %v127
    %182 = vmatprep.subr.mxu0 0.0
    %183 = vmatpush2.msra.mxu0 0.0
    %184 = vmatprep.subr.mxu0 0.0
    %185 = vmatpush2.msra.mxu0 0.0
    %186 = vmatprep.subr.mxu0 0.0
    %187 = vmatpush2.msra.mxu0 0.0
    %188 = vmatprep.subr.mxu0 0.0
    %189 = vmatpush2.msra.mxu0 0.0
    %190 = vmatprep.subr.mxu0 0.0
    %191 = vmatpush2.msra.mxu0 0.0
    %192 = vmatprep.subr.mxu0 0.0
    %193 = vmatpush2.msra.mxu0 0.0
    %194 = vmatprep.subr.mxu0 0.0
    %195 = vmatpush2.msra.mxu0 0.0
    %196 = vmatprep.subr.mxu0 0.0
    %197 = vmatpush2.msra.mxu0 0.0
    %198 = vmatprep.subr.mxu0 0.0
    %199 = vmatpush2.msra.mxu0 0.0
    %200 = vmatprep.subr.mxu0 0.0
    %201 = vmatpush2.msra.mxu0 0.0
    %202 = vmatprep.subr.mxu0 0.0
    %203 = vmatpush2.msra.mxu0 0.0
    %204 = vmatprep.subr.mxu0 0.0
    %205 = vmatpush2.msra.mxu0 0.0
    %206 = vmatprep.subr.mxu0 0.0
    %207 = vmatpush2.msra.mxu0 0.0
    %208 = vmatprep.subr.mxu0 0.0
    %209 = vmatpush2.msra.mxu0 0.0
    %210 = vmatprep.subr.mxu0 0.0
    %211 = vmatpush2.msra.mxu0 0.0
    %212 = vmatprep.subr.mxu0 0.0
    %213 = vmatpush2.msra.mxu0 0.0
    %214 = vmatprep.mubr.f32.mxu0 0.0
    %215 = vmatmul.mubr.f32.gmra.mxu0 %v145
    %v216 = vpop.f32.mrf.mxu0
    %v217 = vadd.f32 %v136, %v216
    %v218 = vpop.f32.mrf.mxu0
    %v219 = vadd.f32 %v140, %v218
    %220 = vmatprep.mubr.f32.mxu0 0.0
    %221 = vmatmul.mubr.f32.gmra.mxu0 %v148
    %v222 = vpop.f32.mrf.mxu0
    %v223 = vadd.f32 %v136, %v222
    %v224 = vpop.f32.mrf.mxu0
    %v225 = vadd.f32 %v140, %v224
    %226 = vdwg.mxu0
    %227 = vst [vmem:[#allocation2] sm:$0xff] %v217
    %228 = vst [vmem:[#allocation2 + $0x8] sm:$0xff] %v219
    %229 = vst [vmem:[#allocation2 + $0x10] sm:$0xff] %v223
    %230 = vst [vmem:[#allocation2 + $0x18] sm:$0xff] %v225
    %v231 = vld [vmem:[#allocation4] sm:$0xff]
    %v232 = vld [vmem:[#allocation4 + $0x8] sm:$0xff]
    %v233 = vld [vmem:[#allocation4 + $0x10] sm:$0xff]
    %v234 = vld [vmem:[#allocation4 + $0x18] sm:$0xff]
    %v235 = vld [vmem:[#allocation6] sm:$0xff]
    %v236 = vld [vmem:[#allocation6 + $0x8] sm:$0xff]
    %v237 = vld [vmem:[#allocation6 + $0x10] sm:$0xff]
    %v238 = vld [vmem:[#allocation6 + $0x18] sm:$0xff]
    %v239 = vld [vmem:[#allocation2] sm:$0x3]
    %vm240 = vcmask 261120
    %v242 = vsel %vm240, 0.0, 0
    %244 = vmatprep.subr.mxu0 0.0
    %245 = vmatpush1.msra.mxu0 0.0
    %246 = vmatprep.subr.mxu0 0.0
    %247 = vmatpush1.msra.mxu0 0.0
    %248 = vmatprep.subr.mxu0 0.0
    %249 = vmatpush1.msra.mxu0 0.0
    %250 = vmatprep.subr.mxu0 0.0
    %251 = vmatpush1.msra.mxu0 0.0
    %252 = vmatprep.subr.mxu0 0.0
    %253 = vmatpush1.msra.mxu0 0.0
    %254 = vmatprep.subr.mxu0 0.0
    %255 = vmatpush1.msra.mxu0 0.0
    %256 = vmatprep.subr.mxu0 0.0
    %257 = vmatpush1.msra.mxu0 0.0
    %258 = vmatprep.subr.mxu0 0.0
    %259 = vmatpush1.msra.mxu0 0.0
    %260 = vmatprep.subr.mxu0 0.0
    %261 = vmatpush1.msra.mxu0 0.0
    %262 = vmatprep.subr.mxu0 0.0
    %263 = vmatpush1.msra.mxu0 0.0
    %264 = vmatprep.subr.mxu0 0.0
    %265 = vmatpush1.msra.mxu0 0.0
    %266 = vmatprep.subr.mxu0 0.0
    %267 = vmatpush1.msra.mxu0 0.0
    %268 = vmatprep.subr.mxu0 0.0
    %269 = vmatpush1.msra.mxu0 %v234
    %270 = vmatprep.subr.mxu0 0.0
    %271 = vmatpush1.msra.mxu0 %v233
    %272 = vmatprep.subr.mxu0 0.0
    %273 = vmatpush1.msra.mxu0 %v232
    %274 = vmatprep.subr.mxu0 0.0
    %275 = vmatpush1.msra.mxu0 %v231
    %276 = vmatprep.subr.mxu0 0.0
    %277 = vmatpush2.msra.mxu0 0.0
    %278 = vmatprep.subr.mxu0 0.0
    %279 = vmatpush2.msra.mxu0 0.0
    %280 = vmatprep.subr.mxu0 0.0
    %281 = vmatpush2.msra.mxu0 0.0
    %282 = vmatprep.subr.mxu0 0.0
    %283 = vmatpush2.msra.mxu0 0.0
    %284 = vmatprep.subr.mxu0 0.0
    %285 = vmatpush2.msra.mxu0 0.0
    %286 = vmatprep.subr.mxu0 0.0
    %287 = vmatpush2.msra.mxu0 0.0
    %288 = vmatprep.subr.mxu0 0.0
    %289 = vmatpush2.msra.mxu0 0.0
    %290 = vmatprep.subr.mxu0 0.0
    %291 = vmatpush2.msra.mxu0 0.0
    %292 = vmatprep.subr.mxu0 0.0
    %293 = vmatpush2.msra.mxu0 0.0
    %294 = vmatprep.subr.mxu0 0.0
    %295 = vmatpush2.msra.mxu0 0.0
    %296 = vmatprep.subr.mxu0 0.0
    %297 = vmatpush2.msra.mxu0 0.0
    %298 = vmatprep.subr.mxu0 0.0
    %299 = vmatpush2.msra.mxu0 0.0
    %300 = vmatprep.subr.mxu0 0.0
    %301 = vmatpush2.msra.mxu0 0.0
    %302 = vmatprep.subr.mxu0 0.0
    %303 = vmatpush2.msra.mxu0 0.0
    %304 = vmatprep.subr.mxu0 0.0
    %305 = vmatpush2.msra.mxu0 0.0
    %306 = vmatprep.subr.mxu0 0.0
    %307 = vmatpush2.msra.mxu0 0.0
    %308 = vmatprep.mubr.f32.mxu0 0.0
    %309 = vmatmul.mubr.f32.gmra.mxu0 %v242
    %v310 = vpop.f32.mrf.mxu0
    %v311 = vadd.f32 0.0, %v310
    %v312 = vpop.f32.mrf.mxu0
    %313 = vdwg.mxu0
    %v314 = vadd.f32 %v239, %v311
    %v315 = vld [vmem:[#allocation2 + $0x18] sm:$0xc0]
    %316 = vmatprep.subr.mxu0 0.0
    %317 = vmatpush1.msra.mxu0 0.0
    %318 = vmatprep.subr.mxu0 0.0
    %319 = vmatpush1.msra.mxu0 0.0
    %320 = vmatprep.subr.mxu0 0.0
    %321 = vmatpush1.msra.mxu0 0.0
    %322 = vmatprep.subr.mxu0 0.0
    %323 = vmatpush1.msra.mxu0 0.0
    %324 = vmatprep.subr.mxu0 0.0
    %325 = vmatpush1.msra.mxu0 0.0
    %326 = vmatprep.subr.mxu0 0.0
    %327 = vmatpush1.msra.mxu0 0.0
    %328 = vmatprep.subr.mxu0 0.0
    %329 = vmatpush1.msra.mxu0 0.0
    %330 = vmatprep.subr.mxu0 0.0
    %331 = vmatpush1.msra.mxu0 0.0
    %332 = vmatprep.subr.mxu0 0.0
    %333 = vmatpush1.msra.mxu0 0.0
    %334 = vmatprep.subr.mxu0 0.0
    %335 = vmatpush1.msra.mxu0 0.0
    %336 = vmatprep.subr.mxu0 0.0
    %337 = vmatpush1.msra.mxu0 0.0
    %338 = vmatprep.subr.mxu0 0.0
    %339 = vmatpush1.msra.mxu0 0.0
    %340 = vmatprep.subr.mxu0 0.0
    %341 = vmatpush1.msra.mxu0 %v238
    %342 = vmatprep.subr.mxu0 0.0
    %343 = vmatpush1.msra.mxu0 %v237
    %344 = vmatprep.subr.mxu0 0.0
    %345 = vmatpush1.msra.mxu0 %v236
    %346 = vmatprep.subr.mxu0 0.0
    %347 = vmatpush1.msra.mxu0 %v235
    %348 = vmatprep.subr.mxu0 0.0
    %349 = vmatpush2.msra.mxu0 0.0
    %350 = vmatprep.subr.mxu0 0.0
    %351 = vmatpush2.msra.mxu0 0.0
    %352 = vmatprep.subr.mxu0 0.0
    %353 = vmatpush2.msra.mxu0 0.0
    %354 = vmatprep.subr.mxu0 0.0
    %355 = vmatpush2.msra.mxu0 0.0
    %356 = vmatprep.subr.mxu0 0.0
    %357 = vmatpush2.msra.mxu0 0.0
    %358 = vmatprep.subr.mxu0 0.0
    %359 = vmatpush2.msra.mxu0 0.0
    %360 = vmatprep.subr.mxu0 0.0
    %361 = vmatpush2.msra.mxu0 0.0
    %362 = vmatprep.subr.mxu0 0.0
    %363 = vmatpush2.msra.mxu0 0.0
    %364 = vmatprep.subr.mxu0 0.0
    %365 = vmatpush2.msra.mxu0 0.0
    %366 = vmatprep.subr.mxu0 0.0
    %367 = vmatpush2.msra.mxu0 0.0
    %368 = vmatprep.subr.mxu0 0.0
    %369 = vmatpush2.msra.mxu0 0.0
    %370 = vmatprep.subr.mxu0 0.0
    %371 = vmatpush2.msra.mxu0 0.0
    %372 = vmatprep.subr.mxu0 0.0
    %373 = vmatpush2.msra.mxu0 0.0
    %374 = vmatprep.subr.mxu0 0.0
    %375 = vmatpush2.msra.mxu0 0.0
    %376 = vmatprep.subr.mxu0 0.0
    %377 = vmatpush2.msra.mxu0 0.0
    %378 = vmatprep.subr.mxu0 0.0
    %379 = vmatpush2.msra.mxu0 0.0
    %380 = vmatprep.mubr.f32.mxu0 0.0
    %381 = vmatmul.mubr.f32.gmra.mxu0 %v242
    %v382 = vpop.f32.mrf.mxu0
    %v383 = vadd.f32 0.0, %v382
    %v384 = vpop.f32.mrf.mxu0
    %385 = vdwg.mxu0
    %v387 = vrot.slane %v383, 2
    %v389 = vadd.f32 %v315, %v387
    %v390 = vtanh.pop %v314
    %v391 = vxor.u32 %v314, 2147483648
    %v392 = vmul.f32 %v391, 1.442695
    %v393 = vpow.pop %v392
    %v394 = vadd.f32 %v393, 1.0
    %v395 = vrcp.pop %v394
    %v396 = vmul.f32 1.0, %v395
    %v397 = vsel %vm124, %v390, %v396
    %v398 = vtanh.pop %v389
    %v399 = vxor.u32 %v389, 2147483648
    %v400 = vmul.f32 %v399, 1.442695
    %v401 = vpow.pop %v400
    %v402 = vadd.f32 %v401, 1.0
    %v403 = vrcp.pop %v402
    %v404 = vmul.f32 1.0, %v403
    %v405 = vsel %vm124, %v398, %v404
    %v406 = vmul.f32 %v397, 0.0
    %408 = vrot.lane.b32.xlu0 %v397, 64
    %v409 = vpop.permute.xlu0 %408
    %v411 = vmul.f32 %v397, %v409
    %413 = vrot.lane.b32.xlu0 %v411, 32
    %v414 = vpop.permute.xlu0 %413
    %v416 = vadd.f32 %v406, %v414
    %v417 = vmul.f32 %v405, 0.0
    %419 = vrot.lane.b32.xlu0 %v405, 64
    %v420 = vpop.permute.xlu0 %419
    %v422 = vmul.f32 %v405, %v420
    %424 = vrot.lane.b32.xlu0 %v422, 32
    %v425 = vpop.permute.xlu0 %424
    %v427 = vadd.f32 %v417, %v425
    %v428 = vtanh.pop %v416
    %430 = vrot.lane.b32.xlu0 %v428, 64
    %v431 = vpop.permute.xlu0 %430
    %v433 = vmul.f32 %v397, %v431
    %v434 = vtanh.pop %v427
    %436 = vrot.lane.b32.xlu0 %v434, 64
    %v437 = vpop.permute.xlu0 %436
    %v439 = vmul.f32 %v405, %v437
    %441 = vrot.lane.b32.xlu0 %v433, 32
    %v442 = vpop.permute.xlu0 %441
    %vm444 = vcmask 254976
    %445 = vst.msk [vmem:[#allocation3] sm:$0x3] %vm444, %v442
    %447 = vrot.lane.b32.xlu0 %v439, 64
    %v448 = vpop.permute.xlu0 %447
    %vm450 = vcmask 523526
    %451 = vst.msk [vmem:[#allocation3 + $0x8] sm:$0xc0] %vm450, %v448
    %v452 = vld [vmem:[#allocation2] sm:$0xc]
    %v453 = vsel %vm240, %v442, 0
    %455 = vmatprep.subr.mxu0 0.0
    %456 = vmatpush1.msra.mxu0 0.0
    %457 = vmatprep.subr.mxu0 0.0
    %458 = vmatpush1.msra.mxu0 0.0
    %459 = vmatprep.subr.mxu0 0.0
    %460 = vmatpush1.msra.mxu0 0.0
    %461 = vmatprep.subr.mxu0 0.0
    %462 = vmatpush1.msra.mxu0 0.0
    %463 = vmatprep.subr.mxu0 0.0
    %464 = vmatpush1.msra.mxu0 0.0
    %465 = vmatprep.subr.mxu0 0.0
    %466 = vmatpush1.msra.mxu0 0.0
    %467 = vmatprep.subr.mxu0 0.0
    %468 = vmatpush1.msra.mxu0 0.0
    %469 = vmatprep.subr.mxu0 0.0
    %470 = vmatpush1.msra.mxu0 0.0
    %471 = vmatprep.subr.mxu0 0.0
    %472 = vmatpush1.msra.mxu0 0.0
    %473 = vmatprep.subr.mxu0 0.0
    %474 = vmatpush1.msra.mxu0 0.0
    %475 = vmatprep.subr.mxu0 0.0
    %476 = vmatpush1.msra.mxu0 0.0
    %477 = vmatprep.subr.mxu0 0.0
    %478 = vmatpush1.msra.mxu0 0.0
    %479 = vmatprep.subr.mxu0 0.0
    %480 = vmatpush1.msra.mxu0 %v234
    %481 = vmatprep.subr.mxu0 0.0
    %482 = vmatpush1.msra.mxu0 %v233
    %483 = vmatprep.subr.mxu0 0.0
    %484 = vmatpush1.msra.mxu0 %v232
    %485 = vmatprep.subr.mxu0 0.0
    %486 = vmatpush1.msra.mxu0 %v231
    %487 = vmatprep.subr.mxu0 0.0
    %488 = vmatpush2.msra.mxu0 0.0
    %489 = vmatprep.subr.mxu0 0.0
    %490 = vmatpush2.msra.mxu0 0.0
    %491 = vmatprep.subr.mxu0 0.0
    %492 = vmatpush2.msra.mxu0 0.0
    %493 = vmatprep.subr.mxu0 0.0
    %494 = vmatpush2.msra.mxu0 0.0
    %495 = vmatprep.subr.mxu0 0.0
    %496 = vmatpush2.msra.mxu0 0.0
    %497 = vmatprep.subr.mxu0 0.0
    %498 = vmatpush2.msra.mxu0 0.0
    %499 = vmatprep.subr.mxu0 0.0
    %500 = vmatpush2.msra.mxu0 0.0
    %501 = vmatprep.subr.mxu0 0.0
    %502 = vmatpush2.msra.mxu0 0.0
    %503 = vmatprep.subr.mxu0 0.0
    %504 = vmatpush2.msra.mxu0 0.0
    %505 = vmatprep.subr.mxu0 0.0
    %506 = vmatpush2.msra.mxu0 0.0
    %507 = vmatprep.subr.mxu0 0.0
    %508 = vmatpush2.msra.mxu0 0.0
    %509 = vmatprep.subr.mxu0 0.0
    %510 = vmatpush2.msra.mxu0 0.0
    %511 = vmatprep.subr.mxu0 0.0
    %512 = vmatpush2.msra.mxu0 0.0
    %513 = vmatprep.subr.mxu0 0.0
    %514 = vmatpush2.msra.mxu0 0.0
    %515 = vmatprep.subr.mxu0 0.0
    %516 = vmatpush2.msra.mxu0 0.0
    %517 = vmatprep.subr.mxu0 0.0
    %518 = vmatpush2.msra.mxu0 0.0
    %519 = vmatprep.mubr.f32.mxu0 0.0
    %520 = vmatmul.mubr.f32.gmra.mxu0 %v453
    %v521 = vpop.f32.mrf.mxu0
    %v522 = vadd.f32 0.0, %v521
    %v523 = vpop.f32.mrf.mxu0
    %524 = vdwg.mxu0
    %v526 = vrot.slane %v522, 6
    %v528 = vadd.f32 %v452, %v526
    %v529 = vld [vmem:[#allocation2 + $0x18] sm:$0x30]
    %v530 = vrot.slane %v439, 6
    %531 = vrot.lane.b32.xlu0 %v530, 32
    %v532 = vpop.permute.xlu0 %531
    %v533 = vsel %vm240, %v532, 0
    %535 = vmatprep.subr.mxu0 0.0
    %536 = vmatpush1.msra.mxu0 0.0
    %537 = vmatprep.subr.mxu0 0.0
    %538 = vmatpush1.msra.mxu0 0.0
    %539 = vmatprep.subr.mxu0 0.0
    %540 = vmatpush1.msra.mxu0 0.0
    %541 = vmatprep.subr.mxu0 0.0
    %542 = vmatpush1.msra.mxu0 0.0
    %543 = vmatprep.subr.mxu0 0.0
    %544 = vmatpush1.msra.mxu0 0.0
    %545 = vmatprep.subr.mxu0 0.0
    %546 = vmatpush1.msra.mxu0 0.0
    %547 = vmatprep.subr.mxu0 0.0
    %548 = vmatpush1.msra.mxu0 0.0
    %549 = vmatprep.subr.mxu0 0.0
    %550 = vmatpush1.msra.mxu0 0.0
    %551 = vmatprep.subr.mxu0 0.0
    %552 = vmatpush1.msra.mxu0 0.0
    %553 = vmatprep.subr.mxu0 0.0
    %554 = vmatpush1.msra.mxu0 0.0
    %555 = vmatprep.subr.mxu0 0.0
    %556 = vmatpush1.msra.mxu0 0.0
    %557 = vmatprep.subr.mxu0 0.0
    %558 = vmatpush1.msra.mxu0 0.0
    %559 = vmatprep.subr.mxu0 0.0
    %560 = vmatpush1.msra.mxu0 %v238
    %561 = vmatprep.subr.mxu0 0.0
    %562 = vmatpush1.msra.mxu0 %v237
    %563 = vmatprep.subr.mxu0 0.0
    %564 = vmatpush1.msra.mxu0 %v236
    %565 = vmatprep.subr.mxu0 0.0
    %566 = vmatpush1.msra.mxu0 %v235
    %567 = vmatprep.subr.mxu0 0.0
    %568 = vmatpush2.msra.mxu0 0.0
    %569 = vmatprep.subr.mxu0 0.0
    %570 = vmatpush2.msra.mxu0 0.0
    %571 = vmatprep.subr.mxu0 0.0
    %572 = vmatpush2.msra.mxu0 0.0
    %573 = vmatprep.subr.mxu0 0.0
    %574 = vmatpush2.msra.mxu0 0.0
    %575 = vmatprep.subr.mxu0 0.0
    %576 = vmatpush2.msra.mxu0 0.0
    %577 = vmatprep.subr.mxu0 0.0
    %578 = vmatpush2.msra.mxu0 0.0
    %579 = vmatprep.subr.mxu0 0.0
    %580 = vmatpush2.msra.mxu0 0.0
    %581 = vmatprep.subr.mxu0 0.0
    %582 = vmatpush2.msra.mxu0 0.0
    %583 = vmatprep.subr.mxu0 0.0
    %584 = vmatpush2.msra.mxu0 0.0
    %585 = vmatprep.subr.mxu0 0.0
    %586 = vmatpush2.msra.mxu0 0.0
    %587 = vmatprep.subr.mxu0 0.0
    %588 = vmatpush2.msra.mxu0 0.0
    %589 = vmatprep.subr.mxu0 0.0
    %590 = vmatpush2.msra.mxu0 0.0
    %591 = vmatprep.subr.mxu0 0.0
    %592 = vmatpush2.msra.mxu0 0.0
    %593 = vmatprep.subr.mxu0 0.0
    %594 = vmatpush2.msra.mxu0 0.0
    %595 = vmatprep.subr.mxu0 0.0
    %596 = vmatpush2.msra.mxu0 0.0
    %597 = vmatprep.subr.mxu0 0.0
    %598 = vmatpush2.msra.mxu0 0.0
    %599 = vmatprep.mubr.f32.mxu0 0.0
    %600 = vmatmul.mubr.f32.gmra.mxu0 %v533
    %v601 = vpop.f32.mrf.mxu0
    %v602 = vadd.f32 0.0, %v601
    %v603 = vpop.f32.mrf.mxu0
    %604 = vdwg.mxu0
    %v606 = vrot.slane %v602, 4
    %v608 = vadd.f32 %v529, %v606
    %v609 = vtanh.pop %v528
    %v610 = vxor.u32 %v528, 2147483648
    %v611 = vmul.f32 %v610, 1.442695
    %v612 = vpow.pop %v611
    %v613 = vadd.f32 %v612, 1.0
    %v614 = vrcp.pop %v613
    %v615 = vmul.f32 1.0, %v614
    %v616 = vsel %vm124, %v609, %v615
    %v617 = vtanh.pop %v608
    %v618 = vxor.u32 %v608, 2147483648
    %v619 = vmul.f32 %v618, 1.442695
    %v620 = vpow.pop %v619
    %v621 = vadd.f32 %v620, 1.0
    %v622 = vrcp.pop %v621
    %v623 = vmul.f32 1.0, %v622
    %v624 = vsel %vm124, %v617, %v623
    %v626 = vrot.slane %v416, 6
    %v628 = vmul.f32 %v616, %v626
    %630 = vrot.lane.b32.xlu0 %v616, 64
    %v631 = vpop.permute.xlu0 %630
    %v633 = vmul.f32 %v616, %v631
    %635 = vrot.lane.b32.xlu0 %v633, 32
    %v636 = vpop.permute.xlu0 %635
    %v638 = vadd.f32 %v628, %v636
    %v640 = vrot.slane %v427, 2
    %v642 = vmul.f32 %v624, %v640
    %644 = vrot.lane.b32.xlu0 %v624, 64
    %v645 = vpop.permute.xlu0 %644
    %v647 = vmul.f32 %v624, %v645
    %649 = vrot.lane.b32.xlu0 %v647, 32
    %v650 = vpop.permute.xlu0 %649
    %v652 = vadd.f32 %v642, %v650
    %v653 = vtanh.pop %v638
    %655 = vrot.lane.b32.xlu0 %v653, 64
    %v656 = vpop.permute.xlu0 %655
    %v658 = vmul.f32 %v616, %v656
    %v659 = vtanh.pop %v652
    %661 = vrot.lane.b32.xlu0 %v659, 64
    %v662 = vpop.permute.xlu0 %661
    %v664 = vmul.f32 %v624, %v662
    %666 = vrot.lane.b32.xlu0 %v658, 32
    %v667 = vpop.permute.xlu0 %666
    %vm669 = vcmask 257026
    %670 = vst.msk [vmem:[#allocation3] sm:$0xc] %vm669, %v667
    %672 = vrot.lane.b32.xlu0 %v664, 64
    %v673 = vpop.permute.xlu0 %672
    %vm675 = vcmask 521476
    %676 = vst.msk [vmem:[#allocation3 + $0x8] sm:$0x30] %vm675, %v673
    %v677 = vld [vmem:[#allocation2] sm:$0x30]
    %v678 = vrot.slane %v658, 2
    %679 = vrot.lane.b32.xlu0 %v678, 32
    %v680 = vpop.permute.xlu0 %679
    %v681 = vsel %vm240, %v680, 0
    %683 = vmatprep.subr.mxu0 0.0
    %684 = vmatpush1.msra.mxu0 0.0
    %685 = vmatprep.subr.mxu0 0.0
    %686 = vmatpush1.msra.mxu0 0.0
    %687 = vmatprep.subr.mxu0 0.0
    %688 = vmatpush1.msra.mxu0 0.0
    %689 = vmatprep.subr.mxu0 0.0
    %690 = vmatpush1.msra.mxu0 0.0
    %691 = vmatprep.subr.mxu0 0.0
    %692 = vmatpush1.msra.mxu0 0.0
    %693 = vmatprep.subr.mxu0 0.0
    %694 = vmatpush1.msra.mxu0 0.0
    %695 = vmatprep.subr.mxu0 0.0
    %696 = vmatpush1.msra.mxu0 0.0
    %697 = vmatprep.subr.mxu0 0.0
    %698 = vmatpush1.msra.mxu0 0.0
    %699 = vmatprep.subr.mxu0 0.0
    %700 = vmatpush1.msra.mxu0 0.0
    %701 = vmatprep.subr.mxu0 0.0
    %702 = vmatpush1.msra.mxu0 0.0
    %703 = vmatprep.subr.mxu0 0.0
    %704 = vmatpush1.msra.mxu0 0.0
    %705 = vmatprep.subr.mxu0 0.0
    %706 = vmatpush1.msra.mxu0 0.0
    %707 = vmatprep.subr.mxu0 0.0
    %708 = vmatpush1.msra.mxu0 %v234
    %709 = vmatprep.subr.mxu0 0.0
    %710 = vmatpush1.msra.mxu0 %v233
    %711 = vmatprep.subr.mxu0 0.0
    %712 = vmatpush1.msra.mxu0 %v232
    %713 = vmatprep.subr.mxu0 0.0
    %714 = vmatpush1.msra.mxu0 %v231
    %715 = vmatprep.subr.mxu0 0.0
    %716 = vmatpush2.msra.mxu0 0.0
    %717 = vmatprep.subr.mxu0 0.0
    %718 = vmatpush2.msra.mxu0 0.0
    %719 = vmatprep.subr.mxu0 0.0
    %720 = vmatpush2.msra.mxu0 0.0
    %721 = vmatprep.subr.mxu0 0.0
    %722 = vmatpush2.msra.mxu0 0.0
    %723 = vmatprep.subr.mxu0 0.0
    %724 = vmatpush2.msra.mxu0 0.0
    %725 = vmatprep.subr.mxu0 0.0
    %726 = vmatpush2.msra.mxu0 0.0
    %727 = vmatprep.subr.mxu0 0.0
    %728 = vmatpush2.msra.mxu0 0.0
    %729 = vmatprep.subr.mxu0 0.0
    %730 = vmatpush2.msra.mxu0 0.0
    %731 = vmatprep.subr.mxu0 0.0
    %732 = vmatpush2.msra.mxu0 0.0
    %733 = vmatprep.subr.mxu0 0.0
    %734 = vmatpush2.msra.mxu0 0.0
    %735 = vmatprep.subr.mxu0 0.0
    %736 = vmatpush2.msra.mxu0 0.0
    %737 = vmatprep.subr.mxu0 0.0
    %738 = vmatpush2.msra.mxu0 0.0
    %739 = vmatprep.subr.mxu0 0.0
    %740 = vmatpush2.msra.mxu0 0.0
    %741 = vmatprep.subr.mxu0 0.0
    %742 = vmatpush2.msra.mxu0 0.0
    %743 = vmatprep.subr.mxu0 0.0
    %744 = vmatpush2.msra.mxu0 0.0
    %745 = vmatprep.subr.mxu0 0.0
    %746 = vmatpush2.msra.mxu0 0.0
    %747 = vmatprep.mubr.f32.mxu0 0.0
    %748 = vmatmul.mubr.f32.gmra.mxu0 %v681
    %v749 = vpop.f32.mrf.mxu0
    %v750 = vadd.f32 0.0, %v749
    %v751 = vpop.f32.mrf.mxu0
    %752 = vdwg.mxu0
    %v754 = vrot.slane %v750, 4
    %v756 = vadd.f32 %v677, %v754
    %v757 = vld [vmem:[#allocation2 + $0x18] sm:$0xc]
    %v758 = vrot.slane %v664, 4
    %759 = vrot.lane.b32.xlu0 %v758, 32
    %v760 = vpop.permute.xlu0 %759
    %v761 = vsel %vm240, %v760, 0
    %763 = vmatprep.subr.mxu0 0.0
    %764 = vmatpush1.msra.mxu0 0.0
    %765 = vmatprep.subr.mxu0 0.0
    %766 = vmatpush1.msra.mxu0 0.0
    %767 = vmatprep.subr.mxu0 0.0
    %768 = vmatpush1.msra.mxu0 0.0
    %769 = vmatprep.subr.mxu0 0.0
    %770 = vmatpush1.msra.mxu0 0.0
    %771 = vmatprep.subr.mxu0 0.0
    %772 = vmatpush1.msra.mxu0 0.0
    %773 = vmatprep.subr.mxu0 0.0
    %774 = vmatpush1.msra.mxu0 0.0
    %775 = vmatprep.subr.mxu0 0.0
    %776 = vmatpush1.msra.mxu0 0.0
    %777 = vmatprep.subr.mxu0 0.0
    %778 = vmatpush1.msra.mxu0 0.0
    %779 = vmatprep.subr.mxu0 0.0
    %780 = vmatpush1.msra.mxu0 0.0
    %781 = vmatprep.subr.mxu0 0.0
    %782 = vmatpush1.msra.mxu0 0.0
    %783 = vmatprep.subr.mxu0 0.0
    %784 = vmatpush1.msra.mxu0 0.0
    %785 = vmatprep.subr.mxu0 0.0
    %786 = vmatpush1.msra.mxu0 0.0
    %787 = vmatprep.subr.mxu0 0.0
    %788 = vmatpush1.msra.mxu0 %v238
    %789 = vmatprep.subr.mxu0 0.0
    %790 = vmatpush1.msra.mxu0 %v237
    %791 = vmatprep.subr.mxu0 0.0
    %792 = vmatpush1.msra.mxu0 %v236
    %793 = vmatprep.subr.mxu0 0.0
    %794 = vmatpush1.msra.mxu0 %v235
    %795 = vmatprep.subr.mxu0 0.0
    %796 = vmatpush2.msra.mxu0 0.0
    %797 = vmatprep.subr.mxu0 0.0
    %798 = vmatpush2.msra.mxu0 0.0
    %799 = vmatprep.subr.mxu0 0.0
    %800 = vmatpush2.msra.mxu0 0.0
    %801 = vmatprep.subr.mxu0 0.0
    %802 = vmatpush2.msra.mxu0 0.0
    %803 = vmatprep.subr.mxu0 0.0
    %804 = vmatpush2.msra.mxu0 0.0
    %805 = vmatprep.subr.mxu0 0.0
    %806 = vmatpush2.msra.mxu0 0.0
    %807 = vmatprep.subr.mxu0 0.0
    %808 = vmatpush2.msra.mxu0 0.0
    %809 = vmatprep.subr.mxu0 0.0
    %810 = vmatpush2.msra.mxu0 0.0
    %811 = vmatprep.subr.mxu0 0.0
    %812 = vmatpush2.msra.mxu0 0.0
    %813 = vmatprep.subr.mxu0 0.0
    %814 = vmatpush2.msra.mxu0 0.0
    %815 = vmatprep.subr.mxu0 0.0
    %816 = vmatpush2.msra.mxu0 0.0
    %817 = vmatprep.subr.mxu0 0.0
    %818 = vmatpush2.msra.mxu0 0.0
    %819 = vmatprep.subr.mxu0 0.0
    %820 = vmatpush2.msra.mxu0 0.0
    %821 = vmatprep.subr.mxu0 0.0
    %822 = vmatpush2.msra.mxu0 0.0
    %823 = vmatprep.subr.mxu0 0.0
    %824 = vmatpush2.msra.mxu0 0.0
    %825 = vmatprep.subr.mxu0 0.0
    %826 = vmatpush2.msra.mxu0 0.0
    %827 = vmatprep.mubr.f32.mxu0 0.0
    %828 = vmatmul.mubr.f32.gmra.mxu0 %v761
    %v829 = vpop.f32.mrf.mxu0
    %v830 = vadd.f32 0.0, %v829
    %v831 = vpop.f32.mrf.mxu0
    %832 = vdwg.mxu0
    %v834 = vrot.slane %v830, 6
    %v836 = vadd.f32 %v757, %v834
    %v837 = vtanh.pop %v756
    %v838 = vxor.u32 %v756, 2147483648
    %v839 = vmul.f32 %v838, 1.442695
    %v840 = vpow.pop %v839
    %v841 = vadd.f32 %v840, 1.0
    %v842 = vrcp.pop %v841
    %v843 = vmul.f32 1.0, %v842
    %v844 = vsel %vm124, %v837, %v843
    %v845 = vtanh.pop %v836
    %v846 = vxor.u32 %v836, 2147483648
    %v847 = vmul.f32 %v846, 1.442695
    %v848 = vpow.pop %v847
    %v849 = vadd.f32 %v848, 1.0
    %v850 = vrcp.pop %v849
    %v851 = vmul.f32 1.0, %v850
    %v852 = vsel %vm124, %v845, %v851
    %v854 = vrot.slane %v638, 6
    %v856 = vmul.f32 %v844, %v854
    %858 = vrot.lane.b32.xlu0 %v844, 64
    %v859 = vpop.permute.xlu0 %858
    %v861 = vmul.f32 %v844, %v859
    %863 = vrot.lane.b32.xlu0 %v861, 32
    %v864 = vpop.permute.xlu0 %863
    %v866 = vadd.f32 %v856, %v864
    %v868 = vrot.slane %v652, 2
    %v870 = vmul.f32 %v852, %v868
    %872 = vrot.lane.b32.xlu0 %v852, 64
    %v873 = vpop.permute.xlu0 %872
    %v875 = vmul.f32 %v852, %v873
    %877 = vrot.lane.b32.xlu0 %v875, 32
    %v878 = vpop.permute.xlu0 %877
    %v880 = vadd.f32 %v870, %v878
    %v881 = vtanh.pop %v866
    %883 = vrot.lane.b32.xlu0 %v881, 64
    %v884 = vpop.permute.xlu0 %883
    %v886 = vmul.f32 %v844, %v884
    %v887 = vtanh.pop %v880
    %889 = vrot.lane.b32.xlu0 %v887, 64
    %v890 = vpop.permute.xlu0 %889
    %v892 = vmul.f32 %v852, %v890
    %894 = vrot.lane.b32.xlu0 %v886, 32
    %v895 = vpop.permute.xlu0 %894
    %vm897 = vcmask 259076
    %898 = vst.msk [vmem:[#allocation3] sm:$0x30] %vm897, %v895
    %900 = vrot.lane.b32.xlu0 %v892, 64
    %v901 = vpop.permute.xlu0 %900
    %vm903 = vcmask 519426
    %904 = vst.msk [vmem:[#allocation3 + $0x8] sm:$0xc] %vm903, %v901
    %v905 = vld [vmem:[#allocation2] sm:$0xc0]
    %v906 = vrot.slane %v886, 4
    %907 = vrot.lane.b32.xlu0 %v906, 32
    %v908 = vpop.permute.xlu0 %907
    %v909 = vsel %vm240, %v908, 0
    %911 = vmatprep.subr.mxu0 0.0
    %912 = vmatpush1.msra.mxu0 0.0
    %913 = vmatprep.subr.mxu0 0.0
    %914 = vmatpush1.msra.mxu0 0.0
    %915 = vmatprep.subr.mxu0 0.0
    %916 = vmatpush1.msra.mxu0 0.0
    %917 = vmatprep.subr.mxu0 0.0
    %918 = vmatpush1.msra.mxu0 0.0
    %919 = vmatprep.subr.mxu0 0.0
    %920 = vmatpush1.msra.mxu0 0.0
    %921 = vmatprep.subr.mxu0 0.0
    %922 = vmatpush1.msra.mxu0 0.0
    %923 = vmatprep.subr.mxu0 0.0
    %924 = vmatpush1.msra.mxu0 0.0
    %925 = vmatprep.subr.mxu0 0.0
    %926 = vmatpush1.msra.mxu0 0.0
    %927 = vmatprep.subr.mxu0 0.0
    %928 = vmatpush1.msra.mxu0 0.0
    %929 = vmatprep.subr.mxu0 0.0
    %930 = vmatpush1.msra.mxu0 0.0
    %931 = vmatprep.subr.mxu0 0.0
    %932 = vmatpush1.msra.mxu0 0.0
    %933 = vmatprep.subr.mxu0 0.0
    %934 = vmatpush1.msra.mxu0 0.0
    %935 = vmatprep.subr.mxu0 0.0
    %936 = vmatpush1.msra.mxu0 %v234
    %937 = vmatprep.subr.mxu0 0.0
    %938 = vmatpush1.msra.mxu0 %v233
    %939 = vmatprep.subr.mxu0 0.0
    %940 = vmatpush1.msra.mxu0 %v232
    %941 = vmatprep.subr.mxu0 0.0
    %942 = vmatpush1.msra.mxu0 %v231
    %943 = vmatprep.subr.mxu0 0.0
    %944 = vmatpush2.msra.mxu0 0.0
    %945 = vmatprep.subr.mxu0 0.0
    %946 = vmatpush2.msra.mxu0 0.0
    %947 = vmatprep.subr.mxu0 0.0
    %948 = vmatpush2.msra.mxu0 0.0
    %949 = vmatprep.subr.mxu0 0.0
    %950 = vmatpush2.msra.mxu0 0.0
    %951 = vmatprep.subr.mxu0 0.0
    %952 = vmatpush2.msra.mxu0 0.0
    %953 = vmatprep.subr.mxu0 0.0
    %954 = vmatpush2.msra.mxu0 0.0
    %955 = vmatprep.subr.mxu0 0.0
    %956 = vmatpush2.msra.mxu0 0.0
    %957 = vmatprep.subr.mxu0 0.0
    %958 = vmatpush2.msra.mxu0 0.0
    %959 = vmatprep.subr.mxu0 0.0
    %960 = vmatpush2.msra.mxu0 0.0
    %961 = vmatprep.subr.mxu0 0.0
    %962 = vmatpush2.msra.mxu0 0.0
    %963 = vmatprep.subr.mxu0 0.0
    %964 = vmatpush2.msra.mxu0 0.0
    %965 = vmatprep.subr.mxu0 0.0
    %966 = vmatpush2.msra.mxu0 0.0
    %967 = vmatprep.subr.mxu0 0.0
    %968 = vmatpush2.msra.mxu0 0.0
    %969 = vmatprep.subr.mxu0 0.0
    %970 = vmatpush2.msra.mxu0 0.0
    %971 = vmatprep.subr.mxu0 0.0
    %972 = vmatpush2.msra.mxu0 0.0
    %973 = vmatprep.subr.mxu0 0.0
    %974 = vmatpush2.msra.mxu0 0.0
    %975 = vmatprep.mubr.f32.mxu0 0.0
    %976 = vmatmul.mubr.f32.gmra.mxu0 %v909
    %v977 = vpop.f32.mrf.mxu0
    %v978 = vadd.f32 0.0, %v977
    %v979 = vpop.f32.mrf.mxu0
    %980 = vdwg.mxu0
    %v982 = vrot.slane %v978, 2
    %v984 = vadd.f32 %v905, %v982
    %v985 = vld [vmem:[#allocation2 + $0x18] sm:$0x3]
    %v986 = vrot.slane %v892, 2
    %987 = vrot.lane.b32.xlu0 %v986, 32
    %v988 = vpop.permute.xlu0 %987
    %v989 = vsel %vm240, %v988, 0
    %991 = vmatprep.subr.mxu0 0.0
    %992 = vmatpush1.msra.mxu0 0.0
    %993 = vmatprep.subr.mxu0 0.0
    %994 = vmatpush1.msra.mxu0 0.0
    %995 = vmatprep.subr.mxu0 0.0
    %996 = vmatpush1.msra.mxu0 0.0
    %997 = vmatprep.subr.mxu0 0.0
    %998 = vmatpush1.msra.mxu0 0.0
    %999 = vmatprep.subr.mxu0 0.0
    %1000 = vmatpush1.msra.mxu0 0.0
    %1001 = vmatprep.subr.mxu0 0.0
    %1002 = vmatpush1.msra.mxu0 0.0
    %1003 = vmatprep.subr.mxu0 0.0
    %1004 = vmatpush1.msra.mxu0 0.0
    %1005 = vmatprep.subr.mxu0 0.0
    %1006 = vmatpush1.msra.mxu0 0.0
    %1007 = vmatprep.subr.mxu0 0.0
    %1008 = vmatpush1.msra.mxu0 0.0
    %1009 = vmatprep.subr.mxu0 0.0
    %1010 = vmatpush1.msra.mxu0 0.0
    %1011 = vmatprep.subr.mxu0 0.0
    %1012 = vmatpush1.msra.mxu0 0.0
    %1013 = vmatprep.subr.mxu0 0.0
    %1014 = vmatpush1.msra.mxu0 0.0
    %1015 = vmatprep.subr.mxu0 0.0
    %1016 = vmatpush1.msra.mxu0 %v238
    %1017 = vmatprep.subr.mxu0 0.0
    %1018 = vmatpush1.msra.mxu0 %v237
    %1019 = vmatprep.subr.mxu0 0.0
    %1020 = vmatpush1.msra.mxu0 %v236
    %1021 = vmatprep.subr.mxu0 0.0
    %1022 = vmatpush1.msra.mxu0 %v235
    %1023 = vmatprep.subr.mxu0 0.0
    %1024 = vmatpush2.msra.mxu0 0.0
    %1025 = vmatprep.subr.mxu0 0.0
    %1026 = vmatpush2.msra.mxu0 0.0
    %1027 = vmatprep.subr.mxu0 0.0
    %1028 = vmatpush2.msra.mxu0 0.0
    %1029 = vmatprep.subr.mxu0 0.0
    %1030 = vmatpush2.msra.mxu0 0.0
    %1031 = vmatprep.subr.mxu0 0.0
    %1032 = vmatpush2.msra.mxu0 0.0
    %1033 = vmatprep.subr.mxu0 0.0
    %1034 = vmatpush2.msra.mxu0 0.0
    %1035 = vmatprep.subr.mxu0 0.0
    %1036 = vmatpush2.msra.mxu0 0.0
    %1037 = vmatprep.subr.mxu0 0.0
    %1038 = vmatpush2.msra.mxu0 0.0
    %1039 = vmatprep.subr.mxu0 0.0
    %1040 = vmatpush2.msra.mxu0 0.0
    %1041 = vmatprep.subr.mxu0 0.0
    %1042 = vmatpush2.msra.mxu0 0.0
    %1043 = vmatprep.subr.mxu0 0.0
    %1044 = vmatpush2.msra.mxu0 0.0
    %1045 = vmatprep.subr.mxu0 0.0
    %1046 = vmatpush2.msra.mxu0 0.0
    %1047 = vmatprep.subr.mxu0 0.0
    %1048 = vmatpush2.msra.mxu0 0.0
    %1049 = vmatprep.subr.mxu0 0.0
    %1050 = vmatpush2.msra.mxu0 0.0
    %1051 = vmatprep.subr.mxu0 0.0
    %1052 = vmatpush2.msra.mxu0 0.0
    %1053 = vmatprep.subr.mxu0 0.0
    %1054 = vmatpush2.msra.mxu0 0.0
    %1055 = vmatprep.mubr.f32.mxu0 0.0
    %1056 = vmatmul.mubr.f32.gmra.mxu0 %v989
    %v1057 = vpop.f32.mrf.mxu0
    %v1058 = vadd.f32 0.0, %v1057
    %v1059 = vpop.f32.mrf.mxu0
    %1060 = vdwg.mxu0
    %v1061 = vadd.f32 %v985, %v1058
    %v1062 = vtanh.pop %v984
    %v1063 = vxor.u32 %v984, 2147483648
    %v1064 = vmul.f32 %v1063, 1.442695
    %v1065 = vpow.pop %v1064
    %v1066 = vadd.f32 %v1065, 1.0
    %v1067 = vrcp.pop %v1066
    %v1068 = vmul.f32 1.0, %v1067
    %v1069 = vsel %vm124, %v1062, %v1068
    %v1070 = vtanh.pop %v1061
    %v1071 = vxor.u32 %v1061, 2147483648
    %v1072 = vmul.f32 %v1071, 1.442695
    %v1073 = vpow.pop %v1072
    %v1074 = vadd.f32 %v1073, 1.0
    %v1075 = vrcp.pop %v1074
    %v1076 = vmul.f32 1.0, %v1075
    %v1077 = vsel %vm124, %v1070, %v1076
    %v1079 = vrot.slane %v866, 6
    %v1081 = vmul.f32 %v1069, %v1079
    %1083 = vrot.lane.b32.xlu0 %v1069, 64
    %v1084 = vpop.permute.xlu0 %1083
    %v1086 = vmul.f32 %v1069, %v1084
    %1088 = vrot.lane.b32.xlu0 %v1086, 32
    %v1089 = vpop.permute.xlu0 %1088
    %v1091 = vadd.f32 %v1081, %v1089
    %v1093 = vrot.slane %v880, 2
    %v1095 = vmul.f32 %v1077, %v1093
    %1097 = vrot.lane.b32.xlu0 %v1077, 64
    %v1098 = vpop.permute.xlu0 %1097
    %v1100 = vmul.f32 %v1077, %v1098
    %1102 = vrot.lane.b32.xlu0 %v1100, 32
    %v1103 = vpop.permute.xlu0 %1102
    %v1105 = vadd.f32 %v1095, %v1103
    %v1106 = vtanh.pop %v1091
    %1108 = vrot.lane.b32.xlu0 %v1106, 64
    %v1109 = vpop.permute.xlu0 %1108
    %v1111 = vmul.f32 %v1069, %v1109
    %v1112 = vtanh.pop %v1105
    %1114 = vrot.lane.b32.xlu0 %v1112, 64
    %v1115 = vpop.permute.xlu0 %1114
    %v1117 = vmul.f32 %v1077, %v1115
    %1119 = vrot.lane.b32.xlu0 %v1111, 32
    %v1120 = vpop.permute.xlu0 %1119
    %vm1122 = vcmask 261126
    %1123 = vst.msk [vmem:[#allocation3] sm:$0xc0] %vm1122, %v1120
    %1125 = vrot.lane.b32.xlu0 %v1117, 64
    %v1126 = vpop.permute.xlu0 %1125
    %vm1128 = vcmask 517376
    %1129 = vst.msk [vmem:[#allocation3 + $0x8] sm:$0x3] %vm1128, %v1126
    %v1130 = vld [vmem:[#allocation2 + $0x10] sm:$0x3]
    %v1131 = vrot.slane %v1111, 6
    %1132 = vrot.lane.b32.xlu0 %v1131, 32
    %v1133 = vpop.permute.xlu0 %1132
    %v1134 = vsel %vm240, %v1133, 0
    %1136 = vmatprep.subr.mxu0 0.0
    %1137 = vmatpush1.msra.mxu0 0.0
    %1138 = vmatprep.subr.mxu0 0.0
    %1139 = vmatpush1.msra.mxu0 0.0
    %1140 = vmatprep.subr.mxu0 0.0
    %1141 = vmatpush1.msra.mxu0 0.0
    %1142 = vmatprep.subr.mxu0 0.0
    %1143 = vmatpush1.msra.mxu0 0.0
    %1144 = vmatprep.subr.mxu0 0.0
    %1145 = vmatpush1.msra.mxu0 0.0
    %1146 = vmatprep.subr.mxu0 0.0
    %1147 = vmatpush1.msra.mxu0 0.0
    %1148 = vmatprep.subr.mxu0 0.0
    %1149 = vmatpush1.msra.mxu0 0.0
    %1150 = vmatprep.subr.mxu0 0.0
    %1151 = vmatpush1.msra.mxu0 0.0
    %1152 = vmatprep.subr.mxu0 0.0
    %1153 = vmatpush1.msra.mxu0 0.0
    %1154 = vmatprep.subr.mxu0 0.0
    %1155 = vmatpush1.msra.mxu0 0.0
    %1156 = vmatprep.subr.mxu0 0.0
    %1157 = vmatpush1.msra.mxu0 0.0
    %1158 = vmatprep.subr.mxu0 0.0
    %1159 = vmatpush1.msra.mxu0 0.0
    %1160 = vmatprep.subr.mxu0 0.0
    %1161 = vmatpush1.msra.mxu0 %v234
    %1162 = vmatprep.subr.mxu0 0.0
    %1163 = vmatpush1.msra.mxu0 %v233
    %1164 = vmatprep.subr.mxu0 0.0
    %1165 = vmatpush1.msra.mxu0 %v232
    %1166 = vmatprep.subr.mxu0 0.0
    %1167 = vmatpush1.msra.mxu0 %v231
    %1168 = vmatprep.subr.mxu0 0.0
    %1169 = vmatpush2.msra.mxu0 0.0
    %1170 = vmatprep.subr.mxu0 0.0
    %1171 = vmatpush2.msra.mxu0 0.0
    %1172 = vmatprep.subr.mxu0 0.0
    %1173 = vmatpush2.msra.mxu0 0.0
    %1174 = vmatprep.subr.mxu0 0.0
    %1175 = vmatpush2.msra.mxu0 0.0
    %1176 = vmatprep.subr.mxu0 0.0
    %1177 = vmatpush2.msra.mxu0 0.0
    %1178 = vmatprep.subr.mxu0 0.0
    %1179 = vmatpush2.msra.mxu0 0.0
    %1180 = vmatprep.subr.mxu0 0.0
    %1181 = vmatpush2.msra.mxu0 0.0
    %1182 = vmatprep.subr.mxu0 0.0
    %1183 = vmatpush2.msra.mxu0 0.0
    %1184 = vmatprep.subr.mxu0 0.0
    %1185 = vmatpush2.msra.mxu0 0.0
    %1186 = vmatprep.subr.mxu0 0.0
    %1187 = vmatpush2.msra.mxu0 0.0
    %1188 = vmatprep.subr.mxu0 0.0
    %1189 = vmatpush2.msra.mxu0 0.0
    %1190 = vmatprep.subr.mxu0 0.0
    %1191 = vmatpush2.msra.mxu0 0.0
    %1192 = vmatprep.subr.mxu0 0.0
    %1193 = vmatpush2.msra.mxu0 0.0
    %1194 = vmatprep.subr.mxu0 0.0
    %1195 = vmatpush2.msra.mxu0 0.0
    %1196 = vmatprep.subr.mxu0 0.0
    %1197 = vmatpush2.msra.mxu0 0.0
    %1198 = vmatprep.subr.mxu0 0.0
    %1199 = vmatpush2.msra.mxu0 0.0
    %1200 = vmatprep.mubr.f32.mxu0 0.0
    %1201 = vmatmul.mubr.f32.gmra.mxu0 %v1134
    %v1202 = vpop.f32.mrf.mxu0
    %v1203 = vadd.f32 0.0, %v1202
    %v1204 = vpop.f32.mrf.mxu0
    %1205 = vdwg.mxu0
    %v1206 = vadd.f32 %v1130, %v1203
    %v1207 = vld [vmem:[#allocation2 + $0x8] sm:$0xc0]
    %1208 = vrot.lane.b32.xlu0 %v1117, 32
    %v1209 = vpop.permute.xlu0 %1208
    %v1210 = vsel %vm240, %v1209, 0
    %1212 = vmatprep.subr.mxu0 0.0
    %1213 = vmatpush1.msra.mxu0 0.0
    %1214 = vmatprep.subr.mxu0 0.0
    %1215 = vmatpush1.msra.mxu0 0.0
    %1216 = vmatprep.subr.mxu0 0.0
    %1217 = vmatpush1.msra.mxu0 0.0
    %1218 = vmatprep.subr.mxu0 0.0
    %1219 = vmatpush1.msra.mxu0 0.0
    %1220 = vmatprep.subr.mxu0 0.0
    %1221 = vmatpush1.msra.mxu0 0.0
    %1222 = vmatprep.subr.mxu0 0.0
    %1223 = vmatpush1.msra.mxu0 0.0
    %1224 = vmatprep.subr.mxu0 0.0
    %1225 = vmatpush1.msra.mxu0 0.0
    %1226 = vmatprep.subr.mxu0 0.0
    %1227 = vmatpush1.msra.mxu0 0.0
    %1228 = vmatprep.subr.mxu0 0.0
    %1229 = vmatpush1.msra.mxu0 0.0
    %1230 = vmatprep.subr.mxu0 0.0
    %1231 = vmatpush1.msra.mxu0 0.0
    %1232 = vmatprep.subr.mxu0 0.0
    %1233 = vmatpush1.msra.mxu0 0.0
    %1234 = vmatprep.subr.mxu0 0.0
    %1235 = vmatpush1.msra.mxu0 0.0
    %1236 = vmatprep.subr.mxu0 0.0
    %1237 = vmatpush1.msra.mxu0 %v238
    %1238 = vmatprep.subr.mxu0 0.0
    %1239 = vmatpush1.msra.mxu0 %v237
    %1240 = vmatprep.subr.mxu0 0.0
    %1241 = vmatpush1.msra.mxu0 %v236
    %1242 = vmatprep.subr.mxu0 0.0
    %1243 = vmatpush1.msra.mxu0 %v235
    %1244 = vmatprep.subr.mxu0 0.0
    %1245 = vmatpush2.msra.mxu0 0.0
    %1246 = vmatprep.subr.mxu0 0.0
    %1247 = vmatpush2.msra.mxu0 0.0
    %1248 = vmatprep.subr.mxu0 0.0
    %1249 = vmatpush2.msra.mxu0 0.0
    %1250 = vmatprep.subr.mxu0 0.0
    %1251 = vmatpush2.msra.mxu0 0.0
    %1252 = vmatprep.subr.mxu0 0.0
    %1253 = vmatpush2.msra.mxu0 0.0
    %1254 = vmatprep.subr.mxu0 0.0
    %1255 = vmatpush2.msra.mxu0 0.0
    %1256 = vmatprep.subr.mxu0 0.0
    %1257 = vmatpush2.msra.mxu0 0.0
    %1258 = vmatprep.subr.mxu0 0.0
    %1259 = vmatpush2.msra.mxu0 0.0
    %1260 = vmatprep.subr.mxu0 0.0
    %1261 = vmatpush2.msra.mxu0 0.0
    %1262 = vmatprep.subr.mxu0 0.0
    %1263 = vmatpush2.msra.mxu0 0.0
    %1264 = vmatprep.subr.mxu0 0.0
    %1265 = vmatpush2.msra.mxu0 0.0
    %1266 = vmatprep.subr.mxu0 0.0
    %1267 = vmatpush2.msra.mxu0 0.0
    %1268 = vmatprep.subr.mxu0 0.0
    %1269 = vmatpush2.msra.mxu0 0.0
    %1270 = vmatprep.subr.mxu0 0.0
    %1271 = vmatpush2.msra.mxu0 0.0
    %1272 = vmatprep.subr.mxu0 0.0
    %1273 = vmatpush2.msra.mxu0 0.0
    %1274 = vmatprep.subr.mxu0 0.0
    %1275 = vmatpush2.msra.mxu0 0.0
    %1276 = vmatprep.mubr.f32.mxu0 0.0
    %1277 = vmatmul.mubr.f32.gmra.mxu0 %v1210
    %v1278 = vpop.f32.mrf.mxu0
    %v1279 = vadd.f32 0.0, %v1278
    %v1280 = vpop.f32.mrf.mxu0
    %1281 = vdwg.mxu0
    %v1283 = vrot.slane %v1279, 2
    %v1285 = vadd.f32 %v1207, %v1283
    %v1286 = vtanh.pop %v1206
    %v1287 = vxor.u32 %v1206, 2147483648
    %v1288 = vmul.f32 %v1287, 1.442695
    %v1289 = vpow.pop %v1288
    %v1290 = vadd.f32 %v1289, 1.0
    %v1291 = vrcp.pop %v1290
    %v1292 = vmul.f32 1.0, %v1291
    %v1293 = vsel %vm124, %v1286, %v1292
    %v1294 = vtanh.pop %v1285
    %v1295 = vxor.u32 %v1285, 2147483648
    %v1296 = vmul.f32 %v1295, 1.442695
    %v1297 = vpow.pop %v1296
    %v1298 = vadd.f32 %v1297, 1.0
    %v1299 = vrcp.pop %v1298
    %v1300 = vmul.f32 1.0, %v1299
    %v1301 = vsel %vm124, %v1294, %v1300
    %v1303 = vrot.slane %v1091, 6
    %v1305 = vmul.f32 %v1293, %v1303
    %1307 = vrot.lane.b32.xlu0 %v1293, 64
    %v1308 = vpop.permute.xlu0 %1307
    %v1310 = vmul.f32 %v1293, %v1308
    %1312 = vrot.lane.b32.xlu0 %v1310, 32
    %v1313 = vpop.permute.xlu0 %1312
    %v1315 = vadd.f32 %v1305, %v1313
    %v1317 = vrot.slane %v1105, 2
    %v1319 = vmul.f32 %v1301, %v1317
    %1321 = vrot.lane.b32.xlu0 %v1301, 64
    %v1322 = vpop.permute.xlu0 %1321
    %v1324 = vmul.f32 %v1301, %v1322
    %1326 = vrot.lane.b32.xlu0 %v1324, 32
    %v1327 = vpop.permute.xlu0 %1326
    %v1329 = vadd.f32 %v1319, %v1327
    %v1330 = vtanh.pop %v1315
    %1332 = vrot.lane.b32.xlu0 %v1330, 64
    %v1333 = vpop.permute.xlu0 %1332
    %v1335 = vmul.f32 %v1293, %v1333
    %v1336 = vtanh.pop %v1329
    %1338 = vrot.lane.b32.xlu0 %v1336, 64
    %v1339 = vpop.permute.xlu0 %1338
    %v1341 = vmul.f32 %v1301, %v1339
    %1343 = vrot.lane.b32.xlu0 %v1335, 32
    %v1344 = vpop.permute.xlu0 %1343
    %1346 = vst.msk [vmem:[#allocation3 + $0x8] sm:$0x3] %vm444, %v1344
    %1348 = vrot.lane.b32.xlu0 %v1341, 64
    %v1349 = vpop.permute.xlu0 %1348
    %1351 = vst.msk [vmem:[#allocation3] sm:$0xc0] %vm450, %v1349
    %v1352 = vld [vmem:[#allocation2 + $0x10] sm:$0xc]
    %v1353 = vsel %vm240, %v1344, 0
    %1355 = vmatprep.subr.mxu0 0.0
    %1356 = vmatpush1.msra.mxu0 0.0
    %1357 = vmatprep.subr.mxu0 0.0
    %1358 = vmatpush1.msra.mxu0 0.0
    %1359 = vmatprep.subr.mxu0 0.0
    %1360 = vmatpush1.msra.mxu0 0.0
    %1361 = vmatprep.subr.mxu0 0.0
    %1362 = vmatpush1.msra.mxu0 0.0
    %1363 = vmatprep.subr.mxu0 0.0
    %1364 = vmatpush1.msra.mxu0 0.0
    %1365 = vmatprep.subr.mxu0 0.0
    %1366 = vmatpush1.msra.mxu0 0.0
    %1367 = vmatprep.subr.mxu0 0.0
    %1368 = vmatpush1.msra.mxu0 0.0
    %1369 = vmatprep.subr.mxu0 0.0
    %1370 = vmatpush1.msra.mxu0 0.0
    %1371 = vmatprep.subr.mxu0 0.0
    %1372 = vmatpush1.msra.mxu0 0.0
    %1373 = vmatprep.subr.mxu0 0.0
    %1374 = vmatpush1.msra.mxu0 0.0
    %1375 = vmatprep.subr.mxu0 0.0
    %1376 = vmatpush1.msra.mxu0 0.0
    %1377 = vmatprep.subr.mxu0 0.0
    %1378 = vmatpush1.msra.mxu0 0.0
    %1379 = vmatprep.subr.mxu0 0.0
    %1380 = vmatpush1.msra.mxu0 %v234
    %1381 = vmatprep.subr.mxu0 0.0
    %1382 = vmatpush1.msra.mxu0 %v233
    %1383 = vmatprep.subr.mxu0 0.0
    %1384 = vmatpush1.msra.mxu0 %v232
    %1385 = vmatprep.subr.mxu0 0.0
    %1386 = vmatpush1.msra.mxu0 %v231
    %1387 = vmatprep.subr.mxu0 0.0
    %1388 = vmatpush2.msra.mxu0 0.0
    %1389 = vmatprep.subr.mxu0 0.0
    %1390 = vmatpush2.msra.mxu0 0.0
    %1391 = vmatprep.subr.mxu0 0.0
    %1392 = vmatpush2.msra.mxu0 0.0
    %1393 = vmatprep.subr.mxu0 0.0
    %1394 = vmatpush2.msra.mxu0 0.0
    %1395 = vmatprep.subr.mxu0 0.0
    %1396 = vmatpush2.msra.mxu0 0.0
    %1397 = vmatprep.subr.mxu0 0.0
    %1398 = vmatpush2.msra.mxu0 0.0
    %1399 = vmatprep.subr.mxu0 0.0
    %1400 = vmatpush2.msra.mxu0 0.0
    %1401 = vmatprep.subr.mxu0 0.0
    %1402 = vmatpush2.msra.mxu0 0.0
    %1403 = vmatprep.subr.mxu0 0.0
    %1404 = vmatpush2.msra.mxu0 0.0
    %1405 = vmatprep.subr.mxu0 0.0
    %1406 = vmatpush2.msra.mxu0 0.0
    %1407 = vmatprep.subr.mxu0 0.0
    %1408 = vmatpush2.msra.mxu0 0.0
    %1409 = vmatprep.subr.mxu0 0.0
    %1410 = vmatpush2.msra.mxu0 0.0
    %1411 = vmatprep.subr.mxu0 0.0
    %1412 = vmatpush2.msra.mxu0 0.0
    %1413 = vmatprep.subr.mxu0 0.0
    %1414 = vmatpush2.msra.mxu0 0.0
    %1415 = vmatprep.subr.mxu0 0.0
    %1416 = vmatpush2.msra.mxu0 0.0
    %1417 = vmatprep.subr.mxu0 0.0
    %1418 = vmatpush2.msra.mxu0 0.0
    %1419 = vmatprep.mubr.f32.mxu0 0.0
    %1420 = vmatmul.mubr.f32.gmra.mxu0 %v1353
    %v1421 = vpop.f32.mrf.mxu0
    %v1422 = vadd.f32 0.0, %v1421
    %v1423 = vpop.f32.mrf.mxu0
    %1424 = vdwg.mxu0
    %v1426 = vrot.slane %v1422, 6
    %v1428 = vadd.f32 %v1352, %v1426
    %v1429 = vld [vmem:[#allocation2 + $0x8] sm:$0x30]
    %v1430 = vrot.slane %v1341, 6
    %1431 = vrot.lane.b32.xlu0 %v1430, 32
    %v1432 = vpop.permute.xlu0 %1431
    %v1433 = vsel %vm240, %v1432, 0
    %1435 = vmatprep.subr.mxu0 0.0
    %1436 = vmatpush1.msra.mxu0 0.0
    %1437 = vmatprep.subr.mxu0 0.0
    %1438 = vmatpush1.msra.mxu0 0.0
    %1439 = vmatprep.subr.mxu0 0.0
    %1440 = vmatpush1.msra.mxu0 0.0
    %1441 = vmatprep.subr.mxu0 0.0
    %1442 = vmatpush1.msra.mxu0 0.0
    %1443 = vmatprep.subr.mxu0 0.0
    %1444 = vmatpush1.msra.mxu0 0.0
    %1445 = vmatprep.subr.mxu0 0.0
    %1446 = vmatpush1.msra.mxu0 0.0
    %1447 = vmatprep.subr.mxu0 0.0
    %1448 = vmatpush1.msra.mxu0 0.0
    %1449 = vmatprep.subr.mxu0 0.0
    %1450 = vmatpush1.msra.mxu0 0.0
    %1451 = vmatprep.subr.mxu0 0.0
    %1452 = vmatpush1.msra.mxu0 0.0
    %1453 = vmatprep.subr.mxu0 0.0
    %1454 = vmatpush1.msra.mxu0 0.0
    %1455 = vmatprep.subr.mxu0 0.0
    %1456 = vmatpush1.msra.mxu0 0.0
    %1457 = vmatprep.subr.mxu0 0.0
    %1458 = vmatpush1.msra.mxu0 0.0
    %1459 = vmatprep.subr.mxu0 0.0
    %1460 = vmatpush1.msra.mxu0 %v238
    %1461 = vmatprep.subr.mxu0 0.0
    %1462 = vmatpush1.msra.mxu0 %v237
    %1463 = vmatprep.subr.mxu0 0.0
    %1464 = vmatpush1.msra.mxu0 %v236
    %1465 = vmatprep.subr.mxu0 0.0
    %1466 = vmatpush1.msra.mxu0 %v235
    %1467 = vmatprep.subr.mxu0 0.0
    %1468 = vmatpush2.msra.mxu0 0.0
    %1469 = vmatprep.subr.mxu0 0.0
    %1470 = vmatpush2.msra.mxu0 0.0
    %1471 = vmatprep.subr.mxu0 0.0
    %1472 = vmatpush2.msra.mxu0 0.0
    %1473 = vmatprep.subr.mxu0 0.0
    %1474 = vmatpush2.msra.mxu0 0.0
    %1475 = vmatprep.subr.mxu0 0.0
    %1476 = vmatpush2.msra.mxu0 0.0
    %1477 = vmatprep.subr.mxu0 0.0
    %1478 = vmatpush2.msra.mxu0 0.0
    %1479 = vmatprep.subr.mxu0 0.0
    %1480 = vmatpush2.msra.mxu0 0.0
    %1481 = vmatprep.subr.mxu0 0.0
    %1482 = vmatpush2.msra.mxu0 0.0
    %1483 = vmatprep.subr.mxu0 0.0
    %1484 = vmatpush2.msra.mxu0 0.0
    %1485 = vmatprep.subr.mxu0 0.0
    %1486 = vmatpush2.msra.mxu0 0.0
    %1487 = vmatprep.subr.mxu0 0.0
    %1488 = vmatpush2.msra.mxu0 0.0
    %1489 = vmatprep.subr.mxu0 0.0
    %1490 = vmatpush2.msra.mxu0 0.0
    %1491 = vmatprep.subr.mxu0 0.0
    %1492 = vmatpush2.msra.mxu0 0.0
    %1493 = vmatprep.subr.mxu0 0.0
    %1494 = vmatpush2.msra.mxu0 0.0
    %1495 = vmatprep.subr.mxu0 0.0
    %1496 = vmatpush2.msra.mxu0 0.0
    %1497 = vmatprep.subr.mxu0 0.0
    %1498 = vmatpush2.msra.mxu0 0.0
    %1499 = vmatprep.mubr.f32.mxu0 0.0
    %1500 = vmatmul.mubr.f32.gmra.mxu0 %v1433
    %v1501 = vpop.f32.mrf.mxu0
    %v1502 = vadd.f32 0.0, %v1501
    %v1503 = vpop.f32.mrf.mxu0
    %1504 = vdwg.mxu0
    %v1506 = vrot.slane %v1502, 4
    %v1508 = vadd.f32 %v1429, %v1506
    %v1509 = vtanh.pop %v1428
    %v1510 = vxor.u32 %v1428, 2147483648
    %v1511 = vmul.f32 %v1510, 1.442695
    %v1512 = vpow.pop %v1511
    %v1513 = vadd.f32 %v1512, 1.0
    %v1514 = vrcp.pop %v1513
    %v1515 = vmul.f32 1.0, %v1514
    %v1516 = vsel %vm124, %v1509, %v1515
    %v1517 = vtanh.pop %v1508
    %v1518 = vxor.u32 %v1508, 2147483648
    %v1519 = vmul.f32 %v1518, 1.442695
    %v1520 = vpow.pop %v1519
    %v1521 = vadd.f32 %v1520, 1.0
    %v1522 = vrcp.pop %v1521
    %v1523 = vmul.f32 1.0, %v1522
    %v1524 = vsel %vm124, %v1517, %v1523
    %v1526 = vrot.slane %v1315, 6
    %v1528 = vmul.f32 %v1516, %v1526
    %1530 = vrot.lane.b32.xlu0 %v1516, 64
    %v1531 = vpop.permute.xlu0 %1530
    %v1533 = vmul.f32 %v1516, %v1531
    %1535 = vrot.lane.b32.xlu0 %v1533, 32
    %v1536 = vpop.permute.xlu0 %1535
    %v1538 = vadd.f32 %v1528, %v1536
    %v1540 = vrot.slane %v1329, 2
    %v1542 = vmul.f32 %v1524, %v1540
    %1544 = vrot.lane.b32.xlu0 %v1524, 64
    %v1545 = vpop.permute.xlu0 %1544
    %v1547 = vmul.f32 %v1524, %v1545
    %1549 = vrot.lane.b32.xlu0 %v1547, 32
    %v1550 = vpop.permute.xlu0 %1549
    %v1552 = vadd.f32 %v1542, %v1550
    %v1553 = vtanh.pop %v1538
    %1555 = vrot.lane.b32.xlu0 %v1553, 64
    %v1556 = vpop.permute.xlu0 %1555
    %v1558 = vmul.f32 %v1516, %v1556
    %v1559 = vtanh.pop %v1552
    %1561 = vrot.lane.b32.xlu0 %v1559, 64
    %v1562 = vpop.permute.xlu0 %1561
    %v1564 = vmul.f32 %v1524, %v1562
    %1566 = vrot.lane.b32.xlu0 %v1558, 32
    %v1567 = vpop.permute.xlu0 %1566
    %1569 = vst.msk [vmem:[#allocation3 + $0x8] sm:$0xc] %vm669, %v1567
    %1571 = vrot.lane.b32.xlu0 %v1564, 64
    %v1572 = vpop.permute.xlu0 %1571
    %1574 = vst.msk [vmem:[#allocation3] sm:$0x30] %vm675, %v1572
    %v1575 = vld [vmem:[#allocation2 + $0x10] sm:$0x30]
    %v1576 = vrot.slane %v1558, 2
    %1577 = vrot.lane.b32.xlu0 %v1576, 32
    %v1578 = vpop.permute.xlu0 %1577
    %v1579 = vsel %vm240, %v1578, 0
    %1581 = vmatprep.subr.mxu0 0.0
    %1582 = vmatpush1.msra.mxu0 0.0
    %1583 = vmatprep.subr.mxu0 0.0
    %1584 = vmatpush1.msra.mxu0 0.0
    %1585 = vmatprep.subr.mxu0 0.0
    %1586 = vmatpush1.msra.mxu0 0.0
    %1587 = vmatprep.subr.mxu0 0.0
    %1588 = vmatpush1.msra.mxu0 0.0
    %1589 = vmatprep.subr.mxu0 0.0
    %1590 = vmatpush1.msra.mxu0 0.0
    %1591 = vmatprep.subr.mxu0 0.0
    %1592 = vmatpush1.msra.mxu0 0.0
    %1593 = vmatprep.subr.mxu0 0.0
    %1594 = vmatpush1.msra.mxu0 0.0
    %1595 = vmatprep.subr.mxu0 0.0
    %1596 = vmatpush1.msra.mxu0 0.0
    %1597 = vmatprep.subr.mxu0 0.0
    %1598 = vmatpush1.msra.mxu0 0.0
    %1599 = vmatprep.subr.mxu0 0.0
    %1600 = vmatpush1.msra.mxu0 0.0
    %1601 = vmatprep.subr.mxu0 0.0
    %1602 = vmatpush1.msra.mxu0 0.0
    %1603 = vmatprep.subr.mxu0 0.0
    %1604 = vmatpush1.msra.mxu0 0.0
    %1605 = vmatprep.subr.mxu0 0.0
    %1606 = vmatpush1.msra.mxu0 %v234
    %1607 = vmatprep.subr.mxu0 0.0
    %1608 = vmatpush1.msra.mxu0 %v233
    %1609 = vmatprep.subr.mxu0 0.0
    %1610 = vmatpush1.msra.mxu0 %v232
    %1611 = vmatprep.subr.mxu0 0.0
    %1612 = vmatpush1.msra.mxu0 %v231
    %1613 = vmatprep.subr.mxu0 0.0
    %1614 = vmatpush2.msra.mxu0 0.0
    %1615 = vmatprep.subr.mxu0 0.0
    %1616 = vmatpush2.msra.mxu0 0.0
    %1617 = vmatprep.subr.mxu0 0.0
    %1618 = vmatpush2.msra.mxu0 0.0
    %1619 = vmatprep.subr.mxu0 0.0
    %1620 = vmatpush2.msra.mxu0 0.0
    %1621 = vmatprep.subr.mxu0 0.0
    %1622 = vmatpush2.msra.mxu0 0.0
    %1623 = vmatprep.subr.mxu0 0.0
    %1624 = vmatpush2.msra.mxu0 0.0
    %1625 = vmatprep.subr.mxu0 0.0
    %1626 = vmatpush2.msra.mxu0 0.0
    %1627 = vmatprep.subr.mxu0 0.0
    %1628 = vmatpush2.msra.mxu0 0.0
    %1629 = vmatprep.subr.mxu0 0.0
    %1630 = vmatpush2.msra.mxu0 0.0
    %1631 = vmatprep.subr.mxu0 0.0
    %1632 = vmatpush2.msra.mxu0 0.0
    %1633 = vmatprep.subr.mxu0 0.0
    %1634 = vmatpush2.msra.mxu0 0.0
    %1635 = vmatprep.subr.mxu0 0.0
    %1636 = vmatpush2.msra.mxu0 0.0
    %1637 = vmatprep.subr.mxu0 0.0
    %1638 = vmatpush2.msra.mxu0 0.0
    %1639 = vmatprep.subr.mxu0 0.0
    %1640 = vmatpush2.msra.mxu0 0.0
    %1641 = vmatprep.subr.mxu0 0.0
    %1642 = vmatpush2.msra.mxu0 0.0
    %1643 = vmatprep.subr.mxu0 0.0
    %1644 = vmatpush2.msra.mxu0 0.0
    %1645 = vmatprep.mubr.f32.mxu0 0.0
    %1646 = vmatmul.mubr.f32.gmra.mxu0 %v1579
    %v1647 = vpop.f32.mrf.mxu0
    %v1648 = vadd.f32 0.0, %v1647
    %v1649 = vpop.f32.mrf.mxu0
    %1650 = vdwg.mxu0
    %v1652 = vrot.slane %v1648, 4
    %v1654 = vadd.f32 %v1575, %v1652
    %v1655 = vld [vmem:[#allocation2 + $0x8] sm:$0xc]
    %v1656 = vrot.slane %v1564, 4
    %1657 = vrot.lane.b32.xlu0 %v1656, 32
    %v1658 = vpop.permute.xlu0 %1657
    %v1659 = vsel %vm240, %v1658, 0
    %1661 = vmatprep.subr.mxu0 0.0
    %1662 = vmatpush1.msra.mxu0 0.0
    %1663 = vmatprep.subr.mxu0 0.0
    %1664 = vmatpush1.msra.mxu0 0.0
    %1665 = vmatprep.subr.mxu0 0.0
    %1666 = vmatpush1.msra.mxu0 0.0
    %1667 = vmatprep.subr.mxu0 0.0
    %1668 = vmatpush1.msra.mxu0 0.0
    %1669 = vmatprep.subr.mxu0 0.0
    %1670 = vmatpush1.msra.mxu0 0.0
    %1671 = vmatprep.subr.mxu0 0.0
    %1672 = vmatpush1.msra.mxu0 0.0
    %1673 = vmatprep.subr.mxu0 0.0
    %1674 = vmatpush1.msra.mxu0 0.0
    %1675 = vmatprep.subr.mxu0 0.0
    %1676 = vmatpush1.msra.mxu0 0.0
    %1677 = vmatprep.subr.mxu0 0.0
    %1678 = vmatpush1.msra.mxu0 0.0
    %1679 = vmatprep.subr.mxu0 0.0
    %1680 = vmatpush1.msra.mxu0 0.0
    %1681 = vmatprep.subr.mxu0 0.0
    %1682 = vmatpush1.msra.mxu0 0.0
    %1683 = vmatprep.subr.mxu0 0.0
    %1684 = vmatpush1.msra.mxu0 0.0
    %1685 = vmatprep.subr.mxu0 0.0
    %1686 = vmatpush1.msra.mxu0 %v238
    %1687 = vmatprep.subr.mxu0 0.0
    %1688 = vmatpush1.msra.mxu0 %v237
    %1689 = vmatprep.subr.mxu0 0.0
    %1690 = vmatpush1.msra.mxu0 %v236
    %1691 = vmatprep.subr.mxu0 0.0
    %1692 = vmatpush1.msra.mxu0 %v235
    %1693 = vmatprep.subr.mxu0 0.0
    %1694 = vmatpush2.msra.mxu0 0.0
    %1695 = vmatprep.subr.mxu0 0.0
    %1696 = vmatpush2.msra.mxu0 0.0
    %1697 = vmatprep.subr.mxu0 0.0
    %1698 = vmatpush2.msra.mxu0 0.0
    %1699 = vmatprep.subr.mxu0 0.0
    %1700 = vmatpush2.msra.mxu0 0.0
    %1701 = vmatprep.subr.mxu0 0.0
    %1702 = vmatpush2.msra.mxu0 0.0
    %1703 = vmatprep.subr.mxu0 0.0
    %1704 = vmatpush2.msra.mxu0 0.0
    %1705 = vmatprep.subr.mxu0 0.0
    %1706 = vmatpush2.msra.mxu0 0.0
    %1707 = vmatprep.subr.mxu0 0.0
    %1708 = vmatpush2.msra.mxu0 0.0
    %1709 = vmatprep.subr.mxu0 0.0
    %1710 = vmatpush2.msra.mxu0 0.0
    %1711 = vmatprep.subr.mxu0 0.0
    %1712 = vmatpush2.msra.mxu0 0.0
    %1713 = vmatprep.subr.mxu0 0.0
    %1714 = vmatpush2.msra.mxu0 0.0
    %1715 = vmatprep.subr.mxu0 0.0
    %1716 = vmatpush2.msra.mxu0 0.0
    %1717 = vmatprep.subr.mxu0 0.0
    %1718 = vmatpush2.msra.mxu0 0.0
    %1719 = vmatprep.subr.mxu0 0.0
    %1720 = vmatpush2.msra.mxu0 0.0
    %1721 = vmatprep.subr.mxu0 0.0
    %1722 = vmatpush2.msra.mxu0 0.0
    %1723 = vmatprep.subr.mxu0 0.0
    %1724 = vmatpush2.msra.mxu0 0.0
    %1725 = vmatprep.mubr.f32.mxu0 0.0
    %1726 = vmatmul.mubr.f32.gmra.mxu0 %v1659
    %v1727 = vpop.f32.mrf.mxu0
    %v1728 = vadd.f32 0.0, %v1727
    %v1729 = vpop.f32.mrf.mxu0
    %1730 = vdwg.mxu0
    %v1732 = vrot.slane %v1728, 6
    %v1734 = vadd.f32 %v1655, %v1732
    %v1735 = vtanh.pop %v1654
    %v1736 = vxor.u32 %v1654, 2147483648
    %v1737 = vmul.f32 %v1736, 1.442695
    %v1738 = vpow.pop %v1737
    %v1739 = vadd.f32 %v1738, 1.0
    %v1740 = vrcp.pop %v1739
    %v1741 = vmul.f32 1.0, %v1740
    %v1742 = vsel %vm124, %v1735, %v1741
    %v1743 = vtanh.pop %v1734
    %v1744 = vxor.u32 %v1734, 2147483648
    %v1745 = vmul.f32 %v1744, 1.442695
    %v1746 = vpow.pop %v1745
    %v1747 = vadd.f32 %v1746, 1.0
    %v1748 = vrcp.pop %v1747
    %v1749 = vmul.f32 1.0, %v1748
    %v1750 = vsel %vm124, %v1743, %v1749
    %v1752 = vrot.slane %v1538, 6
    %v1754 = vmul.f32 %v1742, %v1752
    %1756 = vrot.lane.b32.xlu0 %v1742, 64
    %v1757 = vpop.permute.xlu0 %1756
    %v1759 = vmul.f32 %v1742, %v1757
    %1761 = vrot.lane.b32.xlu0 %v1759, 32
    %v1762 = vpop.permute.xlu0 %1761
    %v1764 = vadd.f32 %v1754, %v1762
    %v1766 = vrot.slane %v1552, 2
    %v1768 = vmul.f32 %v1750, %v1766
    %1770 = vrot.lane.b32.xlu0 %v1750, 64
    %v1771 = vpop.permute.xlu0 %1770
    %v1773 = vmul.f32 %v1750, %v1771
    %1775 = vrot.lane.b32.xlu0 %v1773, 32
    %v1776 = vpop.permute.xlu0 %1775
    %v1778 = vadd.f32 %v1768, %v1776
    %v1779 = vtanh.pop %v1764
    %1781 = vrot.lane.b32.xlu0 %v1779, 64
    %v1782 = vpop.permute.xlu0 %1781
    %v1784 = vmul.f32 %v1742, %v1782
    %v1785 = vtanh.pop %v1778
    %1787 = vrot.lane.b32.xlu0 %v1785, 64
    %v1788 = vpop.permute.xlu0 %1787
    %v1790 = vmul.f32 %v1750, %v1788
    %1792 = vrot.lane.b32.xlu0 %v1784, 32
    %v1793 = vpop.permute.xlu0 %1792
    %1795 = vst.msk [vmem:[#allocation3 + $0x8] sm:$0x30] %vm897, %v1793
    %1797 = vrot.lane.b32.xlu0 %v1790, 64
    %v1798 = vpop.permute.xlu0 %1797
    %1800 = vst.msk [vmem:[#allocation3] sm:$0xc] %vm903, %v1798
    %v1801 = vld [vmem:[#allocation2 + $0x10] sm:$0xc0]
    %v1802 = vrot.slane %v1784, 4
    %1803 = vrot.lane.b32.xlu0 %v1802, 32
    %v1804 = vpop.permute.xlu0 %1803
    %v1805 = vsel %vm240, %v1804, 0
    %1807 = vmatprep.subr.mxu0 0.0
    %1808 = vmatpush1.msra.mxu0 0.0
    %1809 = vmatprep.subr.mxu0 0.0
    %1810 = vmatpush1.msra.mxu0 0.0
    %1811 = vmatprep.subr.mxu0 0.0
    %1812 = vmatpush1.msra.mxu0 0.0
    %1813 = vmatprep.subr.mxu0 0.0
    %1814 = vmatpush1.msra.mxu0 0.0
    %1815 = vmatprep.subr.mxu0 0.0
    %1816 = vmatpush1.msra.mxu0 0.0
    %1817 = vmatprep.subr.mxu0 0.0
    %1818 = vmatpush1.msra.mxu0 0.0
    %1819 = vmatprep.subr.mxu0 0.0
    %1820 = vmatpush1.msra.mxu0 0.0
    %1821 = vmatprep.subr.mxu0 0.0
    %1822 = vmatpush1.msra.mxu0 0.0
    %1823 = vmatprep.subr.mxu0 0.0
    %1824 = vmatpush1.msra.mxu0 0.0
    %1825 = vmatprep.subr.mxu0 0.0
    %1826 = vmatpush1.msra.mxu0 0.0
    %1827 = vmatprep.subr.mxu0 0.0
    %1828 = vmatpush1.msra.mxu0 0.0
    %1829 = vmatprep.subr.mxu0 0.0
    %1830 = vmatpush1.msra.mxu0 0.0
    %1831 = vmatprep.subr.mxu0 0.0
    %1832 = vmatpush1.msra.mxu0 %v234
    %1833 = vmatprep.subr.mxu0 0.0
    %1834 = vmatpush1.msra.mxu0 %v233
    %1835 = vmatprep.subr.mxu0 0.0
    %1836 = vmatpush1.msra.mxu0 %v232
    %1837 = vmatprep.subr.mxu0 0.0
    %1838 = vmatpush1.msra.mxu0 %v231
    %1839 = vmatprep.subr.mxu0 0.0
    %1840 = vmatpush2.msra.mxu0 0.0
    %1841 = vmatprep.subr.mxu0 0.0
    %1842 = vmatpush2.msra.mxu0 0.0
    %1843 = vmatprep.subr.mxu0 0.0
    %1844 = vmatpush2.msra.mxu0 0.0
    %1845 = vmatprep.subr.mxu0 0.0
    %1846 = vmatpush2.msra.mxu0 0.0
    %1847 = vmatprep.subr.mxu0 0.0
    %1848 = vmatpush2.msra.mxu0 0.0
    %1849 = vmatprep.subr.mxu0 0.0
    %1850 = vmatpush2.msra.mxu0 0.0
    %1851 = vmatprep.subr.mxu0 0.0
    %1852 = vmatpush2.msra.mxu0 0.0
    %1853 = vmatprep.subr.mxu0 0.0
    %1854 = vmatpush2.msra.mxu0 0.0
    %1855 = vmatprep.subr.mxu0 0.0
    %1856 = vmatpush2.msra.mxu0 0.0
    %1857 = vmatprep.subr.mxu0 0.0
    %1858 = vmatpush2.msra.mxu0 0.0
    %1859 = vmatprep.subr.mxu0 0.0
    %1860 = vmatpush2.msra.mxu0 0.0
    %1861 = vmatprep.subr.mxu0 0.0
    %1862 = vmatpush2.msra.mxu0 0.0
    %1863 = vmatprep.subr.mxu0 0.0
    %1864 = vmatpush2.msra.mxu0 0.0
    %1865 = vmatprep.subr.mxu0 0.0
    %1866 = vmatpush2.msra.mxu0 0.0
    %1867 = vmatprep.subr.mxu0 0.0
    %1868 = vmatpush2.msra.mxu0 0.0
    %1869 = vmatprep.subr.mxu0 0.0
    %1870 = vmatpush2.msra.mxu0 0.0
    %1871 = vmatprep.mubr.f32.mxu0 0.0
    %1872 = vmatmul.mubr.f32.gmra.mxu0 %v1805
    %v1873 = vpop.f32.mrf.mxu0
    %v1874 = vadd.f32 0.0, %v1873
    %v1875 = vpop.f32.mrf.mxu0
    %1876 = vdwg.mxu0
    %v1878 = vrot.slane %v1874, 2
    %v1880 = vadd.f32 %v1801, %v1878
    %v1881 = vld [vmem:[#allocation2 + $0x8] sm:$0x3]
    %v1882 = vrot.slane %v1790, 2
    %1883 = vrot.lane.b32.xlu0 %v1882, 32
    %v1884 = vpop.permute.xlu0 %1883
    %v1885 = vsel %vm240, %v1884, 0
    %1887 = vmatprep.subr.mxu0 0.0
    %1888 = vmatpush1.msra.mxu0 0.0
    %1889 = vmatprep.subr.mxu0 0.0
    %1890 = vmatpush1.msra.mxu0 0.0
    %1891 = vmatprep.subr.mxu0 0.0
    %1892 = vmatpush1.msra.mxu0 0.0
    %1893 = vmatprep.subr.mxu0 0.0
    %1894 = vmatpush1.msra.mxu0 0.0
    %1895 = vmatprep.subr.mxu0 0.0
    %1896 = vmatpush1.msra.mxu0 0.0
    %1897 = vmatprep.subr.mxu0 0.0
    %1898 = vmatpush1.msra.mxu0 0.0
    %1899 = vmatprep.subr.mxu0 0.0
    %1900 = vmatpush1.msra.mxu0 0.0
    %1901 = vmatprep.subr.mxu0 0.0
    %1902 = vmatpush1.msra.mxu0 0.0
    %1903 = vmatprep.subr.mxu0 0.0
    %1904 = vmatpush1.msra.mxu0 0.0
    %1905 = vmatprep.subr.mxu0 0.0
    %1906 = vmatpush1.msra.mxu0 0.0
    %1907 = vmatprep.subr.mxu0 0.0
    %1908 = vmatpush1.msra.mxu0 0.0
    %1909 = vmatprep.subr.mxu0 0.0
    %1910 = vmatpush1.msra.mxu0 0.0
    %1911 = vmatprep.subr.mxu0 0.0
    %1912 = vmatpush1.msra.mxu0 %v238
    %1913 = vmatprep.subr.mxu0 0.0
    %1914 = vmatpush1.msra.mxu0 %v237
    %1915 = vmatprep.subr.mxu0 0.0
    %1916 = vmatpush1.msra.mxu0 %v236
    %1917 = vmatprep.subr.mxu0 0.0
    %1918 = vmatpush1.msra.mxu0 %v235
    %1919 = vmatprep.subr.mxu0 0.0
    %1920 = vmatpush2.msra.mxu0 0.0
    %1921 = vmatprep.subr.mxu0 0.0
    %1922 = vmatpush2.msra.mxu0 0.0
    %1923 = vmatprep.subr.mxu0 0.0
    %1924 = vmatpush2.msra.mxu0 0.0
    %1925 = vmatprep.subr.mxu0 0.0
    %1926 = vmatpush2.msra.mxu0 0.0
    %1927 = vmatprep.subr.mxu0 0.0
    %1928 = vmatpush2.msra.mxu0 0.0
    %1929 = vmatprep.subr.mxu0 0.0
    %1930 = vmatpush2.msra.mxu0 0.0
    %1931 = vmatprep.subr.mxu0 0.0
    %1932 = vmatpush2.msra.mxu0 0.0
    %1933 = vmatprep.subr.mxu0 0.0
    %1934 = vmatpush2.msra.mxu0 0.0
    %1935 = vmatprep.subr.mxu0 0.0
    %1936 = vmatpush2.msra.mxu0 0.0
    %1937 = vmatprep.subr.mxu0 0.0
    %1938 = vmatpush2.msra.mxu0 0.0
    %1939 = vmatprep.subr.mxu0 0.0
    %1940 = vmatpush2.msra.mxu0 0.0
    %1941 = vmatprep.subr.mxu0 0.0
    %1942 = vmatpush2.msra.mxu0 0.0
    %1943 = vmatprep.subr.mxu0 0.0
    %1944 = vmatpush2.msra.mxu0 0.0
    %1945 = vmatprep.subr.mxu0 0.0
    %1946 = vmatpush2.msra.mxu0 0.0
    %1947 = vmatprep.subr.mxu0 0.0
    %1948 = vmatpush2.msra.mxu0 0.0
    %1949 = vmatprep.subr.mxu0 0.0
    %1950 = vmatpush2.msra.mxu0 0.0
    %1951 = vmatprep.mubr.f32.mxu0 0.0
    %1952 = vmatmul.mubr.f32.gmra.mxu0 %v1885
    %v1953 = vpop.f32.mrf.mxu0
    %v1954 = vadd.f32 0.0, %v1953
    %v1955 = vpop.f32.mrf.mxu0
    %1956 = vdwg.mxu0
    %v1957 = vadd.f32 %v1881, %v1954
    %v1958 = vtanh.pop %v1880
    %v1959 = vxor.u32 %v1880, 2147483648
    %v1960 = vmul.f32 %v1959, 1.442695
    %v1961 = vpow.pop %v1960
    %v1962 = vadd.f32 %v1961, 1.0
    %v1963 = vrcp.pop %v1962
    %v1964 = vmul.f32 1.0, %v1963
    %v1965 = vsel %vm124, %v1958, %v1964
    %v1966 = vtanh.pop %v1957
    %v1967 = vxor.u32 %v1957, 2147483648
    %v1968 = vmul.f32 %v1967, 1.442695
    %v1969 = vpow.pop %v1968
    %v1970 = vadd.f32 %v1969, 1.0
    %v1971 = vrcp.pop %v1970
    %v1972 = vmul.f32 1.0, %v1971
    %v1973 = vsel %vm124, %v1966, %v1972
    %v1975 = vrot.slane %v1764, 6
    %v1977 = vmul.f32 %v1965, %v1975
    %1979 = vrot.lane.b32.xlu0 %v1965, 64
    %v1980 = vpop.permute.xlu0 %1979
    %v1982 = vmul.f32 %v1965, %v1980
    %1984 = vrot.lane.b32.xlu0 %v1982, 32
    %v1985 = vpop.permute.xlu0 %1984
    %v1987 = vadd.f32 %v1977, %v1985
    %v1989 = vrot.slane %v1778, 2
    %v1991 = vmul.f32 %v1973, %v1989
    %1993 = vrot.lane.b32.xlu0 %v1973, 64
    %v1994 = vpop.permute.xlu0 %1993
    %v1996 = vmul.f32 %v1973, %v1994
    %1998 = vrot.lane.b32.xlu0 %v1996, 32
    %v1999 = vpop.permute.xlu0 %1998
    %v2001 = vadd.f32 %v1991, %v1999
    %v2002 = vtanh.pop %v1987
    %2004 = vrot.lane.b32.xlu0 %v2002, 64
    %v2005 = vpop.permute.xlu0 %2004
    %v2007 = vmul.f32 %v1965, %v2005
    %v2008 = vtanh.pop %v2001
    %2010 = vrot.lane.b32.xlu0 %v2008, 64
    %v2011 = vpop.permute.xlu0 %2010
    %v2013 = vmul.f32 %v1973, %v2011
    %2015 = vrot.lane.b32.xlu0 %v2007, 32
    %v2016 = vpop.permute.xlu0 %2015
    %2018 = vst.msk [vmem:[#allocation3 + $0x8] sm:$0xc0] %vm1122, %v2016
    %2020 = vrot.lane.b32.xlu0 %v2013, 64
    %v2021 = vpop.permute.xlu0 %2020
    %2023 = vst.msk [vmem:[#allocation3] sm:$0x3] %vm1128, %v2021
    %v2024 = vld [vmem:[#allocation3] sm:$0xff]
    %v2025 = vld [vmem:[#allocation3 + $0x8] sm:$0xff]
    %v2026 = vld [vmem:[#allocation8] sm:$0xff]
    %v2027 = vld [vmem:[#allocation8 + $0x8] sm:$0xff]
    %v2028 = vld [vmem:[#allocation8 + $0x10] sm:$0xff]
    %v2029 = vld [vmem:[#allocation8 + $0x18] sm:$0xff]
    %v2030 = vld [vmem:[#allocation8 + $0x20] sm:$0xff]
    %v2031 = vld [vmem:[#allocation8 + $0x28] sm:$0xff]
    %v2032 = vld [vmem:[#allocation8 + $0x30] sm:$0xff]
    %v2033 = vld [vmem:[#allocation8 + $0x38] sm:$0xff]
    %v2034 = vld [vmem:[#allocation8 + $0x40] sm:$0xff]
    %v2035 = vld [vmem:[#allocation8 + $0x48] sm:$0xff]
    %v2036 = vld [vmem:[#allocation8 + $0x50] sm:$0xff]
    %v2037 = vld [vmem:[#allocation8 + $0x58] sm:$0xff]
    %v2038 = vld [vmem:[#allocation8 + $0x60] sm:$0xff]
    %v2039 = vld [vmem:[#allocation8 + $0x68] sm:$0xff]
    %v2040 = vld [vmem:[#allocation8 + $0x70] sm:$0xff]
    %v2041 = vld [vmem:[#allocation8 + $0x78] sm:$0xff]
    %v2042 = vld [vmem:[%s6] sm:$0x3]
    %v2044 = vlaneseq
    %v2045 = vshrl.u32 %v2044, 7
    %v2046 = vsub.s32 0, %v2045
    %v2047 = vrot.slane %v2042, %v2046
    %v2048 = vlaneseq
    %v2049 = vshrl.u32 %v2048, 7
    %v2050 = vsub.s32 1, %v2049
    %v2051 = vrot.slane %v2042, %v2050
    %vm2054 = vcmask 523264
    %v2056 = vsel %vm2054, %v2024, 0
    %v2059 = vsel %vm2054, %v2025, 0
    %2061 = vmatprep.subr.mxu0 0.0
    %2062 = vmatpush1.msra.mxu0 0.0
    %2063 = vmatprep.subr.mxu0 0.0
    %2064 = vmatpush1.msra.mxu0 0.0
    %2065 = vmatprep.subr.mxu0 0.0
    %2066 = vmatpush1.msra.mxu0 0.0
    %2067 = vmatprep.subr.mxu0 0.0
    %2068 = vmatpush1.msra.mxu0 0.0
    %2069 = vmatprep.subr.mxu0 0.0
    %2070 = vmatpush1.msra.mxu0 0.0
    %2071 = vmatprep.subr.mxu0 0.0
    %2072 = vmatpush1.msra.mxu0 0.0
    %2073 = vmatprep.subr.mxu0 0.0
    %2074 = vmatpush1.msra.mxu0 0.0
    %2075 = vmatprep.subr.mxu0 0.0
    %2076 = vmatpush1.msra.mxu0 0.0
    %2077 = vmatprep.subr.mxu0 %v2041
    %2078 = vmatpush1.msra.mxu0 %v2040
    %2079 = vmatprep.subr.mxu0 %v2039
    %2080 = vmatpush1.msra.mxu0 %v2038
    %2081 = vmatprep.subr.mxu0 %v2037
    %2082 = vmatpush1.msra.mxu0 %v2036
    %2083 = vmatprep.subr.mxu0 %v2035
    %2084 = vmatpush1.msra.mxu0 %v2034
    %2085 = vmatprep.subr.mxu0 %v2033
    %2086 = vmatpush1.msra.mxu0 %v2032
    %2087 = vmatprep.subr.mxu0 %v2031
    %2088 = vmatpush1.msra.mxu0 %v2030
    %2089 = vmatprep.subr.mxu0 %v2029
    %2090 = vmatpush1.msra.mxu0 %v2028
    %2091 = vmatprep.subr.mxu0 %v2027
    %2092 = vmatpush1.msra.mxu0 %v2026
    %2093 = vmatprep.subr.mxu0 0.0
    %2094 = vmatpush2.msra.mxu0 0.0
    %2095 = vmatprep.subr.mxu0 0.0
    %2096 = vmatpush2.msra.mxu0 0.0
    %2097 = vmatprep.subr.mxu0 0.0
    %2098 = vmatpush2.msra.mxu0 0.0
    %2099 = vmatprep.subr.mxu0 0.0
    %2100 = vmatpush2.msra.mxu0 0.0
    %2101 = vmatprep.subr.mxu0 0.0
    %2102 = vmatpush2.msra.mxu0 0.0
    %2103 = vmatprep.subr.mxu0 0.0
    %2104 = vmatpush2.msra.mxu0 0.0
    %2105 = vmatprep.subr.mxu0 0.0
    %2106 = vmatpush2.msra.mxu0 0.0
    %2107 = vmatprep.subr.mxu0 0.0
    %2108 = vmatpush2.msra.mxu0 0.0
    %2109 = vmatprep.subr.mxu0 0.0
    %2110 = vmatpush2.msra.mxu0 0.0
    %2111 = vmatprep.subr.mxu0 0.0
    %2112 = vmatpush2.msra.mxu0 0.0
    %2113 = vmatprep.subr.mxu0 0.0
    %2114 = vmatpush2.msra.mxu0 0.0
    %2115 = vmatprep.subr.mxu0 0.0
    %2116 = vmatpush2.msra.mxu0 0.0
    %2117 = vmatprep.subr.mxu0 0.0
    %2118 = vmatpush2.msra.mxu0 0.0
    %2119 = vmatprep.subr.mxu0 0.0
    %2120 = vmatpush2.msra.mxu0 0.0
    %2121 = vmatprep.subr.mxu0 0.0
    %2122 = vmatpush2.msra.mxu0 0.0
    %2123 = vmatprep.subr.mxu0 0.0
    %2124 = vmatpush2.msra.mxu0 0.0
    %2125 = vmatprep.mubr.f32.mxu0 0.0
    %2126 = vmatmul.mubr.f32.gmra.mxu0 %v2056
    %v2127 = vpop.f32.mrf.mxu0
    %v2128 = vadd.f32 %v2047, %v2127
    %v2129 = vpop.f32.mrf.mxu0
    %v2130 = vadd.f32 %v2051, %v2129
    %2131 = vmatprep.mubr.f32.mxu0 0.0
    %2132 = vmatmul.mubr.f32.gmra.mxu0 %v2059
    %v2133 = vpop.f32.mrf.mxu0
    %v2134 = vadd.f32 %v2047, %v2133
    %v2135 = vpop.f32.mrf.mxu0
    %v2136 = vadd.f32 %v2051, %v2135
    %2137 = vdwg.mxu0
    %2138 = vst [vmem:[#allocation2] sm:$0xff] %v2128
    %2139 = vst [vmem:[#allocation2 + $0x8] sm:$0xff] %v2130
    %2140 = vst [vmem:[#allocation2 + $0x10] sm:$0xff] %v2134
    %2141 = vst [vmem:[#allocation2 + $0x18] sm:$0xff] %v2136
    %v2142 = vld [vmem:[#allocation9] sm:$0xff]
    %v2143 = vld [vmem:[#allocation9 + $0x8] sm:$0xff]
    %v2144 = vld [vmem:[#allocation9 + $0x10] sm:$0xff]
    %v2145 = vld [vmem:[#allocation9 + $0x18] sm:$0xff]
    %v2146 = vld [vmem:[#allocation11] sm:$0xff]
    %v2147 = vld [vmem:[#allocation11 + $0x8] sm:$0xff]
    %v2148 = vld [vmem:[#allocation11 + $0x10] sm:$0xff]
    %v2149 = vld [vmem:[#allocation11 + $0x18] sm:$0xff]
    %v2150 = vld [vmem:[#allocation2] sm:$0x3]
    %2151 = vmatprep.subr.mxu0 0.0
    %2152 = vmatpush1.msra.mxu0 0.0
    %2153 = vmatprep.subr.mxu0 0.0
    %2154 = vmatpush1.msra.mxu0 0.0
    %2155 = vmatprep.subr.mxu0 0.0
    %2156 = vmatpush1.msra.mxu0 0.0
    %2157 = vmatprep.subr.mxu0 0.0
    %2158 = vmatpush1.msra.mxu0 0.0
    %2159 = vmatprep.subr.mxu0 0.0
    %2160 = vmatpush1.msra.mxu0 0.0
    %2161 = vmatprep.subr.mxu0 0.0
    %2162 = vmatpush1.msra.mxu0 0.0
    %2163 = vmatprep.subr.mxu0 0.0
    %2164 = vmatpush1.msra.mxu0 0.0
    %2165 = vmatprep.subr.mxu0 0.0
    %2166 = vmatpush1.msra.mxu0 0.0
    %2167 = vmatprep.subr.mxu0 0.0
    %2168 = vmatpush1.msra.mxu0 0.0
    %2169 = vmatprep.subr.mxu0 0.0
    %2170 = vmatpush1.msra.mxu0 0.0
    %2171 = vmatprep.subr.mxu0 0.0
    %2172 = vmatpush1.msra.mxu0 0.0
    %2173 = vmatprep.subr.mxu0 0.0
    %2174 = vmatpush1.msra.mxu0 0.0
    %2175 = vmatprep.subr.mxu0 0.0
    %2176 = vmatpush1.msra.mxu0 %v2145
    %2177 = vmatprep.subr.mxu0 0.0
    %2178 = vmatpush1.msra.mxu0 %v2144
    %2179 = vmatprep.subr.mxu0 0.0
    %2180 = vmatpush1.msra.mxu0 %v2143
    %2181 = vmatprep.subr.mxu0 0.0
    %2182 = vmatpush1.msra.mxu0 %v2142
    %2183 = vmatprep.subr.mxu0 0.0
    %2184 = vmatpush2.msra.mxu0 0.0
    %2185 = vmatprep.subr.mxu0 0.0
    %2186 = vmatpush2.msra.mxu0 0.0
    %2187 = vmatprep.subr.mxu0 0.0
    %2188 = vmatpush2.msra.mxu0 0.0
    %2189 = vmatprep.subr.mxu0 0.0
    %2190 = vmatpush2.msra.mxu0 0.0
    %2191 = vmatprep.subr.mxu0 0.0
    %2192 = vmatpush2.msra.mxu0 0.0
    %2193 = vmatprep.subr.mxu0 0.0
    %2194 = vmatpush2.msra.mxu0 0.0
    %2195 = vmatprep.subr.mxu0 0.0
    %2196 = vmatpush2.msra.mxu0 0.0
    %2197 = vmatprep.subr.mxu0 0.0
    %2198 = vmatpush2.msra.mxu0 0.0
    %2199 = vmatprep.subr.mxu0 0.0
    %2200 = vmatpush2.msra.mxu0 0.0
    %2201 = vmatprep.subr.mxu0 0.0
    %2202 = vmatpush2.msra.mxu0 0.0
    %2203 = vmatprep.subr.mxu0 0.0
    %2204 = vmatpush2.msra.mxu0 0.0
    %2205 = vmatprep.subr.mxu0 0.0
    %2206 = vmatpush2.msra.mxu0 0.0
    %2207 = vmatprep.subr.mxu0 0.0
    %2208 = vmatpush2.msra.mxu0 0.0
    %2209 = vmatprep.subr.mxu0 0.0
    %2210 = vmatpush2.msra.mxu0 0.0
    %2211 = vmatprep.subr.mxu0 0.0
    %2212 = vmatpush2.msra.mxu0 0.0
    %2213 = vmatprep.subr.mxu0 0.0
    %2214 = vmatpush2.msra.mxu0 0.0
    %2215 = vmatprep.mubr.f32.mxu0 0.0
    %2216 = vmatmul.mubr.f32.gmra.mxu0 %v242
    %v2217 = vpop.f32.mrf.mxu0
    %v2218 = vadd.f32 0.0, %v2217
    %v2219 = vpop.f32.mrf.mxu0
    %2220 = vdwg.mxu0
    %v2221 = vadd.f32 %v2150, %v2218
    %v2222 = vld [vmem:[#allocation2 + $0x18] sm:$0xc0]
    %2223 = vmatprep.subr.mxu0 0.0
    %2224 = vmatpush1.msra.mxu0 0.0
    %2225 = vmatprep.subr.mxu0 0.0
    %2226 = vmatpush1.msra.mxu0 0.0
    %2227 = vmatprep.subr.mxu0 0.0
    %2228 = vmatpush1.msra.mxu0 0.0
    %2229 = vmatprep.subr.mxu0 0.0
    %2230 = vmatpush1.msra.mxu0 0.0
    %2231 = vmatprep.subr.mxu0 0.0
    %2232 = vmatpush1.msra.mxu0 0.0
    %2233 = vmatprep.subr.mxu0 0.0
    %2234 = vmatpush1.msra.mxu0 0.0
    %2235 = vmatprep.subr.mxu0 0.0
    %2236 = vmatpush1.msra.mxu0 0.0
    %2237 = vmatprep.subr.mxu0 0.0
    %2238 = vmatpush1.msra.mxu0 0.0
    %2239 = vmatprep.subr.mxu0 0.0
    %2240 = vmatpush1.msra.mxu0 0.0
    %2241 = vmatprep.subr.mxu0 0.0
    %2242 = vmatpush1.msra.mxu0 0.0
    %2243 = vmatprep.subr.mxu0 0.0
    %2244 = vmatpush1.msra.mxu0 0.0
    %2245 = vmatprep.subr.mxu0 0.0
    %2246 = vmatpush1.msra.mxu0 0.0
    %2247 = vmatprep.subr.mxu0 0.0
    %2248 = vmatpush1.msra.mxu0 %v2149
    %2249 = vmatprep.subr.mxu0 0.0
    %2250 = vmatpush1.msra.mxu0 %v2148
    %2251 = vmatprep.subr.mxu0 0.0
    %2252 = vmatpush1.msra.mxu0 %v2147
    %2253 = vmatprep.subr.mxu0 0.0
    %2254 = vmatpush1.msra.mxu0 %v2146
    %2255 = vmatprep.subr.mxu0 0.0
    %2256 = vmatpush2.msra.mxu0 0.0
    %2257 = vmatprep.subr.mxu0 0.0
    %2258 = vmatpush2.msra.mxu0 0.0
    %2259 = vmatprep.subr.mxu0 0.0
    %2260 = vmatpush2.msra.mxu0 0.0
    %2261 = vmatprep.subr.mxu0 0.0
    %2262 = vmatpush2.msra.mxu0 0.0
    %2263 = vmatprep.subr.mxu0 0.0
    %2264 = vmatpush2.msra.mxu0 0.0
    %2265 = vmatprep.subr.mxu0 0.0
    %2266 = vmatpush2.msra.mxu0 0.0
    %2267 = vmatprep.subr.mxu0 0.0
    %2268 = vmatpush2.msra.mxu0 0.0
    %2269 = vmatprep.subr.mxu0 0.0
    %2270 = vmatpush2.msra.mxu0 0.0
    %2271 = vmatprep.subr.mxu0 0.0
    %2272 = vmatpush2.msra.mxu0 0.0
    %2273 = vmatprep.subr.mxu0 0.0
    %2274 = vmatpush2.msra.mxu0 0.0
    %2275 = vmatprep.subr.mxu0 0.0
    %2276 = vmatpush2.msra.mxu0 0.0
    %2277 = vmatprep.subr.mxu0 0.0
    %2278 = vmatpush2.msra.mxu0 0.0
    %2279 = vmatprep.subr.mxu0 0.0
    %2280 = vmatpush2.msra.mxu0 0.0
    %2281 = vmatprep.subr.mxu0 0.0
    %2282 = vmatpush2.msra.mxu0 0.0
    %2283 = vmatprep.subr.mxu0 0.0
    %2284 = vmatpush2.msra.mxu0 0.0
    %2285 = vmatprep.subr.mxu0 0.0
    %2286 = vmatpush2.msra.mxu0 0.0
    %2287 = vmatprep.mubr.f32.mxu0 0.0
    %2288 = vmatmul.mubr.f32.gmra.mxu0 %v242
    %v2289 = vpop.f32.mrf.mxu0
    %v2290 = vadd.f32 0.0, %v2289
    %v2291 = vpop.f32.mrf.mxu0
    %2292 = vdwg.mxu0
    %v2294 = vrot.slane %v2290, 2
    %v2296 = vadd.f32 %v2222, %v2294
    %v2297 = vtanh.pop %v2221
    %v2298 = vxor.u32 %v2221, 2147483648
    %v2299 = vmul.f32 %v2298, 1.442695
    %v2300 = vpow.pop %v2299
    %v2301 = vadd.f32 %v2300, 1.0
    %v2302 = vrcp.pop %v2301
    %v2303 = vmul.f32 1.0, %v2302
    %v2304 = vsel %vm124, %v2297, %v2303
    %v2305 = vtanh.pop %v2296
    %v2306 = vxor.u32 %v2296, 2147483648
    %v2307 = vmul.f32 %v2306, 1.442695
    %v2308 = vpow.pop %v2307
    %v2309 = vadd.f32 %v2308, 1.0
    %v2310 = vrcp.pop %v2309
    %v2311 = vmul.f32 1.0, %v2310
    %v2312 = vsel %vm124, %v2305, %v2311
    %v2313 = vmul.f32 %v2304, 0.0
    %2315 = vrot.lane.b32.xlu0 %v2304, 64
    %v2316 = vpop.permute.xlu0 %2315
    %v2318 = vmul.f32 %v2304, %v2316
    %2320 = vrot.lane.b32.xlu0 %v2318, 32
    %v2321 = vpop.permute.xlu0 %2320
    %v2323 = vadd.f32 %v2313, %v2321
    %v2324 = vmul.f32 %v2312, 0.0
    %2326 = vrot.lane.b32.xlu0 %v2312, 64
    %v2327 = vpop.permute.xlu0 %2326
    %v2329 = vmul.f32 %v2312, %v2327
    %2331 = vrot.lane.b32.xlu0 %v2329, 32
    %v2332 = vpop.permute.xlu0 %2331
    %v2334 = vadd.f32 %v2324, %v2332
    %v2335 = vtanh.pop %v2323
    %2337 = vrot.lane.b32.xlu0 %v2335, 64
    %v2338 = vpop.permute.xlu0 %2337
    %v2340 = vmul.f32 %v2304, %v2338
    %v2341 = vtanh.pop %v2334
    %2343 = vrot.lane.b32.xlu0 %v2341, 64
    %v2344 = vpop.permute.xlu0 %2343
    %v2346 = vmul.f32 %v2312, %v2344
    %2348 = vrot.lane.b32.xlu0 %v2340, 32
    %v2349 = vpop.permute.xlu0 %2348
    %2351 = vst.msk [vmem:[#allocation3] sm:$0x3] %vm444, %v2349
    %2353 = vrot.lane.b32.xlu0 %v2346, 64
    %v2354 = vpop.permute.xlu0 %2353
    %2356 = vst.msk [vmem:[#allocation3 + $0x8] sm:$0xc0] %vm450, %v2354
    %v2357 = vld [vmem:[#allocation2] sm:$0xc]
    %v2358 = vsel %vm240, %v2349, 0
    %2360 = vmatprep.subr.mxu0 0.0
    %2361 = vmatpush1.msra.mxu0 0.0
    %2362 = vmatprep.subr.mxu0 0.0
    %2363 = vmatpush1.msra.mxu0 0.0
    %2364 = vmatprep.subr.mxu0 0.0
    %2365 = vmatpush1.msra.mxu0 0.0
    %2366 = vmatprep.subr.mxu0 0.0
    %2367 = vmatpush1.msra.mxu0 0.0
    %2368 = vmatprep.subr.mxu0 0.0
    %2369 = vmatpush1.msra.mxu0 0.0
    %2370 = vmatprep.subr.mxu0 0.0
    %2371 = vmatpush1.msra.mxu0 0.0
    %2372 = vmatprep.subr.mxu0 0.0
    %2373 = vmatpush1.msra.mxu0 0.0
    %2374 = vmatprep.subr.mxu0 0.0
    %2375 = vmatpush1.msra.mxu0 0.0
    %2376 = vmatprep.subr.mxu0 0.0
    %2377 = vmatpush1.msra.mxu0 0.0
    %2378 = vmatprep.subr.mxu0 0.0
    %2379 = vmatpush1.msra.mxu0 0.0
    %2380 = vmatprep.subr.mxu0 0.0
    %2381 = vmatpush1.msra.mxu0 0.0
    %2382 = vmatprep.subr.mxu0 0.0
    %2383 = vmatpush1.msra.mxu0 0.0
    %2384 = vmatprep.subr.mxu0 0.0
    %2385 = vmatpush1.msra.mxu0 %v2145
    %2386 = vmatprep.subr.mxu0 0.0
    %2387 = vmatpush1.msra.mxu0 %v2144
    %2388 = vmatprep.subr.mxu0 0.0
    %2389 = vmatpush1.msra.mxu0 %v2143
    %2390 = vmatprep.subr.mxu0 0.0
    %2391 = vmatpush1.msra.mxu0 %v2142
    %2392 = vmatprep.subr.mxu0 0.0
    %2393 = vmatpush2.msra.mxu0 0.0
    %2394 = vmatprep.subr.mxu0 0.0
    %2395 = vmatpush2.msra.mxu0 0.0
    %2396 = vmatprep.subr.mxu0 0.0
    %2397 = vmatpush2.msra.mxu0 0.0
    %2398 = vmatprep.subr.mxu0 0.0
    %2399 = vmatpush2.msra.mxu0 0.0
    %2400 = vmatprep.subr.mxu0 0.0
    %2401 = vmatpush2.msra.mxu0 0.0
    %2402 = vmatprep.subr.mxu0 0.0
    %2403 = vmatpush2.msra.mxu0 0.0
    %2404 = vmatprep.subr.mxu0 0.0
    %2405 = vmatpush2.msra.mxu0 0.0
    %2406 = vmatprep.subr.mxu0 0.0
    %2407 = vmatpush2.msra.mxu0 0.0
    %2408 = vmatprep.subr.mxu0 0.0
    %2409 = vmatpush2.msra.mxu0 0.0
    %2410 = vmatprep.subr.mxu0 0.0
    %2411 = vmatpush2.msra.mxu0 0.0
    %2412 = vmatprep.subr.mxu0 0.0
    %2413 = vmatpush2.msra.mxu0 0.0
    %2414 = vmatprep.subr.mxu0 0.0
    %2415 = vmatpush2.msra.mxu0 0.0
    %2416 = vmatprep.subr.mxu0 0.0
    %2417 = vmatpush2.msra.mxu0 0.0
    %2418 = vmatprep.subr.mxu0 0.0
    %2419 = vmatpush2.msra.mxu0 0.0
    %2420 = vmatprep.subr.mxu0 0.0
    %2421 = vmatpush2.msra.mxu0 0.0
    %2422 = vmatprep.subr.mxu0 0.0
    %2423 = vmatpush2.msra.mxu0 0.0
    %2424 = vmatprep.mubr.f32.mxu0 0.0
    %2425 = vmatmul.mubr.f32.gmra.mxu0 %v2358
    %v2426 = vpop.f32.mrf.mxu0
    %v2427 = vadd.f32 0.0, %v2426
    %v2428 = vpop.f32.mrf.mxu0
    %2429 = vdwg.mxu0
    %v2431 = vrot.slane %v2427, 6
    %v2433 = vadd.f32 %v2357, %v2431
    %v2434 = vld [vmem:[#allocation2 + $0x18] sm:$0x30]
    %v2435 = vrot.slane %v2346, 6
    %2436 = vrot.lane.b32.xlu0 %v2435, 32
    %v2437 = vpop.permute.xlu0 %2436
    %v2438 = vsel %vm240, %v2437, 0
    %2440 = vmatprep.subr.mxu0 0.0
    %2441 = vmatpush1.msra.mxu0 0.0
    %2442 = vmatprep.subr.mxu0 0.0
    %2443 = vmatpush1.msra.mxu0 0.0
    %2444 = vmatprep.subr.mxu0 0.0
    %2445 = vmatpush1.msra.mxu0 0.0
    %2446 = vmatprep.subr.mxu0 0.0
    %2447 = vmatpush1.msra.mxu0 0.0
    %2448 = vmatprep.subr.mxu0 0.0
    %2449 = vmatpush1.msra.mxu0 0.0
    %2450 = vmatprep.subr.mxu0 0.0
    %2451 = vmatpush1.msra.mxu0 0.0
    %2452 = vmatprep.subr.mxu0 0.0
    %2453 = vmatpush1.msra.mxu0 0.0
    %2454 = vmatprep.subr.mxu0 0.0
    %2455 = vmatpush1.msra.mxu0 0.0
    %2456 = vmatprep.subr.mxu0 0.0
    %2457 = vmatpush1.msra.mxu0 0.0
    %2458 = vmatprep.subr.mxu0 0.0
    %2459 = vmatpush1.msra.mxu0 0.0
    %2460 = vmatprep.subr.mxu0 0.0
    %2461 = vmatpush1.msra.mxu0 0.0
    %2462 = vmatprep.subr.mxu0 0.0
    %2463 = vmatpush1.msra.mxu0 0.0
    %2464 = vmatprep.subr.mxu0 0.0
    %2465 = vmatpush1.msra.mxu0 %v2149
    %2466 = vmatprep.subr.mxu0 0.0
    %2467 = vmatpush1.msra.mxu0 %v2148
    %2468 = vmatprep.subr.mxu0 0.0
    %2469 = vmatpush1.msra.mxu0 %v2147
    %2470 = vmatprep.subr.mxu0 0.0
    %2471 = vmatpush1.msra.mxu0 %v2146
    %2472 = vmatprep.subr.mxu0 0.0
    %2473 = vmatpush2.msra.mxu0 0.0
    %2474 = vmatprep.subr.mxu0 0.0
    %2475 = vmatpush2.msra.mxu0 0.0
    %2476 = vmatprep.subr.mxu0 0.0
    %2477 = vmatpush2.msra.mxu0 0.0
    %2478 = vmatprep.subr.mxu0 0.0
    %2479 = vmatpush2.msra.mxu0 0.0
    %2480 = vmatprep.subr.mxu0 0.0
    %2481 = vmatpush2.msra.mxu0 0.0
    %2482 = vmatprep.subr.mxu0 0.0
    %2483 = vmatpush2.msra.mxu0 0.0
    %2484 = vmatprep.subr.mxu0 0.0
    %2485 = vmatpush2.msra.mxu0 0.0
    %2486 = vmatprep.subr.mxu0 0.0
    %2487 = vmatpush2.msra.mxu0 0.0
    %2488 = vmatprep.subr.mxu0 0.0
    %2489 = vmatpush2.msra.mxu0 0.0
    %2490 = vmatprep.subr.mxu0 0.0
    %2491 = vmatpush2.msra.mxu0 0.0
    %2492 = vmatprep.subr.mxu0 0.0
    %2493 = vmatpush2.msra.mxu0 0.0
    %2494 = vmatprep.subr.mxu0 0.0
    %2495 = vmatpush2.msra.mxu0 0.0
    %2496 = vmatprep.subr.mxu0 0.0
    %2497 = vmatpush2.msra.mxu0 0.0
    %2498 = vmatprep.subr.mxu0 0.0
    %2499 = vmatpush2.msra.mxu0 0.0
    %2500 = vmatprep.subr.mxu0 0.0
    %2501 = vmatpush2.msra.mxu0 0.0
    %2502 = vmatprep.subr.mxu0 0.0
    %2503 = vmatpush2.msra.mxu0 0.0
    %2504 = vmatprep.mubr.f32.mxu0 0.0
    %2505 = vmatmul.mubr.f32.gmra.mxu0 %v2438
    %v2506 = vpop.f32.mrf.mxu0
    %v2507 = vadd.f32 0.0, %v2506
    %v2508 = vpop.f32.mrf.mxu0
    %2509 = vdwg.mxu0
    %v2511 = vrot.slane %v2507, 4
    %v2513 = vadd.f32 %v2434, %v2511
    %v2514 = vtanh.pop %v2433
    %v2515 = vxor.u32 %v2433, 2147483648
    %v2516 = vmul.f32 %v2515, 1.442695
    %v2517 = vpow.pop %v2516
    %v2518 = vadd.f32 %v2517, 1.0
    %v2519 = vrcp.pop %v2518
    %v2520 = vmul.f32 1.0, %v2519
    %v2521 = vsel %vm124, %v2514, %v2520
    %v2522 = vtanh.pop %v2513
    %v2523 = vxor.u32 %v2513, 2147483648
    %v2524 = vmul.f32 %v2523, 1.442695
    %v2525 = vpow.pop %v2524
    %v2526 = vadd.f32 %v2525, 1.0
    %v2527 = vrcp.pop %v2526
    %v2528 = vmul.f32 1.0, %v2527
    %v2529 = vsel %vm124, %v2522, %v2528
    %v2531 = vrot.slane %v2323, 6
    %v2533 = vmul.f32 %v2521, %v2531
    %2535 = vrot.lane.b32.xlu0 %v2521, 64
    %v2536 = vpop.permute.xlu0 %2535
    %v2538 = vmul.f32 %v2521, %v2536
    %2540 = vrot.lane.b32.xlu0 %v2538, 32
    %v2541 = vpop.permute.xlu0 %2540
    %v2543 = vadd.f32 %v2533, %v2541
    %v2545 = vrot.slane %v2334, 2
    %v2547 = vmul.f32 %v2529, %v2545
    %2549 = vrot.lane.b32.xlu0 %v2529, 64
    %v2550 = vpop.permute.xlu0 %2549
    %v2552 = vmul.f32 %v2529, %v2550
    %2554 = vrot.lane.b32.xlu0 %v2552, 32
    %v2555 = vpop.permute.xlu0 %2554
    %v2557 = vadd.f32 %v2547, %v2555
    %v2558 = vtanh.pop %v2543
    %2560 = vrot.lane.b32.xlu0 %v2558, 64
    %v2561 = vpop.permute.xlu0 %2560
    %v2563 = vmul.f32 %v2521, %v2561
    %v2564 = vtanh.pop %v2557
    %2566 = vrot.lane.b32.xlu0 %v2564, 64
    %v2567 = vpop.permute.xlu0 %2566
    %v2569 = vmul.f32 %v2529, %v2567
    %2571 = vrot.lane.b32.xlu0 %v2563, 32
    %v2572 = vpop.permute.xlu0 %2571
    %2574 = vst.msk [vmem:[#allocation3] sm:$0xc] %vm669, %v2572
    %2576 = vrot.lane.b32.xlu0 %v2569, 64
    %v2577 = vpop.permute.xlu0 %2576
    %2579 = vst.msk [vmem:[#allocation3 + $0x8] sm:$0x30] %vm675, %v2577
    %v2580 = vld [vmem:[#allocation2] sm:$0x30]
    %v2581 = vrot.slane %v2563, 2
    %2582 = vrot.lane.b32.xlu0 %v2581, 32
    %v2583 = vpop.permute.xlu0 %2582
    %v2584 = vsel %vm240, %v2583, 0
    %2586 = vmatprep.subr.mxu0 0.0
    %2587 = vmatpush1.msra.mxu0 0.0
    %2588 = vmatprep.subr.mxu0 0.0
    %2589 = vmatpush1.msra.mxu0 0.0
    %2590 = vmatprep.subr.mxu0 0.0
    %2591 = vmatpush1.msra.mxu0 0.0
    %2592 = vmatprep.subr.mxu0 0.0
    %2593 = vmatpush1.msra.mxu0 0.0
    %2594 = vmatprep.subr.mxu0 0.0
    %2595 = vmatpush1.msra.mxu0 0.0
    %2596 = vmatprep.subr.mxu0 0.0
    %2597 = vmatpush1.msra.mxu0 0.0
    %2598 = vmatprep.subr.mxu0 0.0
    %2599 = vmatpush1.msra.mxu0 0.0
    %2600 = vmatprep.subr.mxu0 0.0
    %2601 = vmatpush1.msra.mxu0 0.0
    %2602 = vmatprep.subr.mxu0 0.0
    %2603 = vmatpush1.msra.mxu0 0.0
    %2604 = vmatprep.subr.mxu0 0.0
    %2605 = vmatpush1.msra.mxu0 0.0
    %2606 = vmatprep.subr.mxu0 0.0
    %2607 = vmatpush1.msra.mxu0 0.0
    %2608 = vmatprep.subr.mxu0 0.0
    %2609 = vmatpush1.msra.mxu0 0.0
    %2610 = vmatprep.subr.mxu0 0.0
    %2611 = vmatpush1.msra.mxu0 %v2145
    %2612 = vmatprep.subr.mxu0 0.0
    %2613 = vmatpush1.msra.mxu0 %v2144
    %2614 = vmatprep.subr.mxu0 0.0
    %2615 = vmatpush1.msra.mxu0 %v2143
    %2616 = vmatprep.subr.mxu0 0.0
    %2617 = vmatpush1.msra.mxu0 %v2142
    %2618 = vmatprep.subr.mxu0 0.0
    %2619 = vmatpush2.msra.mxu0 0.0
    %2620 = vmatprep.subr.mxu0 0.0
    %2621 = vmatpush2.msra.mxu0 0.0
    %2622 = vmatprep.subr.mxu0 0.0
    %2623 = vmatpush2.msra.mxu0 0.0
    %2624 = vmatprep.subr.mxu0 0.0
    %2625 = vmatpush2.msra.mxu0 0.0
    %2626 = vmatprep.subr.mxu0 0.0
    %2627 = vmatpush2.msra.mxu0 0.0
    %2628 = vmatprep.subr.mxu0 0.0
    %2629 = vmatpush2.msra.mxu0 0.0
    %2630 = vmatprep.subr.mxu0 0.0
    %2631 = vmatpush2.msra.mxu0 0.0
    %2632 = vmatprep.subr.mxu0 0.0
    %2633 = vmatpush2.msra.mxu0 0.0
    %2634 = vmatprep.subr.mxu0 0.0
    %2635 = vmatpush2.msra.mxu0 0.0
    %2636 = vmatprep.subr.mxu0 0.0
    %2637 = vmatpush2.msra.mxu0 0.0
    %2638 = vmatprep.subr.mxu0 0.0
    %2639 = vmatpush2.msra.mxu0 0.0
    %2640 = vmatprep.subr.mxu0 0.0
    %2641 = vmatpush2.msra.mxu0 0.0
    %2642 = vmatprep.subr.mxu0 0.0
    %2643 = vmatpush2.msra.mxu0 0.0
    %2644 = vmatprep.subr.mxu0 0.0
    %2645 = vmatpush2.msra.mxu0 0.0
    %2646 = vmatprep.subr.mxu0 0.0
    %2647 = vmatpush2.msra.mxu0 0.0
    %2648 = vmatprep.subr.mxu0 0.0
    %2649 = vmatpush2.msra.mxu0 0.0
    %2650 = vmatprep.mubr.f32.mxu0 0.0
    %2651 = vmatmul.mubr.f32.gmra.mxu0 %v2584
    %v2652 = vpop.f32.mrf.mxu0
    %v2653 = vadd.f32 0.0, %v2652
    %v2654 = vpop.f32.mrf.mxu0
    %2655 = vdwg.mxu0
    %v2657 = vrot.slane %v2653, 4
    %v2659 = vadd.f32 %v2580, %v2657
    %v2660 = vld [vmem:[#allocation2 + $0x18] sm:$0xc]
    %v2661 = vrot.slane %v2569, 4
    %2662 = vrot.lane.b32.xlu0 %v2661, 32
    %v2663 = vpop.permute.xlu0 %2662
    %v2664 = vsel %vm240, %v2663, 0
    %2666 = vmatprep.subr.mxu0 0.0
    %2667 = vmatpush1.msra.mxu0 0.0
    %2668 = vmatprep.subr.mxu0 0.0
    %2669 = vmatpush1.msra.mxu0 0.0
    %2670 = vmatprep.subr.mxu0 0.0
    %2671 = vmatpush1.msra.mxu0 0.0
    %2672 = vmatprep.subr.mxu0 0.0
    %2673 = vmatpush1.msra.mxu0 0.0
    %2674 = vmatprep.subr.mxu0 0.0
    %2675 = vmatpush1.msra.mxu0 0.0
    %2676 = vmatprep.subr.mxu0 0.0
    %2677 = vmatpush1.msra.mxu0 0.0
    %2678 = vmatprep.subr.mxu0 0.0
    %2679 = vmatpush1.msra.mxu0 0.0
    %2680 = vmatprep.subr.mxu0 0.0
    %2681 = vmatpush1.msra.mxu0 0.0
    %2682 = vmatprep.subr.mxu0 0.0
    %2683 = vmatpush1.msra.mxu0 0.0
    %2684 = vmatprep.subr.mxu0 0.0
    %2685 = vmatpush1.msra.mxu0 0.0
    %2686 = vmatprep.subr.mxu0 0.0
    %2687 = vmatpush1.msra.mxu0 0.0
    %2688 = vmatprep.subr.mxu0 0.0
    %2689 = vmatpush1.msra.mxu0 0.0
    %2690 = vmatprep.subr.mxu0 0.0
    %2691 = vmatpush1.msra.mxu0 %v2149
    %2692 = vmatprep.subr.mxu0 0.0
    %2693 = vmatpush1.msra.mxu0 %v2148
    %2694 = vmatprep.subr.mxu0 0.0
    %2695 = vmatpush1.msra.mxu0 %v2147
    %2696 = vmatprep.subr.mxu0 0.0
    %2697 = vmatpush1.msra.mxu0 %v2146
    %2698 = vmatprep.subr.mxu0 0.0
    %2699 = vmatpush2.msra.mxu0 0.0
    %2700 = vmatprep.subr.mxu0 0.0
    %2701 = vmatpush2.msra.mxu0 0.0
    %2702 = vmatprep.subr.mxu0 0.0
    %2703 = vmatpush2.msra.mxu0 0.0
    %2704 = vmatprep.subr.mxu0 0.0
    %2705 = vmatpush2.msra.mxu0 0.0
    %2706 = vmatprep.subr.mxu0 0.0
    %2707 = vmatpush2.msra.mxu0 0.0
    %2708 = vmatprep.subr.mxu0 0.0
    %2709 = vmatpush2.msra.mxu0 0.0
    %2710 = vmatprep.subr.mxu0 0.0
    %2711 = vmatpush2.msra.mxu0 0.0
    %2712 = vmatprep.subr.mxu0 0.0
    %2713 = vmatpush2.msra.mxu0 0.0
    %2714 = vmatprep.subr.mxu0 0.0
    %2715 = vmatpush2.msra.mxu0 0.0
    %2716 = vmatprep.subr.mxu0 0.0
    %2717 = vmatpush2.msra.mxu0 0.0
    %2718 = vmatprep.subr.mxu0 0.0
    %2719 = vmatpush2.msra.mxu0 0.0
    %2720 = vmatprep.subr.mxu0 0.0
    %2721 = vmatpush2.msra.mxu0 0.0
    %2722 = vmatprep.subr.mxu0 0.0
    %2723 = vmatpush2.msra.mxu0 0.0
    %2724 = vmatprep.subr.mxu0 0.0
    %2725 = vmatpush2.msra.mxu0 0.0
    %2726 = vmatprep.subr.mxu0 0.0
    %2727 = vmatpush2.msra.mxu0 0.0
    %2728 = vmatprep.subr.mxu0 0.0
    %2729 = vmatpush2.msra.mxu0 0.0
    %2730 = vmatprep.mubr.f32.mxu0 0.0
    %2731 = vmatmul.mubr.f32.gmra.mxu0 %v2664
    %v2732 = vpop.f32.mrf.mxu0
    %v2733 = vadd.f32 0.0, %v2732
    %v2734 = vpop.f32.mrf.mxu0
    %2735 = vdwg.mxu0
    %v2737 = vrot.slane %v2733, 6
    %v2739 = vadd.f32 %v2660, %v2737
    %v2740 = vtanh.pop %v2659
    %v2741 = vxor.u32 %v2659, 2147483648
    %v2742 = vmul.f32 %v2741, 1.442695
    %v2743 = vpow.pop %v2742
    %v2744 = vadd.f32 %v2743, 1.0
    %v2745 = vrcp.pop %v2744
    %v2746 = vmul.f32 1.0, %v2745
    %v2747 = vsel %vm124, %v2740, %v2746
    %v2748 = vtanh.pop %v2739
    %v2749 = vxor.u32 %v2739, 2147483648
    %v2750 = vmul.f32 %v2749, 1.442695
    %v2751 = vpow.pop %v2750
    %v2752 = vadd.f32 %v2751, 1.0
    %v2753 = vrcp.pop %v2752
    %v2754 = vmul.f32 1.0, %v2753
    %v2755 = vsel %vm124, %v2748, %v2754
    %v2757 = vrot.slane %v2543, 6
    %v2759 = vmul.f32 %v2747, %v2757
    %2761 = vrot.lane.b32.xlu0 %v2747, 64
    %v2762 = vpop.permute.xlu0 %2761
    %v2764 = vmul.f32 %v2747, %v2762
    %2766 = vrot.lane.b32.xlu0 %v2764, 32
    %v2767 = vpop.permute.xlu0 %2766
    %v2769 = vadd.f32 %v2759, %v2767
    %v2771 = vrot.slane %v2557, 2
    %v2773 = vmul.f32 %v2755, %v2771
    %2775 = vrot.lane.b32.xlu0 %v2755, 64
    %v2776 = vpop.permute.xlu0 %2775
    %v2778 = vmul.f32 %v2755, %v2776
    %2780 = vrot.lane.b32.xlu0 %v2778, 32
    %v2781 = vpop.permute.xlu0 %2780
    %v2783 = vadd.f32 %v2773, %v2781
    %v2784 = vtanh.pop %v2769
    %2786 = vrot.lane.b32.xlu0 %v2784, 64
    %v2787 = vpop.permute.xlu0 %2786
    %v2789 = vmul.f32 %v2747, %v2787
    %v2790 = vtanh.pop %v2783
    %2792 = vrot.lane.b32.xlu0 %v2790, 64
    %v2793 = vpop.permute.xlu0 %2792
    %v2795 = vmul.f32 %v2755, %v2793
    %2797 = vrot.lane.b32.xlu0 %v2789, 32
    %v2798 = vpop.permute.xlu0 %2797
    %2800 = vst.msk [vmem:[#allocation3] sm:$0x30] %vm897, %v2798
    %2802 = vrot.lane.b32.xlu0 %v2795, 64
    %v2803 = vpop.permute.xlu0 %2802
    %2805 = vst.msk [vmem:[#allocation3 + $0x8] sm:$0xc] %vm903, %v2803
    %v2806 = vld [vmem:[#allocation2] sm:$0xc0]
    %v2807 = vrot.slane %v2789, 4
    %2808 = vrot.lane.b32.xlu0 %v2807, 32
    %v2809 = vpop.permute.xlu0 %2808
    %v2810 = vsel %vm240, %v2809, 0
    %2812 = vmatprep.subr.mxu0 0.0
    %2813 = vmatpush1.msra.mxu0 0.0
    %2814 = vmatprep.subr.mxu0 0.0
    %2815 = vmatpush1.msra.mxu0 0.0
    %2816 = vmatprep.subr.mxu0 0.0
    %2817 = vmatpush1.msra.mxu0 0.0
    %2818 = vmatprep.subr.mxu0 0.0
    %2819 = vmatpush1.msra.mxu0 0.0
    %2820 = vmatprep.subr.mxu0 0.0
    %2821 = vmatpush1.msra.mxu0 0.0
    %2822 = vmatprep.subr.mxu0 0.0
    %2823 = vmatpush1.msra.mxu0 0.0
    %2824 = vmatprep.subr.mxu0 0.0
    %2825 = vmatpush1.msra.mxu0 0.0
    %2826 = vmatprep.subr.mxu0 0.0
    %2827 = vmatpush1.msra.mxu0 0.0
    %2828 = vmatprep.subr.mxu0 0.0
    %2829 = vmatpush1.msra.mxu0 0.0
    %2830 = vmatprep.subr.mxu0 0.0
    %2831 = vmatpush1.msra.mxu0 0.0
    %2832 = vmatprep.subr.mxu0 0.0
    %2833 = vmatpush1.msra.mxu0 0.0
    %2834 = vmatprep.subr.mxu0 0.0
    %2835 = vmatpush1.msra.mxu0 0.0
    %2836 = vmatprep.subr.mxu0 0.0
    %2837 = vmatpush1.msra.mxu0 %v2145
    %2838 = vmatprep.subr.mxu0 0.0
    %2839 = vmatpush1.msra.mxu0 %v2144
    %2840 = vmatprep.subr.mxu0 0.0
    %2841 = vmatpush1.msra.mxu0 %v2143
    %2842 = vmatprep.subr.mxu0 0.0
    %2843 = vmatpush1.msra.mxu0 %v2142
    %2844 = vmatprep.subr.mxu0 0.0
    %2845 = vmatpush2.msra.mxu0 0.0
    %2846 = vmatprep.subr.mxu0 0.0
    %2847 = vmatpush2.msra.mxu0 0.0
    %2848 = vmatprep.subr.mxu0 0.0
    %2849 = vmatpush2.msra.mxu0 0.0
    %2850 = vmatprep.subr.mxu0 0.0
    %2851 = vmatpush2.msra.mxu0 0.0
    %2852 = vmatprep.subr.mxu0 0.0
    %2853 = vmatpush2.msra.mxu0 0.0
    %2854 = vmatprep.subr.mxu0 0.0
    %2855 = vmatpush2.msra.mxu0 0.0
    %2856 = vmatprep.subr.mxu0 0.0
    %2857 = vmatpush2.msra.mxu0 0.0
    %2858 = vmatprep.subr.mxu0 0.0
    %2859 = vmatpush2.msra.mxu0 0.0
    %2860 = vmatprep.subr.mxu0 0.0
    %2861 = vmatpush2.msra.mxu0 0.0
    %2862 = vmatprep.subr.mxu0 0.0
    %2863 = vmatpush2.msra.mxu0 0.0
    %2864 = vmatprep.subr.mxu0 0.0
    %2865 = vmatpush2.msra.mxu0 0.0
    %2866 = vmatprep.subr.mxu0 0.0
    %2867 = vmatpush2.msra.mxu0 0.0
    %2868 = vmatprep.subr.mxu0 0.0
    %2869 = vmatpush2.msra.mxu0 0.0
    %2870 = vmatprep.subr.mxu0 0.0
    %2871 = vmatpush2.msra.mxu0 0.0
    %2872 = vmatprep.subr.mxu0 0.0
    %2873 = vmatpush2.msra.mxu0 0.0
    %2874 = vmatprep.subr.mxu0 0.0
    %2875 = vmatpush2.msra.mxu0 0.0
    %2876 = vmatprep.mubr.f32.mxu0 0.0
    %2877 = vmatmul.mubr.f32.gmra.mxu0 %v2810
    %v2878 = vpop.f32.mrf.mxu0
    %v2879 = vadd.f32 0.0, %v2878
    %v2880 = vpop.f32.mrf.mxu0
    %2881 = vdwg.mxu0
    %v2883 = vrot.slane %v2879, 2
    %v2885 = vadd.f32 %v2806, %v2883
    %v2886 = vld [vmem:[#allocation2 + $0x18] sm:$0x3]
    %v2887 = vrot.slane %v2795, 2
    %2888 = vrot.lane.b32.xlu0 %v2887, 32
    %v2889 = vpop.permute.xlu0 %2888
    %v2890 = vsel %vm240, %v2889, 0
    %2892 = vmatprep.subr.mxu0 0.0
    %2893 = vmatpush1.msra.mxu0 0.0
    %2894 = vmatprep.subr.mxu0 0.0
    %2895 = vmatpush1.msra.mxu0 0.0
    %2896 = vmatprep.subr.mxu0 0.0
    %2897 = vmatpush1.msra.mxu0 0.0
    %2898 = vmatprep.subr.mxu0 0.0
    %2899 = vmatpush1.msra.mxu0 0.0
    %2900 = vmatprep.subr.mxu0 0.0
    %2901 = vmatpush1.msra.mxu0 0.0
    %2902 = vmatprep.subr.mxu0 0.0
    %2903 = vmatpush1.msra.mxu0 0.0
    %2904 = vmatprep.subr.mxu0 0.0
    %2905 = vmatpush1.msra.mxu0 0.0
    %2906 = vmatprep.subr.mxu0 0.0
    %2907 = vmatpush1.msra.mxu0 0.0
    %2908 = vmatprep.subr.mxu0 0.0
    %2909 = vmatpush1.msra.mxu0 0.0
    %2910 = vmatprep.subr.mxu0 0.0
    %2911 = vmatpush1.msra.mxu0 0.0
    %2912 = vmatprep.subr.mxu0 0.0
    %2913 = vmatpush1.msra.mxu0 0.0
    %2914 = vmatprep.subr.mxu0 0.0
    %2915 = vmatpush1.msra.mxu0 0.0
    %2916 = vmatprep.subr.mxu0 0.0
    %2917 = vmatpush1.msra.mxu0 %v2149
    %2918 = vmatprep.subr.mxu0 0.0
    %2919 = vmatpush1.msra.mxu0 %v2148
    %2920 = vmatprep.subr.mxu0 0.0
    %2921 = vmatpush1.msra.mxu0 %v2147
    %2922 = vmatprep.subr.mxu0 0.0
    %2923 = vmatpush1.msra.mxu0 %v2146
    %2924 = vmatprep.subr.mxu0 0.0
    %2925 = vmatpush2.msra.mxu0 0.0
    %2926 = vmatprep.subr.mxu0 0.0
    %2927 = vmatpush2.msra.mxu0 0.0
    %2928 = vmatprep.subr.mxu0 0.0
    %2929 = vmatpush2.msra.mxu0 0.0
    %2930 = vmatprep.subr.mxu0 0.0
    %2931 = vmatpush2.msra.mxu0 0.0
    %2932 = vmatprep.subr.mxu0 0.0
    %2933 = vmatpush2.msra.mxu0 0.0
    %2934 = vmatprep.subr.mxu0 0.0
    %2935 = vmatpush2.msra.mxu0 0.0
    %2936 = vmatprep.subr.mxu0 0.0
    %2937 = vmatpush2.msra.mxu0 0.0
    %2938 = vmatprep.subr.mxu0 0.0
    %2939 = vmatpush2.msra.mxu0 0.0
    %2940 = vmatprep.subr.mxu0 0.0
    %2941 = vmatpush2.msra.mxu0 0.0
    %2942 = vmatprep.subr.mxu0 0.0
    %2943 = vmatpush2.msra.mxu0 0.0
    %2944 = vmatprep.subr.mxu0 0.0
    %2945 = vmatpush2.msra.mxu0 0.0
    %2946 = vmatprep.subr.mxu0 0.0
    %2947 = vmatpush2.msra.mxu0 0.0
    %2948 = vmatprep.subr.mxu0 0.0
    %2949 = vmatpush2.msra.mxu0 0.0
    %2950 = vmatprep.subr.mxu0 0.0
    %2951 = vmatpush2.msra.mxu0 0.0
    %2952 = vmatprep.subr.mxu0 0.0
    %2953 = vmatpush2.msra.mxu0 0.0
    %2954 = vmatprep.subr.mxu0 0.0
    %2955 = vmatpush2.msra.mxu0 0.0
    %2956 = vmatprep.mubr.f32.mxu0 0.0
    %2957 = vmatmul.mubr.f32.gmra.mxu0 %v2890
    %v2958 = vpop.f32.mrf.mxu0
    %v2959 = vadd.f32 0.0, %v2958
    %v2960 = vpop.f32.mrf.mxu0
    %2961 = vdwg.mxu0
    %v2962 = vadd.f32 %v2886, %v2959
    %v2963 = vtanh.pop %v2885
    %v2964 = vxor.u32 %v2885, 2147483648
    %v2965 = vmul.f32 %v2964, 1.442695
    %v2966 = vpow.pop %v2965
    %v2967 = vadd.f32 %v2966, 1.0
    %v2968 = vrcp.pop %v2967
    %v2969 = vmul.f32 1.0, %v2968
    %v2970 = vsel %vm124, %v2963, %v2969
    %v2971 = vtanh.pop %v2962
    %v2972 = vxor.u32 %v2962, 2147483648
    %v2973 = vmul.f32 %v2972, 1.442695
    %v2974 = vpow.pop %v2973
    %v2975 = vadd.f32 %v2974, 1.0
    %v2976 = vrcp.pop %v2975
    %v2977 = vmul.f32 1.0, %v2976
    %v2978 = vsel %vm124, %v2971, %v2977
    %v2980 = vrot.slane %v2769, 6
    %v2982 = vmul.f32 %v2970, %v2980
    %2984 = vrot.lane.b32.xlu0 %v2970, 64
    %v2985 = vpop.permute.xlu0 %2984
    %v2987 = vmul.f32 %v2970, %v2985
    %2989 = vrot.lane.b32.xlu0 %v2987, 32
    %v2990 = vpop.permute.xlu0 %2989
    %v2992 = vadd.f32 %v2982, %v2990
    %v2994 = vrot.slane %v2783, 2
    %v2996 = vmul.f32 %v2978, %v2994
    %2998 = vrot.lane.b32.xlu0 %v2978, 64
    %v2999 = vpop.permute.xlu0 %2998
    %v3001 = vmul.f32 %v2978, %v2999
    %3003 = vrot.lane.b32.xlu0 %v3001, 32
    %v3004 = vpop.permute.xlu0 %3003
    %v3006 = vadd.f32 %v2996, %v3004
    %v3007 = vtanh.pop %v2992
    %3009 = vrot.lane.b32.xlu0 %v3007, 64
    %v3010 = vpop.permute.xlu0 %3009
    %v3012 = vmul.f32 %v2970, %v3010
    %v3013 = vtanh.pop %v3006
    %3015 = vrot.lane.b32.xlu0 %v3013, 64
    %v3016 = vpop.permute.xlu0 %3015
    %v3018 = vmul.f32 %v2978, %v3016
    %3020 = vrot.lane.b32.xlu0 %v3012, 32
    %v3021 = vpop.permute.xlu0 %3020
    %3023 = vst.msk [vmem:[#allocation3] sm:$0xc0] %vm1122, %v3021
    %3025 = vrot.lane.b32.xlu0 %v3018, 64
    %v3026 = vpop.permute.xlu0 %3025
    %3028 = vst.msk [vmem:[#allocation3 + $0x8] sm:$0x3] %vm1128, %v3026
    %v3029 = vld [vmem:[#allocation2 + $0x10] sm:$0x3]
    %v3030 = vrot.slane %v3012, 6
    %3031 = vrot.lane.b32.xlu0 %v3030, 32
    %v3032 = vpop.permute.xlu0 %3031
    %v3033 = vsel %vm240, %v3032, 0
    %3035 = vmatprep.subr.mxu0 0.0
    %3036 = vmatpush1.msra.mxu0 0.0
    %3037 = vmatprep.subr.mxu0 0.0
    %3038 = vmatpush1.msra.mxu0 0.0
    %3039 = vmatprep.subr.mxu0 0.0
    %3040 = vmatpush1.msra.mxu0 0.0
    %3041 = vmatprep.subr.mxu0 0.0
    %3042 = vmatpush1.msra.mxu0 0.0
    %3043 = vmatprep.subr.mxu0 0.0
    %3044 = vmatpush1.msra.mxu0 0.0
    %3045 = vmatprep.subr.mxu0 0.0
    %3046 = vmatpush1.msra.mxu0 0.0
    %3047 = vmatprep.subr.mxu0 0.0
    %3048 = vmatpush1.msra.mxu0 0.0
    %3049 = vmatprep.subr.mxu0 0.0
    %3050 = vmatpush1.msra.mxu0 0.0
    %3051 = vmatprep.subr.mxu0 0.0
    %3052 = vmatpush1.msra.mxu0 0.0
    %3053 = vmatprep.subr.mxu0 0.0
    %3054 = vmatpush1.msra.mxu0 0.0
    %3055 = vmatprep.subr.mxu0 0.0
    %3056 = vmatpush1.msra.mxu0 0.0
    %3057 = vmatprep.subr.mxu0 0.0
    %3058 = vmatpush1.msra.mxu0 0.0
    %3059 = vmatprep.subr.mxu0 0.0
    %3060 = vmatpush1.msra.mxu0 %v2145
    %3061 = vmatprep.subr.mxu0 0.0
    %3062 = vmatpush1.msra.mxu0 %v2144
    %3063 = vmatprep.subr.mxu0 0.0
    %3064 = vmatpush1.msra.mxu0 %v2143
    %3065 = vmatprep.subr.mxu0 0.0
    %3066 = vmatpush1.msra.mxu0 %v2142
    %3067 = vmatprep.subr.mxu0 0.0
    %3068 = vmatpush2.msra.mxu0 0.0
    %3069 = vmatprep.subr.mxu0 0.0
    %3070 = vmatpush2.msra.mxu0 0.0
    %3071 = vmatprep.subr.mxu0 0.0
    %3072 = vmatpush2.msra.mxu0 0.0
    %3073 = vmatprep.subr.mxu0 0.0
    %3074 = vmatpush2.msra.mxu0 0.0
    %3075 = vmatprep.subr.mxu0 0.0
    %3076 = vmatpush2.msra.mxu0 0.0
    %3077 = vmatprep.subr.mxu0 0.0
    %3078 = vmatpush2.msra.mxu0 0.0
    %3079 = vmatprep.subr.mxu0 0.0
    %3080 = vmatpush2.msra.mxu0 0.0
    %3081 = vmatprep.subr.mxu0 0.0
    %3082 = vmatpush2.msra.mxu0 0.0
    %3083 = vmatprep.subr.mxu0 0.0
    %3084 = vmatpush2.msra.mxu0 0.0
    %3085 = vmatprep.subr.mxu0 0.0
    %3086 = vmatpush2.msra.mxu0 0.0
    %3087 = vmatprep.subr.mxu0 0.0
    %3088 = vmatpush2.msra.mxu0 0.0
    %3089 = vmatprep.subr.mxu0 0.0
    %3090 = vmatpush2.msra.mxu0 0.0
    %3091 = vmatprep.subr.mxu0 0.0
    %3092 = vmatpush2.msra.mxu0 0.0
    %3093 = vmatprep.subr.mxu0 0.0
    %3094 = vmatpush2.msra.mxu0 0.0
    %3095 = vmatprep.subr.mxu0 0.0
    %3096 = vmatpush2.msra.mxu0 0.0
    %3097 = vmatprep.subr.mxu0 0.0
    %3098 = vmatpush2.msra.mxu0 0.0
    %3099 = vmatprep.mubr.f32.mxu0 0.0
    %3100 = vmatmul.mubr.f32.gmra.mxu0 %v3033
    %v3101 = vpop.f32.mrf.mxu0
    %v3102 = vadd.f32 0.0, %v3101
    %v3103 = vpop.f32.mrf.mxu0
    %3104 = vdwg.mxu0
    %v3105 = vadd.f32 %v3029, %v3102
    %v3106 = vld [vmem:[#allocation2 + $0x8] sm:$0xc0]
    %3107 = vrot.lane.b32.xlu0 %v3018, 32
    %v3108 = vpop.permute.xlu0 %3107
    %v3109 = vsel %vm240, %v3108, 0
    %3111 = vmatprep.subr.mxu0 0.0
    %3112 = vmatpush1.msra.mxu0 0.0
    %3113 = vmatprep.subr.mxu0 0.0
    %3114 = vmatpush1.msra.mxu0 0.0
    %3115 = vmatprep.subr.mxu0 0.0
    %3116 = vmatpush1.msra.mxu0 0.0
    %3117 = vmatprep.subr.mxu0 0.0
    %3118 = vmatpush1.msra.mxu0 0.0
    %3119 = vmatprep.subr.mxu0 0.0
    %3120 = vmatpush1.msra.mxu0 0.0
    %3121 = vmatprep.subr.mxu0 0.0
    %3122 = vmatpush1.msra.mxu0 0.0
    %3123 = vmatprep.subr.mxu0 0.0
    %3124 = vmatpush1.msra.mxu0 0.0
    %3125 = vmatprep.subr.mxu0 0.0
    %3126 = vmatpush1.msra.mxu0 0.0
    %3127 = vmatprep.subr.mxu0 0.0
    %3128 = vmatpush1.msra.mxu0 0.0
    %3129 = vmatprep.subr.mxu0 0.0
    %3130 = vmatpush1.msra.mxu0 0.0
    %3131 = vmatprep.subr.mxu0 0.0
    %3132 = vmatpush1.msra.mxu0 0.0
    %3133 = vmatprep.subr.mxu0 0.0
    %3134 = vmatpush1.msra.mxu0 0.0
    %3135 = vmatprep.subr.mxu0 0.0
    %3136 = vmatpush1.msra.mxu0 %v2149
    %3137 = vmatprep.subr.mxu0 0.0
    %3138 = vmatpush1.msra.mxu0 %v2148
    %3139 = vmatprep.subr.mxu0 0.0
    %3140 = vmatpush1.msra.mxu0 %v2147
    %3141 = vmatprep.subr.mxu0 0.0
    %3142 = vmatpush1.msra.mxu0 %v2146
    %3143 = vmatprep.subr.mxu0 0.0
    %3144 = vmatpush2.msra.mxu0 0.0
    %3145 = vmatprep.subr.mxu0 0.0
    %3146 = vmatpush2.msra.mxu0 0.0
    %3147 = vmatprep.subr.mxu0 0.0
    %3148 = vmatpush2.msra.mxu0 0.0
    %3149 = vmatprep.subr.mxu0 0.0
    %3150 = vmatpush2.msra.mxu0 0.0
    %3151 = vmatprep.subr.mxu0 0.0
    %3152 = vmatpush2.msra.mxu0 0.0
    %3153 = vmatprep.subr.mxu0 0.0
    %3154 = vmatpush2.msra.mxu0 0.0
    %3155 = vmatprep.subr.mxu0 0.0
    %3156 = vmatpush2.msra.mxu0 0.0
    %3157 = vmatprep.subr.mxu0 0.0
    %3158 = vmatpush2.msra.mxu0 0.0
    %3159 = vmatprep.subr.mxu0 0.0
    %3160 = vmatpush2.msra.mxu0 0.0
    %3161 = vmatprep.subr.mxu0 0.0
    %3162 = vmatpush2.msra.mxu0 0.0
    %3163 = vmatprep.subr.mxu0 0.0
    %3164 = vmatpush2.msra.mxu0 0.0
    %3165 = vmatprep.subr.mxu0 0.0
    %3166 = vmatpush2.msra.mxu0 0.0
    %3167 = vmatprep.subr.mxu0 0.0
    %3168 = vmatpush2.msra.mxu0 0.0
    %3169 = vmatprep.subr.mxu0 0.0
    %3170 = vmatpush2.msra.mxu0 0.0
    %3171 = vmatprep.subr.mxu0 0.0
    %3172 = vmatpush2.msra.mxu0 0.0
    %3173 = vmatprep.subr.mxu0 0.0
    %3174 = vmatpush2.msra.mxu0 0.0
    %3175 = vmatprep.mubr.f32.mxu0 0.0
    %3176 = vmatmul.mubr.f32.gmra.mxu0 %v3109
    %v3177 = vpop.f32.mrf.mxu0
    %v3178 = vadd.f32 0.0, %v3177
    %v3179 = vpop.f32.mrf.mxu0
    %3180 = vdwg.mxu0
    %v3182 = vrot.slane %v3178, 2
    %v3184 = vadd.f32 %v3106, %v3182
    %v3185 = vtanh.pop %v3105
    %v3186 = vxor.u32 %v3105, 2147483648
    %v3187 = vmul.f32 %v3186, 1.442695
    %v3188 = vpow.pop %v3187
    %v3189 = vadd.f32 %v3188, 1.0
    %v3190 = vrcp.pop %v3189
    %v3191 = vmul.f32 1.0, %v3190
    %v3192 = vsel %vm124, %v3185, %v3191
    %v3193 = vtanh.pop %v3184
    %v3194 = vxor.u32 %v3184, 2147483648
    %v3195 = vmul.f32 %v3194, 1.442695
    %v3196 = vpow.pop %v3195
    %v3197 = vadd.f32 %v3196, 1.0
    %v3198 = vrcp.pop %v3197
    %v3199 = vmul.f32 1.0, %v3198
    %v3200 = vsel %vm124, %v3193, %v3199
    %v3202 = vrot.slane %v2992, 6
    %v3204 = vmul.f32 %v3192, %v3202
    %3206 = vrot.lane.b32.xlu0 %v3192, 64
    %v3207 = vpop.permute.xlu0 %3206
    %v3209 = vmul.f32 %v3192, %v3207
    %3211 = vrot.lane.b32.xlu0 %v3209, 32
    %v3212 = vpop.permute.xlu0 %3211
    %v3214 = vadd.f32 %v3204, %v3212
    %v3216 = vrot.slane %v3006, 2
    %v3218 = vmul.f32 %v3200, %v3216
    %3220 = vrot.lane.b32.xlu0 %v3200, 64
    %v3221 = vpop.permute.xlu0 %3220
    %v3223 = vmul.f32 %v3200, %v3221
    %3225 = vrot.lane.b32.xlu0 %v3223, 32
    %v3226 = vpop.permute.xlu0 %3225
    %v3228 = vadd.f32 %v3218, %v3226
    %v3229 = vtanh.pop %v3214
    %3231 = vrot.lane.b32.xlu0 %v3229, 64
    %v3232 = vpop.permute.xlu0 %3231
    %v3234 = vmul.f32 %v3192, %v3232
    %v3235 = vtanh.pop %v3228
    %3237 = vrot.lane.b32.xlu0 %v3235, 64
    %v3238 = vpop.permute.xlu0 %3237
    %v3240 = vmul.f32 %v3200, %v3238
    %3242 = vrot.lane.b32.xlu0 %v3234, 32
    %v3243 = vpop.permute.xlu0 %3242
    %3245 = vst.msk [vmem:[#allocation3 + $0x8] sm:$0x3] %vm444, %v3243
    %3247 = vrot.lane.b32.xlu0 %v3240, 64
    %v3248 = vpop.permute.xlu0 %3247
    %3250 = vst.msk [vmem:[#allocation3] sm:$0xc0] %vm450, %v3248
    %v3251 = vld [vmem:[#allocation2 + $0x10] sm:$0xc]
    %v3252 = vsel %vm240, %v3243, 0
    %3254 = vmatprep.subr.mxu0 0.0
    %3255 = vmatpush1.msra.mxu0 0.0
    %3256 = vmatprep.subr.mxu0 0.0
    %3257 = vmatpush1.msra.mxu0 0.0
    %3258 = vmatprep.subr.mxu0 0.0
    %3259 = vmatpush1.msra.mxu0 0.0
    %3260 = vmatprep.subr.mxu0 0.0
    %3261 = vmatpush1.msra.mxu0 0.0
    %3262 = vmatprep.subr.mxu0 0.0
    %3263 = vmatpush1.msra.mxu0 0.0
    %3264 = vmatprep.subr.mxu0 0.0
    %3265 = vmatpush1.msra.mxu0 0.0
    %3266 = vmatprep.subr.mxu0 0.0
    %3267 = vmatpush1.msra.mxu0 0.0
    %3268 = vmatprep.subr.mxu0 0.0
    %3269 = vmatpush1.msra.mxu0 0.0
    %3270 = vmatprep.subr.mxu0 0.0
    %3271 = vmatpush1.msra.mxu0 0.0
    %3272 = vmatprep.subr.mxu0 0.0
    %3273 = vmatpush1.msra.mxu0 0.0
    %3274 = vmatprep.subr.mxu0 0.0
    %3275 = vmatpush1.msra.mxu0 0.0
    %3276 = vmatprep.subr.mxu0 0.0
    %3277 = vmatpush1.msra.mxu0 0.0
    %3278 = vmatprep.subr.mxu0 0.0
    %3279 = vmatpush1.msra.mxu0 %v2145
    %3280 = vmatprep.subr.mxu0 0.0
    %3281 = vmatpush1.msra.mxu0 %v2144
    %3282 = vmatprep.subr.mxu0 0.0
    %3283 = vmatpush1.msra.mxu0 %v2143
    %3284 = vmatprep.subr.mxu0 0.0
    %3285 = vmatpush1.msra.mxu0 %v2142
    %3286 = vmatprep.subr.mxu0 0.0
    %3287 = vmatpush2.msra.mxu0 0.0
    %3288 = vmatprep.subr.mxu0 0.0
    %3289 = vmatpush2.msra.mxu0 0.0
    %3290 = vmatprep.subr.mxu0 0.0
    %3291 = vmatpush2.msra.mxu0 0.0
    %3292 = vmatprep.subr.mxu0 0.0
    %3293 = vmatpush2.msra.mxu0 0.0
    %3294 = vmatprep.subr.mxu0 0.0
    %3295 = vmatpush2.msra.mxu0 0.0
    %3296 = vmatprep.subr.mxu0 0.0
    %3297 = vmatpush2.msra.mxu0 0.0
    %3298 = vmatprep.subr.mxu0 0.0
    %3299 = vmatpush2.msra.mxu0 0.0
    %3300 = vmatprep.subr.mxu0 0.0
    %3301 = vmatpush2.msra.mxu0 0.0
    %3302 = vmatprep.subr.mxu0 0.0
    %3303 = vmatpush2.msra.mxu0 0.0
    %3304 = vmatprep.subr.mxu0 0.0
    %3305 = vmatpush2.msra.mxu0 0.0
    %3306 = vmatprep.subr.mxu0 0.0
    %3307 = vmatpush2.msra.mxu0 0.0
    %3308 = vmatprep.subr.mxu0 0.0
    %3309 = vmatpush2.msra.mxu0 0.0
    %3310 = vmatprep.subr.mxu0 0.0
    %3311 = vmatpush2.msra.mxu0 0.0
    %3312 = vmatprep.subr.mxu0 0.0
    %3313 = vmatpush2.msra.mxu0 0.0
    %3314 = vmatprep.subr.mxu0 0.0
    %3315 = vmatpush2.msra.mxu0 0.0
    %3316 = vmatprep.subr.mxu0 0.0
    %3317 = vmatpush2.msra.mxu0 0.0
    %3318 = vmatprep.mubr.f32.mxu0 0.0
    %3319 = vmatmul.mubr.f32.gmra.mxu0 %v3252
    %v3320 = vpop.f32.mrf.mxu0
    %v3321 = vadd.f32 0.0, %v3320
    %v3322 = vpop.f32.mrf.mxu0
    %3323 = vdwg.mxu0
    %v3325 = vrot.slane %v3321, 6
    %v3327 = vadd.f32 %v3251, %v3325
    %v3328 = vld [vmem:[#allocation2 + $0x8] sm:$0x30]
    %v3329 = vrot.slane %v3240, 6
    %3330 = vrot.lane.b32.xlu0 %v3329, 32
    %v3331 = vpop.permute.xlu0 %3330
    %v3332 = vsel %vm240, %v3331, 0
    %3334 = vmatprep.subr.mxu0 0.0
    %3335 = vmatpush1.msra.mxu0 0.0
    %3336 = vmatprep.subr.mxu0 0.0
    %3337 = vmatpush1.msra.mxu0 0.0
    %3338 = vmatprep.subr.mxu0 0.0
    %3339 = vmatpush1.msra.mxu0 0.0
    %3340 = vmatprep.subr.mxu0 0.0
    %3341 = vmatpush1.msra.mxu0 0.0
    %3342 = vmatprep.subr.mxu0 0.0
    %3343 = vmatpush1.msra.mxu0 0.0
    %3344 = vmatprep.subr.mxu0 0.0
    %3345 = vmatpush1.msra.mxu0 0.0
    %3346 = vmatprep.subr.mxu0 0.0
    %3347 = vmatpush1.msra.mxu0 0.0
    %3348 = vmatprep.subr.mxu0 0.0
    %3349 = vmatpush1.msra.mxu0 0.0
    %3350 = vmatprep.subr.mxu0 0.0
    %3351 = vmatpush1.msra.mxu0 0.0
    %3352 = vmatprep.subr.mxu0 0.0
    %3353 = vmatpush1.msra.mxu0 0.0
    %3354 = vmatprep.subr.mxu0 0.0
    %3355 = vmatpush1.msra.mxu0 0.0
    %3356 = vmatprep.subr.mxu0 0.0
    %3357 = vmatpush1.msra.mxu0 0.0
    %3358 = vmatprep.subr.mxu0 0.0
    %3359 = vmatpush1.msra.mxu0 %v2149
    %3360 = vmatprep.subr.mxu0 0.0
    %3361 = vmatpush1.msra.mxu0 %v2148
    %3362 = vmatprep.subr.mxu0 0.0
    %3363 = vmatpush1.msra.mxu0 %v2147
    %3364 = vmatprep.subr.mxu0 0.0
    %3365 = vmatpush1.msra.mxu0 %v2146
    %3366 = vmatprep.subr.mxu0 0.0
    %3367 = vmatpush2.msra.mxu0 0.0
    %3368 = vmatprep.subr.mxu0 0.0
    %3369 = vmatpush2.msra.mxu0 0.0
    %3370 = vmatprep.subr.mxu0 0.0
    %3371 = vmatpush2.msra.mxu0 0.0
    %3372 = vmatprep.subr.mxu0 0.0
    %3373 = vmatpush2.msra.mxu0 0.0
    %3374 = vmatprep.subr.mxu0 0.0
    %3375 = vmatpush2.msra.mxu0 0.0
    %3376 = vmatprep.subr.mxu0 0.0
    %3377 = vmatpush2.msra.mxu0 0.0
    %3378 = vmatprep.subr.mxu0 0.0
    %3379 = vmatpush2.msra.mxu0 0.0
    %3380 = vmatprep.subr.mxu0 0.0
    %3381 = vmatpush2.msra.mxu0 0.0
    %3382 = vmatprep.subr.mxu0 0.0
    %3383 = vmatpush2.msra.mxu0 0.0
    %3384 = vmatprep.subr.mxu0 0.0
    %3385 = vmatpush2.msra.mxu0 0.0
    %3386 = vmatprep.subr.mxu0 0.0
    %3387 = vmatpush2.msra.mxu0 0.0
    %3388 = vmatprep.subr.mxu0 0.0
    %3389 = vmatpush2.msra.mxu0 0.0
    %3390 = vmatprep.subr.mxu0 0.0
    %3391 = vmatpush2.msra.mxu0 0.0
    %3392 = vmatprep.subr.mxu0 0.0
    %3393 = vmatpush2.msra.mxu0 0.0
    %3394 = vmatprep.subr.mxu0 0.0
    %3395 = vmatpush2.msra.mxu0 0.0
    %3396 = vmatprep.subr.mxu0 0.0
    %3397 = vmatpush2.msra.mxu0 0.0
    %3398 = vmatprep.mubr.f32.mxu0 0.0
    %3399 = vmatmul.mubr.f32.gmra.mxu0 %v3332
    %v3400 = vpop.f32.mrf.mxu0
    %v3401 = vadd.f32 0.0, %v3400
    %v3402 = vpop.f32.mrf.mxu0
    %3403 = vdwg.mxu0
    %v3405 = vrot.slane %v3401, 4
    %v3407 = vadd.f32 %v3328, %v3405
    %v3408 = vtanh.pop %v3327
    %v3409 = vxor.u32 %v3327, 2147483648
    %v3410 = vmul.f32 %v3409, 1.442695
    %v3411 = vpow.pop %v3410
    %v3412 = vadd.f32 %v3411, 1.0
    %v3413 = vrcp.pop %v3412
    %v3414 = vmul.f32 1.0, %v3413
    %v3415 = vsel %vm124, %v3408, %v3414
    %v3416 = vtanh.pop %v3407
    %v3417 = vxor.u32 %v3407, 2147483648
    %v3418 = vmul.f32 %v3417, 1.442695
    %v3419 = vpow.pop %v3418
    %v3420 = vadd.f32 %v3419, 1.0
    %v3421 = vrcp.pop %v3420
    %v3422 = vmul.f32 1.0, %v3421
    %v3423 = vsel %vm124, %v3416, %v3422
    %v3425 = vrot.slane %v3214, 6
    %v3427 = vmul.f32 %v3415, %v3425
    %3429 = vrot.lane.b32.xlu0 %v3415, 64
    %v3430 = vpop.permute.xlu0 %3429
    %v3432 = vmul.f32 %v3415, %v3430
    %3434 = vrot.lane.b32.xlu0 %v3432, 32
    %v3435 = vpop.permute.xlu0 %3434
    %v3437 = vadd.f32 %v3427, %v3435
    %v3439 = vrot.slane %v3228, 2
    %v3441 = vmul.f32 %v3423, %v3439
    %3443 = vrot.lane.b32.xlu0 %v3423, 64
    %v3444 = vpop.permute.xlu0 %3443
    %v3446 = vmul.f32 %v3423, %v3444
    %3448 = vrot.lane.b32.xlu0 %v3446, 32
    %v3449 = vpop.permute.xlu0 %3448
    %v3451 = vadd.f32 %v3441, %v3449
    %v3452 = vtanh.pop %v3437
    %3454 = vrot.lane.b32.xlu0 %v3452, 64
    %v3455 = vpop.permute.xlu0 %3454
    %v3457 = vmul.f32 %v3415, %v3455
    %v3458 = vtanh.pop %v3451
    %3460 = vrot.lane.b32.xlu0 %v3458, 64
    %v3461 = vpop.permute.xlu0 %3460
    %v3463 = vmul.f32 %v3423, %v3461
    %3465 = vrot.lane.b32.xlu0 %v3457, 32
    %v3466 = vpop.permute.xlu0 %3465
    %3468 = vst.msk [vmem:[#allocation3 + $0x8] sm:$0xc] %vm669, %v3466
    %3470 = vrot.lane.b32.xlu0 %v3463, 64
    %v3471 = vpop.permute.xlu0 %3470
    %3473 = vst.msk [vmem:[#allocation3] sm:$0x30] %vm675, %v3471
    %v3474 = vld [vmem:[#allocation2 + $0x10] sm:$0x30]
    %v3475 = vrot.slane %v3457, 2
    %3476 = vrot.lane.b32.xlu0 %v3475, 32
    %v3477 = vpop.permute.xlu0 %3476
    %v3478 = vsel %vm240, %v3477, 0
    %3480 = vmatprep.subr.mxu0 0.0
    %3481 = vmatpush1.msra.mxu0 0.0
    %3482 = vmatprep.subr.mxu0 0.0
    %3483 = vmatpush1.msra.mxu0 0.0
    %3484 = vmatprep.subr.mxu0 0.0
    %3485 = vmatpush1.msra.mxu0 0.0
    %3486 = vmatprep.subr.mxu0 0.0
    %3487 = vmatpush1.msra.mxu0 0.0
    %3488 = vmatprep.subr.mxu0 0.0
    %3489 = vmatpush1.msra.mxu0 0.0
    %3490 = vmatprep.subr.mxu0 0.0
    %3491 = vmatpush1.msra.mxu0 0.0
    %3492 = vmatprep.subr.mxu0 0.0
    %3493 = vmatpush1.msra.mxu0 0.0
    %3494 = vmatprep.subr.mxu0 0.0
    %3495 = vmatpush1.msra.mxu0 0.0
    %3496 = vmatprep.subr.mxu0 0.0
    %3497 = vmatpush1.msra.mxu0 0.0
    %3498 = vmatprep.subr.mxu0 0.0
    %3499 = vmatpush1.msra.mxu0 0.0
    %3500 = vmatprep.subr.mxu0 0.0
    %3501 = vmatpush1.msra.mxu0 0.0
    %3502 = vmatprep.subr.mxu0 0.0
    %3503 = vmatpush1.msra.mxu0 0.0
    %3504 = vmatprep.subr.mxu0 0.0
    %3505 = vmatpush1.msra.mxu0 %v2145
    %3506 = vmatprep.subr.mxu0 0.0
    %3507 = vmatpush1.msra.mxu0 %v2144
    %3508 = vmatprep.subr.mxu0 0.0
    %3509 = vmatpush1.msra.mxu0 %v2143
    %3510 = vmatprep.subr.mxu0 0.0
    %3511 = vmatpush1.msra.mxu0 %v2142
    %3512 = vmatprep.subr.mxu0 0.0
    %3513 = vmatpush2.msra.mxu0 0.0
    %3514 = vmatprep.subr.mxu0 0.0
    %3515 = vmatpush2.msra.mxu0 0.0
    %3516 = vmatprep.subr.mxu0 0.0
    %3517 = vmatpush2.msra.mxu0 0.0
    %3518 = vmatprep.subr.mxu0 0.0
    %3519 = vmatpush2.msra.mxu0 0.0
    %3520 = vmatprep.subr.mxu0 0.0
    %3521 = vmatpush2.msra.mxu0 0.0
    %3522 = vmatprep.subr.mxu0 0.0
    %3523 = vmatpush2.msra.mxu0 0.0
    %3524 = vmatprep.subr.mxu0 0.0
    %3525 = vmatpush2.msra.mxu0 0.0
    %3526 = vmatprep.subr.mxu0 0.0
    %3527 = vmatpush2.msra.mxu0 0.0
    %3528 = vmatprep.subr.mxu0 0.0
    %3529 = vmatpush2.msra.mxu0 0.0
    %3530 = vmatprep.subr.mxu0 0.0
    %3531 = vmatpush2.msra.mxu0 0.0
    %3532 = vmatprep.subr.mxu0 0.0
    %3533 = vmatpush2.msra.mxu0 0.0
    %3534 = vmatprep.subr.mxu0 0.0
    %3535 = vmatpush2.msra.mxu0 0.0
    %3536 = vmatprep.subr.mxu0 0.0
    %3537 = vmatpush2.msra.mxu0 0.0
    %3538 = vmatprep.subr.mxu0 0.0
    %3539 = vmatpush2.msra.mxu0 0.0
    %3540 = vmatprep.subr.mxu0 0.0
    %3541 = vmatpush2.msra.mxu0 0.0
    %3542 = vmatprep.subr.mxu0 0.0
    %3543 = vmatpush2.msra.mxu0 0.0
    %3544 = vmatprep.mubr.f32.mxu0 0.0
    %3545 = vmatmul.mubr.f32.gmra.mxu0 %v3478
    %v3546 = vpop.f32.mrf.mxu0
    %v3547 = vadd.f32 0.0, %v3546
    %v3548 = vpop.f32.mrf.mxu0
    %3549 = vdwg.mxu0
    %v3551 = vrot.slane %v3547, 4
    %v3553 = vadd.f32 %v3474, %v3551
    %v3554 = vld [vmem:[#allocation2 + $0x8] sm:$0xc]
    %v3555 = vrot.slane %v3463, 4
    %3556 = vrot.lane.b32.xlu0 %v3555, 32
    %v3557 = vpop.permute.xlu0 %3556
    %v3558 = vsel %vm240, %v3557, 0
    %3560 = vmatprep.subr.mxu0 0.0
    %3561 = vmatpush1.msra.mxu0 0.0
    %3562 = vmatprep.subr.mxu0 0.0
    %3563 = vmatpush1.msra.mxu0 0.0
    %3564 = vmatprep.subr.mxu0 0.0
    %3565 = vmatpush1.msra.mxu0 0.0
    %3566 = vmatprep.subr.mxu0 0.0
    %3567 = vmatpush1.msra.mxu0 0.0
    %3568 = vmatprep.subr.mxu0 0.0
    %3569 = vmatpush1.msra.mxu0 0.0
    %3570 = vmatprep.subr.mxu0 0.0
    %3571 = vmatpush1.msra.mxu0 0.0
    %3572 = vmatprep.subr.mxu0 0.0
    %3573 = vmatpush1.msra.mxu0 0.0
    %3574 = vmatprep.subr.mxu0 0.0
    %3575 = vmatpush1.msra.mxu0 0.0
    %3576 = vmatprep.subr.mxu0 0.0
    %3577 = vmatpush1.msra.mxu0 0.0
    %3578 = vmatprep.subr.mxu0 0.0
    %3579 = vmatpush1.msra.mxu0 0.0
    %3580 = vmatprep.subr.mxu0 0.0
    %3581 = vmatpush1.msra.mxu0 0.0
    %3582 = vmatprep.subr.mxu0 0.0
    %3583 = vmatpush1.msra.mxu0 0.0
    %3584 = vmatprep.subr.mxu0 0.0
    %3585 = vmatpush1.msra.mxu0 %v2149
    %3586 = vmatprep.subr.mxu0 0.0
    %3587 = vmatpush1.msra.mxu0 %v2148
    %3588 = vmatprep.subr.mxu0 0.0
    %3589 = vmatpush1.msra.mxu0 %v2147
    %3590 = vmatprep.subr.mxu0 0.0
    %3591 = vmatpush1.msra.mxu0 %v2146
    %3592 = vmatprep.subr.mxu0 0.0
    %3593 = vmatpush2.msra.mxu0 0.0
    %3594 = vmatprep.subr.mxu0 0.0
    %3595 = vmatpush2.msra.mxu0 0.0
    %3596 = vmatprep.subr.mxu0 0.0
    %3597 = vmatpush2.msra.mxu0 0.0
    %3598 = vmatprep.subr.mxu0 0.0
    %3599 = vmatpush2.msra.mxu0 0.0
    %3600 = vmatprep.subr.mxu0 0.0
    %3601 = vmatpush2.msra.mxu0 0.0
    %3602 = vmatprep.subr.mxu0 0.0
    %3603 = vmatpush2.msra.mxu0 0.0
    %3604 = vmatprep.subr.mxu0 0.0
    %3605 = vmatpush2.msra.mxu0 0.0
    %3606 = vmatprep.subr.mxu0 0.0
    %3607 = vmatpush2.msra.mxu0 0.0
    %3608 = vmatprep.subr.mxu0 0.0
    %3609 = vmatpush2.msra.mxu0 0.0
    %3610 = vmatprep.subr.mxu0 0.0
    %3611 = vmatpush2.msra.mxu0 0.0
    %3612 = vmatprep.subr.mxu0 0.0
    %3613 = vmatpush2.msra.mxu0 0.0
    %3614 = vmatprep.subr.mxu0 0.0
    %3615 = vmatpush2.msra.mxu0 0.0
    %3616 = vmatprep.subr.mxu0 0.0
    %3617 = vmatpush2.msra.mxu0 0.0
    %3618 = vmatprep.subr.mxu0 0.0
    %3619 = vmatpush2.msra.mxu0 0.0
    %3620 = vmatprep.subr.mxu0 0.0
    %3621 = vmatpush2.msra.mxu0 0.0
    %3622 = vmatprep.subr.mxu0 0.0
    %3623 = vmatpush2.msra.mxu0 0.0
    %3624 = vmatprep.mubr.f32.mxu0 0.0
    %3625 = vmatmul.mubr.f32.gmra.mxu0 %v3558
    %v3626 = vpop.f32.mrf.mxu0
    %v3627 = vadd.f32 0.0, %v3626
    %v3628 = vpop.f32.mrf.mxu0
    %3629 = vdwg.mxu0
    %v3631 = vrot.slane %v3627, 6
    %v3633 = vadd.f32 %v3554, %v3631
    %v3634 = vtanh.pop %v3553
    %v3635 = vxor.u32 %v3553, 2147483648
    %v3636 = vmul.f32 %v3635, 1.442695
    %v3637 = vpow.pop %v3636
    %v3638 = vadd.f32 %v3637, 1.0
    %v3639 = vrcp.pop %v3638
    %v3640 = vmul.f32 1.0, %v3639
    %v3641 = vsel %vm124, %v3634, %v3640
    %v3642 = vtanh.pop %v3633
    %v3643 = vxor.u32 %v3633, 2147483648
    %v3644 = vmul.f32 %v3643, 1.442695
    %v3645 = vpow.pop %v3644
    %v3646 = vadd.f32 %v3645, 1.0
    %v3647 = vrcp.pop %v3646
    %v3648 = vmul.f32 1.0, %v3647
    %v3649 = vsel %vm124, %v3642, %v3648
    %v3651 = vrot.slane %v3437, 6
    %v3653 = vmul.f32 %v3641, %v3651
    %3655 = vrot.lane.b32.xlu0 %v3641, 64
    %v3656 = vpop.permute.xlu0 %3655
    %v3658 = vmul.f32 %v3641, %v3656
    %3660 = vrot.lane.b32.xlu0 %v3658, 32
    %v3661 = vpop.permute.xlu0 %3660
    %v3663 = vadd.f32 %v3653, %v3661
    %v3665 = vrot.slane %v3451, 2
    %v3667 = vmul.f32 %v3649, %v3665
    %3669 = vrot.lane.b32.xlu0 %v3649, 64
    %v3670 = vpop.permute.xlu0 %3669
    %v3672 = vmul.f32 %v3649, %v3670
    %3674 = vrot.lane.b32.xlu0 %v3672, 32
    %v3675 = vpop.permute.xlu0 %3674
    %v3677 = vadd.f32 %v3667, %v3675
    %v3678 = vtanh.pop %v3663
    %3680 = vrot.lane.b32.xlu0 %v3678, 64
    %v3681 = vpop.permute.xlu0 %3680
    %v3683 = vmul.f32 %v3641, %v3681
    %v3684 = vtanh.pop %v3677
    %3686 = vrot.lane.b32.xlu0 %v3684, 64
    %v3687 = vpop.permute.xlu0 %3686
    %v3689 = vmul.f32 %v3649, %v3687
    %3691 = vrot.lane.b32.xlu0 %v3683, 32
    %v3692 = vpop.permute.xlu0 %3691
    %3694 = vst.msk [vmem:[#allocation3 + $0x8] sm:$0x30] %vm897, %v3692
    %3696 = vrot.lane.b32.xlu0 %v3689, 64
    %v3697 = vpop.permute.xlu0 %3696
    %3699 = vst.msk [vmem:[#allocation3] sm:$0xc] %vm903, %v3697
    %v3700 = vld [vmem:[#allocation2 + $0x10] sm:$0xc0]
    %v3701 = vrot.slane %v3683, 4
    %3702 = vrot.lane.b32.xlu0 %v3701, 32
    %v3703 = vpop.permute.xlu0 %3702
    %v3704 = vsel %vm240, %v3703, 0
    %3706 = vmatprep.subr.mxu0 0.0
    %3707 = vmatpush1.msra.mxu0 0.0
    %3708 = vmatprep.subr.mxu0 0.0
    %3709 = vmatpush1.msra.mxu0 0.0
    %3710 = vmatprep.subr.mxu0 0.0
    %3711 = vmatpush1.msra.mxu0 0.0
    %3712 = vmatprep.subr.mxu0 0.0
    %3713 = vmatpush1.msra.mxu0 0.0
    %3714 = vmatprep.subr.mxu0 0.0
    %3715 = vmatpush1.msra.mxu0 0.0
    %3716 = vmatprep.subr.mxu0 0.0
    %3717 = vmatpush1.msra.mxu0 0.0
    %3718 = vmatprep.subr.mxu0 0.0
    %3719 = vmatpush1.msra.mxu0 0.0
    %3720 = vmatprep.subr.mxu0 0.0
    %3721 = vmatpush1.msra.mxu0 0.0
    %3722 = vmatprep.subr.mxu0 0.0
    %3723 = vmatpush1.msra.mxu0 0.0
    %3724 = vmatprep.subr.mxu0 0.0
    %3725 = vmatpush1.msra.mxu0 0.0
    %3726 = vmatprep.subr.mxu0 0.0
    %3727 = vmatpush1.msra.mxu0 0.0
    %3728 = vmatprep.subr.mxu0 0.0
    %3729 = vmatpush1.msra.mxu0 0.0
    %3730 = vmatprep.subr.mxu0 0.0
    %3731 = vmatpush1.msra.mxu0 %v2145
    %3732 = vmatprep.subr.mxu0 0.0
    %3733 = vmatpush1.msra.mxu0 %v2144
    %3734 = vmatprep.subr.mxu0 0.0
    %3735 = vmatpush1.msra.mxu0 %v2143
    %3736 = vmatprep.subr.mxu0 0.0
    %3737 = vmatpush1.msra.mxu0 %v2142
    %3738 = vmatprep.subr.mxu0 0.0
    %3739 = vmatpush2.msra.mxu0 0.0
    %3740 = vmatprep.subr.mxu0 0.0
    %3741 = vmatpush2.msra.mxu0 0.0
    %3742 = vmatprep.subr.mxu0 0.0
    %3743 = vmatpush2.msra.mxu0 0.0
    %3744 = vmatprep.subr.mxu0 0.0
    %3745 = vmatpush2.msra.mxu0 0.0
    %3746 = vmatprep.subr.mxu0 0.0
    %3747 = vmatpush2.msra.mxu0 0.0
    %3748 = vmatprep.subr.mxu0 0.0
    %3749 = vmatpush2.msra.mxu0 0.0
    %3750 = vmatprep.subr.mxu0 0.0
    %3751 = vmatpush2.msra.mxu0 0.0
    %3752 = vmatprep.subr.mxu0 0.0
    %3753 = vmatpush2.msra.mxu0 0.0
    %3754 = vmatprep.subr.mxu0 0.0
    %3755 = vmatpush2.msra.mxu0 0.0
    %3756 = vmatprep.subr.mxu0 0.0
    %3757 = vmatpush2.msra.mxu0 0.0
    %3758 = vmatprep.subr.mxu0 0.0
    %3759 = vmatpush2.msra.mxu0 0.0
    %3760 = vmatprep.subr.mxu0 0.0
    %3761 = vmatpush2.msra.mxu0 0.0
    %3762 = vmatprep.subr.mxu0 0.0
    %3763 = vmatpush2.msra.mxu0 0.0
    %3764 = vmatprep.subr.mxu0 0.0
    %3765 = vmatpush2.msra.mxu0 0.0
    %3766 = vmatprep.subr.mxu0 0.0
    %3767 = vmatpush2.msra.mxu0 0.0
    %3768 = vmatprep.subr.mxu0 0.0
    %3769 = vmatpush2.msra.mxu0 0.0
    %3770 = vmatprep.mubr.f32.mxu0 0.0
    %3771 = vmatmul.mubr.f32.gmra.mxu0 %v3704
    %v3772 = vpop.f32.mrf.mxu0
    %v3773 = vadd.f32 0.0, %v3772
    %v3774 = vpop.f32.mrf.mxu0
    %3775 = vdwg.mxu0
    %v3777 = vrot.slane %v3773, 2
    %v3779 = vadd.f32 %v3700, %v3777
    %v3780 = vld [vmem:[#allocation2 + $0x8] sm:$0x3]
    %v3781 = vrot.slane %v3689, 2
    %3782 = vrot.lane.b32.xlu0 %v3781, 32
    %v3783 = vpop.permute.xlu0 %3782
    %v3784 = vsel %vm240, %v3783, 0
    %3786 = vmatprep.subr.mxu0 0.0
    %3787 = vmatpush1.msra.mxu0 0.0
    %3788 = vmatprep.subr.mxu0 0.0
    %3789 = vmatpush1.msra.mxu0 0.0
    %3790 = vmatprep.subr.mxu0 0.0
    %3791 = vmatpush1.msra.mxu0 0.0
    %3792 = vmatprep.subr.mxu0 0.0
    %3793 = vmatpush1.msra.mxu0 0.0
    %3794 = vmatprep.subr.mxu0 0.0
    %3795 = vmatpush1.msra.mxu0 0.0
    %3796 = vmatprep.subr.mxu0 0.0
    %3797 = vmatpush1.msra.mxu0 0.0
    %3798 = vmatprep.subr.mxu0 0.0
    %3799 = vmatpush1.msra.mxu0 0.0
    %3800 = vmatprep.subr.mxu0 0.0
    %3801 = vmatpush1.msra.mxu0 0.0
    %3802 = vmatprep.subr.mxu0 0.0
    %3803 = vmatpush1.msra.mxu0 0.0
    %3804 = vmatprep.subr.mxu0 0.0
    %3805 = vmatpush1.msra.mxu0 0.0
    %3806 = vmatprep.subr.mxu0 0.0
    %3807 = vmatpush1.msra.mxu0 0.0
    %3808 = vmatprep.subr.mxu0 0.0
    %3809 = vmatpush1.msra.mxu0 0.0
    %3810 = vmatprep.subr.mxu0 0.0
    %3811 = vmatpush1.msra.mxu0 %v2149
    %3812 = vmatprep.subr.mxu0 0.0
    %3813 = vmatpush1.msra.mxu0 %v2148
    %3814 = vmatprep.subr.mxu0 0.0
    %3815 = vmatpush1.msra.mxu0 %v2147
    %3816 = vmatprep.subr.mxu0 0.0
    %3817 = vmatpush1.msra.mxu0 %v2146
    %3818 = vmatprep.subr.mxu0 0.0
    %3819 = vmatpush2.msra.mxu0 0.0
    %3820 = vmatprep.subr.mxu0 0.0
    %3821 = vmatpush2.msra.mxu0 0.0
    %3822 = vmatprep.subr.mxu0 0.0
    %3823 = vmatpush2.msra.mxu0 0.0
    %3824 = vmatprep.subr.mxu0 0.0
    %3825 = vmatpush2.msra.mxu0 0.0
    %3826 = vmatprep.subr.mxu0 0.0
    %3827 = vmatpush2.msra.mxu0 0.0
    %3828 = vmatprep.subr.mxu0 0.0
    %3829 = vmatpush2.msra.mxu0 0.0
    %3830 = vmatprep.subr.mxu0 0.0
    %3831 = vmatpush2.msra.mxu0 0.0
    %3832 = vmatprep.subr.mxu0 0.0
    %3833 = vmatpush2.msra.mxu0 0.0
    %3834 = vmatprep.subr.mxu0 0.0
    %3835 = vmatpush2.msra.mxu0 0.0
    %3836 = vmatprep.subr.mxu0 0.0
    %3837 = vmatpush2.msra.mxu0 0.0
    %3838 = vmatprep.subr.mxu0 0.0
    %3839 = vmatpush2.msra.mxu0 0.0
    %3840 = vmatprep.subr.mxu0 0.0
    %3841 = vmatpush2.msra.mxu0 0.0
    %3842 = vmatprep.subr.mxu0 0.0
    %3843 = vmatpush2.msra.mxu0 0.0
    %3844 = vmatprep.subr.mxu0 0.0
    %3845 = vmatpush2.msra.mxu0 0.0
    %3846 = vmatprep.subr.mxu0 0.0
    %3847 = vmatpush2.msra.mxu0 0.0
    %3848 = vmatprep.subr.mxu0 0.0
    %3849 = vmatpush2.msra.mxu0 0.0
    %3850 = vmatprep.mubr.f32.mxu0 0.0
    %3851 = vmatmul.mubr.f32.gmra.mxu0 %v3784
    %v3852 = vpop.f32.mrf.mxu0
    %v3853 = vadd.f32 0.0, %v3852
    %v3854 = vpop.f32.mrf.mxu0
    %3855 = vdwg.mxu0
    %v3856 = vadd.f32 %v3780, %v3853
    %v3857 = vtanh.pop %v3779
    %v3858 = vxor.u32 %v3779, 2147483648
    %v3859 = vmul.f32 %v3858, 1.442695
    %v3860 = vpow.pop %v3859
    %v3861 = vadd.f32 %v3860, 1.0
    %v3862 = vrcp.pop %v3861
    %v3863 = vmul.f32 1.0, %v3862
    %v3864 = vsel %vm124, %v3857, %v3863
    %v3865 = vtanh.pop %v3856
    %v3866 = vxor.u32 %v3856, 2147483648
    %v3867 = vmul.f32 %v3866, 1.442695
    %v3868 = vpow.pop %v3867
    %v3869 = vadd.f32 %v3868, 1.0
    %v3870 = vrcp.pop %v3869
    %v3871 = vmul.f32 1.0, %v3870
    %v3872 = vsel %vm124, %v3865, %v3871
    %v3874 = vrot.slane %v3663, 6
    %v3876 = vmul.f32 %v3864, %v3874
    %3878 = vrot.lane.b32.xlu0 %v3864, 64
    %v3879 = vpop.permute.xlu0 %3878
    %v3881 = vmul.f32 %v3864, %v3879
    %3883 = vrot.lane.b32.xlu0 %v3881, 32
    %v3884 = vpop.permute.xlu0 %3883
    %v3886 = vadd.f32 %v3876, %v3884
    %v3888 = vrot.slane %v3677, 2
    %v3890 = vmul.f32 %v3872, %v3888
    %3892 = vrot.lane.b32.xlu0 %v3872, 64
    %v3893 = vpop.permute.xlu0 %3892
    %v3895 = vmul.f32 %v3872, %v3893
    %3897 = vrot.lane.b32.xlu0 %v3895, 32
    %v3898 = vpop.permute.xlu0 %3897
    %v3900 = vadd.f32 %v3890, %v3898
    %v3901 = vtanh.pop %v3886
    %3903 = vrot.lane.b32.xlu0 %v3901, 64
    %v3904 = vpop.permute.xlu0 %3903
    %v3906 = vmul.f32 %v3864, %v3904
    %v3907 = vtanh.pop %v3900
    %3909 = vrot.lane.b32.xlu0 %v3907, 64
    %v3910 = vpop.permute.xlu0 %3909
    %v3912 = vmul.f32 %v3872, %v3910
    %3914 = vrot.lane.b32.xlu0 %v3906, 32
    %v3915 = vpop.permute.xlu0 %3914
    %3917 = vst.msk [vmem:[#allocation3 + $0x8] sm:$0xc0] %vm1122, %v3915
    %3919 = vrot.lane.b32.xlu0 %v3912, 64
    %v3920 = vpop.permute.xlu0 %3919
    %3922 = vst.msk [vmem:[#allocation3] sm:$0x3] %vm1128, %v3920
    %v3923 = vld [vmem:[#allocation3] sm:$0xff]
    %v3924 = vld [vmem:[#allocation3 + $0x8] sm:$0xff]
    %v3925 = vld [vmem:[#allocation12] sm:$0xff]
    %v3926 = vld [vmem:[#allocation12 + $0x8] sm:$0xff]
    %v3927 = vld [vmem:[#allocation12 + $0x10] sm:$0xff]
    %v3928 = vld [vmem:[#allocation12 + $0x18] sm:$0xff]
    %v3929 = vld [vmem:[#allocation12 + $0x20] sm:$0xff]
    %v3930 = vld [vmem:[#allocation12 + $0x28] sm:$0xff]
    %v3931 = vld [vmem:[#allocation12 + $0x30] sm:$0xff]
    %v3932 = vld [vmem:[#allocation12 + $0x38] sm:$0xff]
    %v3933 = vld [vmem:[%s10] sm:$0x1]
    %v3935 = vlaneseq
    %v3936 = vshrl.u32 %v3935, 7
    %v3937 = vsub.s32 0, %v3936
    %v3938 = vrot.slane %v3933, %v3937
    %v3941 = vsel %vm2054, %v3923, 0
    %v3944 = vsel %vm2054, %v3924, 0
    %3946 = vmatprep.subr.mxu0 0.0
    %3947 = vmatpush1.msra.mxu0 0.0
    %3948 = vmatprep.subr.mxu0 0.0
    %3949 = vmatpush1.msra.mxu0 0.0
    %3950 = vmatprep.subr.mxu0 0.0
    %3951 = vmatpush1.msra.mxu0 0.0
    %3952 = vmatprep.subr.mxu0 0.0
    %3953 = vmatpush1.msra.mxu0 0.0
    %3954 = vmatprep.subr.mxu0 0.0
    %3955 = vmatpush1.msra.mxu0 0.0
    %3956 = vmatprep.subr.mxu0 0.0
    %3957 = vmatpush1.msra.mxu0 0.0
    %3958 = vmatprep.subr.mxu0 0.0
    %3959 = vmatpush1.msra.mxu0 0.0
    %3960 = vmatprep.subr.mxu0 0.0
    %3961 = vmatpush1.msra.mxu0 0.0
    %3962 = vmatprep.subr.mxu0 0.0
    %3963 = vmatpush1.msra.mxu0 %v3932
    %3964 = vmatprep.subr.mxu0 0.0
    %3965 = vmatpush1.msra.mxu0 %v3931
    %3966 = vmatprep.subr.mxu0 0.0
    %3967 = vmatpush1.msra.mxu0 %v3930
    %3968 = vmatprep.subr.mxu0 0.0
    %3969 = vmatpush1.msra.mxu0 %v3929
    %3970 = vmatprep.subr.mxu0 0.0
    %3971 = vmatpush1.msra.mxu0 %v3928
    %3972 = vmatprep.subr.mxu0 0.0
    %3973 = vmatpush1.msra.mxu0 %v3927
    %3974 = vmatprep.subr.mxu0 0.0
    %3975 = vmatpush1.msra.mxu0 %v3926
    %3976 = vmatprep.subr.mxu0 0.0
    %3977 = vmatpush1.msra.mxu0 %v3925
    %3978 = vmatprep.subr.mxu0 0.0
    %3979 = vmatpush2.msra.mxu0 0.0
    %3980 = vmatprep.subr.mxu0 0.0
    %3981 = vmatpush2.msra.mxu0 0.0
    %3982 = vmatprep.subr.mxu0 0.0
    %3983 = vmatpush2.msra.mxu0 0.0
    %3984 = vmatprep.subr.mxu0 0.0
    %3985 = vmatpush2.msra.mxu0 0.0
    %3986 = vmatprep.subr.mxu0 0.0
    %3987 = vmatpush2.msra.mxu0 0.0
    %3988 = vmatprep.subr.mxu0 0.0
    %3989 = vmatpush2.msra.mxu0 0.0
    %3990 = vmatprep.subr.mxu0 0.0
    %3991 = vmatpush2.msra.mxu0 0.0
    %3992 = vmatprep.subr.mxu0 0.0
    %3993 = vmatpush2.msra.mxu0 0.0
    %3994 = vmatprep.subr.mxu0 0.0
    %3995 = vmatpush2.msra.mxu0 0.0
    %3996 = vmatprep.subr.mxu0 0.0
    %3997 = vmatpush2.msra.mxu0 0.0
    %3998 = vmatprep.subr.mxu0 0.0
    %3999 = vmatpush2.msra.mxu0 0.0
    %4000 = vmatprep.subr.mxu0 0.0
    %4001 = vmatpush2.msra.mxu0 0.0
    %4002 = vmatprep.subr.mxu0 0.0
    %4003 = vmatpush2.msra.mxu0 0.0
    %4004 = vmatprep.subr.mxu0 0.0
    %4005 = vmatpush2.msra.mxu0 0.0
    %4006 = vmatprep.subr.mxu0 0.0
    %4007 = vmatpush2.msra.mxu0 0.0
    %4008 = vmatprep.subr.mxu0 0.0
    %4009 = vmatpush2.msra.mxu0 0.0
    %4010 = vmatprep.mubr.f32.mxu0 0.0
    %4011 = vmatmul.mubr.f32.gmra.mxu0 %v3941
    %v4012 = vpop.f32.mrf.mxu0
    %v4013 = vadd.f32 %v3938, %v4012
    %v4014 = vpop.f32.mrf.mxu0
    %4015 = vmatprep.mubr.f32.mxu0 0.0
    %4016 = vmatmul.mubr.f32.gmra.mxu0 %v3944
    %v4017 = vpop.f32.mrf.mxu0
    %v4018 = vadd.f32 %v3938, %v4017
    %v4019 = vpop.f32.mrf.mxu0
    %4020 = vdwg.mxu0
    %4021 = vst [vmem:[%s11] sm:$0xff] %v4013
    %4022 = vst [vmem:[%s11 + $0x8] sm:$0xff] %v4018
    // Predicated region
    $region70: #{bilstm_forward.1} parent=1 // pred_check
      _
    $region71: #{bilstm_forward.1} parent=1 // pred_check_branch
      %4024 = sbr.rel (0) target = $region73
    $region72: #{bilstm_forward.1} parent=1 // pred_region
      _
    $region73: #{bilstm_forward.1} parent=1 // pred_fallthru
      _
    // Predicated region
    $region74: #{bilstm_forward.1} parent=1 // pred_check
      _
    $region75: #{bilstm_forward.1} parent=1 // pred_check_branch
      %4026 = sbr.rel (0) target = $region77
    $region76: #{bilstm_forward.1} parent=1 // pred_region
      _
    $region77: #{bilstm_forward.1} parent=1 // pred_fallthru
      _
    %4027 = vsyncpa [#allocation5], 1
    %4028 = vsyncpa [#allocation7], 1
    %4029 = vsyncpa [#allocation10], 1
    %4030 = vsyncpa [#allocation13], 1

</llo_original>
